<compile_context>
chip_gen: v7x
topology: tpu7x:2x2x1
jax: 0.10.0
libtpu: 0.0.40
codegen_flags: <defaults>
</compile_context>

<pallas_src>
import jax
import jax.numpy as jnp
from jax import lax
from jax.experimental import pallas as pl
from jax.experimental.pallas import tpu as pltpu

KSIZE = 5
# Deterministic parameter from EdgeLoss.__init__: outer(k, k), k = [.05,.25,.4,.25,.05],
# identical across the 3 channels -> baked in as constants.
_K1D = (0.05, 0.25, 0.4, 0.25, 0.05)
EPS = 1e-3  # CharbonnierLoss eps


# -------------------- fused Pallas kernel --------------------

def _make_edge_loss_kernel(H, W):
    k = _K1D

    def conv_gauss(a, padv, padh):
        """Separable 5x5 Gaussian with replicate padding; a: (B, H, W) f32."""
        # ---- vertical replicate pad into VMEM scratch (B, H+4, W) ----
        top = a[:, 0:1, :]
        bot = a[:, H - 1:H, :]
        padv[:, 2:H + 2, :] = a
        padv[:, 0:1, :] = top
        padv[:, 1:2, :] = top
        padv[:, H + 2:H + 3, :] = bot
        padv[:, H + 3:H + 4, :] = bot
        # ---- vertical 5-tap pass (sublane-offset reads) ----
        v = k[0] * padv[:, 0:H, :]
        for i in range(1, KSIZE):
            v = v + k[i] * padv[:, i:i + H, :]
        # ---- horizontal replicate pad into VMEM scratch (B, H, W+4) ----
        left = v[:, :, 0:1]
        right = v[:, :, W - 1:W]
        padh[:, :, 2:W + 2] = v
        padh[:, :, 0:1] = left
        padh[:, :, 1:2] = left
        padh[:, :, W + 2:W + 3] = right
        padh[:, :, W + 3:W + 4] = right
        # ---- horizontal 5-tap pass (lane-offset reads) ----
        h = k[0] * padh[:, :, 0:W]
        for j in range(1, KSIZE):
            h = h + k[j] * padh[:, :, j:j + W]
        return h

    def kernel(x_ref, y_ref, out_ref, padv, padh):
        # even-(row, col) mask * 4, computed once per grid step (outside tap loops).
        rows = lax.broadcasted_iota(jnp.int32, (1, H, W), 1)
        cols = lax.broadcasted_iota(jnp.int32, (1, H, W), 2)
        mask4 = jnp.where((rows % 2 == 0) & (cols % 2 == 0),
                          jnp.float32(4.0), jnp.float32(0.0))

        def laplacian(a):
            c1 = conv_gauss(a, padv, padh)               # conv_gauss
            c2 = conv_gauss(c1 * mask4, padv, padh)      # masked down*4 -> conv_gauss
            return a - c2

        d = laplacian(x_ref[...]) - laplacian(y_ref[...])
        s = jnp.sum(jnp.sqrt(d * d + jnp.float32(EPS * EPS)))
        out_ref[...] = s[None, None, None]

    return kernel


def _pick_plane_block(nc, H, W, vmem_budget_bytes=16 * 1024 * 1024, max_block=32):
    """Largest divisor of nc whose estimated VMEM footprint fits the budget."""
    per_plane = 12 * (H + 4) * (W + 4) * 4   # rough live f32 bytes per plane
    cap = int(max(1, min(max_block, vmem_budget_bytes // per_plane)))
    best = 1
    for d in range(1, min(nc, cap) + 1):
        if nc % d == 0:
            best = d
    return best


@jax.jit
def edge_loss(x, y):
    N, C, H, W = x.shape
    NC = N * C
    xf = x.reshape(NC, H, W).astype(jnp.float32)
    yf = y.reshape(NC, H, W).astype(jnp.float32)

    B = _pick_plane_block(NC, H, W)
    num_blocks = NC // B

    in_spec = pl.BlockSpec((B, H, W), lambda i: (i, 0, 0))
    partials = pl.pallas_call(
        _make_edge_loss_kernel(H, W),
        out_shape=jax.ShapeDtypeStruct((num_blocks, 1, 1), jnp.float32),
        grid_spec=pltpu.PrefetchScalarGridSpec(
            num_scalar_prefetch=0,
            grid=(num_blocks,),
            in_specs=[in_spec, in_spec],
            out_specs=pl.BlockSpec((1, 1, 1), lambda i: (i, 0, 0)),
            scratch_shapes=[pltpu.VMEM((B, H + 4, W), jnp.float32),
                            pltpu.VMEM((B, H, W + 4), jnp.float32)],
        ),
        compiler_params=pltpu.CompilerParams(
            dimension_semantics=("parallel",),
            vmem_limit_bytes=32 * 1024 * 1024,  # above v5e's 16 MiB default
        ),
    )(xf, yf)
    return jnp.sum(partials) / jnp.float32(NC * H * W)


# -------------------- pure-JAX reference (for verification) --------------------

def _ref_edge_loss(x, y):
    k1 = jnp.array(_K1D, jnp.float32)
    k2 = jnp.outer(k1, k1)
    C = x.shape[1]
    w = jnp.broadcast_to(k2, (C, 1, KSIZE, KSIZE))

    def conv_gauss(img):
        img = jnp.pad(img, ((0, 0), (0, 0), (2, 2), (2, 2)), mode="edge")
        return lax.conv_general_dilated(
            img, w, (1, 1), "VALID",
            dimension_numbers=("NCHW", "OIHW", "NCHW"),
            feature_group_count=C)

    def lap(cur):
        f = conv_gauss(cur)
        H, W = f.shape[2], f.shape[3]
        mask = ((jnp.arange(H) % 2 == 0)[:, None]
                & (jnp.arange(W) % 2 == 0)[None, :]).astype(f.dtype)
        nf = f * mask * 4.0
        return cur - conv_gauss(nf)

    d = lap(x) - lap(y)
    return jnp.mean(jnp.sqrt(d * d + EPS * EPS))


if __name__ == "__main__":
    key = jax.random.PRNGKey(0)
    kx, ky = jax.random.split(key)
    # EdgeLoss bakes a 3-channel depthwise kernel -> C must be 3.
    x = jax.random.uniform(kx, (2, 3, 16, 16), dtype=jnp.float32)
    y = jax.random.uniform(ky, (2, 3, 16, 16), dtype=jnp.float32)

    out = jax.block_until_ready(edge_loss(x, y))
    ref = jax.block_until_ready(_ref_edge_loss(x, y))
    assert jnp.allclose(out, ref, rtol=1e-4, atol=1e-5), (out, ref)
    print("KERNEL_OK")
</pallas_src>

<mosaic_0001>
module attributes {stable_mosaic.version = 11 : i64} {
  func.func @kernel(%arg0: i32, %arg1: memref<6x16x16xf32, #tpu.memory_space<vmem>>, %arg2: memref<6x16x16xf32, #tpu.memory_space<vmem>>, %arg3: memref<1x1x1xf32, #tpu.memory_space<vmem>>, %arg4: memref<6x20x16xf32, #tpu.memory_space<vmem>>, %arg5: memref<6x16x20xf32, #tpu.memory_space<vmem>>) attributes {dimension_semantics = [#tpu.dimension_semantics<parallel>], iteration_bounds = array<i64: 1>, scalar_prefetch = 0 : i64, scratch_operands = 2 : i64, tpu.core_type = #tpu.core_type<tc>, window_params = [{transform_indices = @transform_0, window_bounds = array<i64: 6, 16, 16>}, {transform_indices = @transform_1, window_bounds = array<i64: 6, 16, 16>}, {transform_indices = @transform_2, window_bounds = array<i64: 1, 1, 1>}]} {
    %0 = tpu.iota {dimensions = array<i32: 1>} : vector<1x16x16xi32>
    %1 = tpu.iota {dimensions = array<i32: 2>} : vector<1x16x16xi32>
    %c2_i32 = arith.constant 2 : i32
    %c0_i32 = arith.constant 0 : i32
    %2 = arith.cmpi eq, %c2_i32, %c0_i32 : i32
    %c1_i32 = arith.constant 1 : i32
    %3 = arith.select %2, %c1_i32, %c2_i32 : i32
    %4 = vector.broadcast %3 : i32 to vector<1x16x16xi32>
    %5 = arith.remsi %0, %4 : vector<1x16x16xi32>
    %c0_i32_0 = arith.constant 0 : i32
    %6 = vector.broadcast %c0_i32_0 : i32 to vector<1x16x16xi32>
    %7 = arith.cmpi ne, %5, %6 : vector<1x16x16xi32>
    %c0_i32_1 = arith.constant 0 : i32
    %8 = vector.broadcast %c0_i32_1 : i32 to vector<1x16x16xi32>
    %9 = arith.cmpi slt, %5, %8 : vector<1x16x16xi32>
    %c0_i32_2 = arith.constant 0 : i32
    %10 = arith.cmpi slt, %3, %c0_i32_2 : i32
    %11 = vector.broadcast %10 : i1 to vector<1x16x16xi1>
    %12 = vector.broadcast %11 : vector<1x16x16xi1> to vector<1x16x16xi1>
    %13 = arith.xori %9, %12 : vector<1x16x16xi1>
    %14 = arith.andi %13, %7 : vector<1x16x16xi1>
    %15 = vector.broadcast %3 : i32 to vector<1x16x16xi32>
    %16 = arith.addi %5, %15 : vector<1x16x16xi32>
    %17 = arith.select %14, %16, %5 : vector<1x16x16xi1>, vector<1x16x16xi32>
    %c0_i32_3 = arith.constant 0 : i32
    %18 = vector.broadcast %c0_i32_3 : i32 to vector<1x16x16xi32>
    %19 = arith.cmpi eq, %17, %18 : vector<1x16x16xi32>
    %c2_i32_4 = arith.constant 2 : i32
    %c0_i32_5 = arith.constant 0 : i32
    %20 = arith.cmpi eq, %c2_i32_4, %c0_i32_5 : i32
    %c1_i32_6 = arith.constant 1 : i32
    %21 = arith.select %20, %c1_i32_6, %c2_i32_4 : i32
    %22 = vector.broadcast %21 : i32 to vector<1x16x16xi32>
    %23 = arith.remsi %1, %22 : vector<1x16x16xi32>
    %c0_i32_7 = arith.constant 0 : i32
    %24 = vector.broadcast %c0_i32_7 : i32 to vector<1x16x16xi32>
    %25 = arith.cmpi ne, %23, %24 : vector<1x16x16xi32>
    %c0_i32_8 = arith.constant 0 : i32
    %26 = vector.broadcast %c0_i32_8 : i32 to vector<1x16x16xi32>
    %27 = arith.cmpi slt, %23, %26 : vector<1x16x16xi32>
    %c0_i32_9 = arith.constant 0 : i32
    %28 = arith.cmpi slt, %21, %c0_i32_9 : i32
    %29 = vector.broadcast %28 : i1 to vector<1x16x16xi1>
    %30 = vector.broadcast %29 : vector<1x16x16xi1> to vector<1x16x16xi1>
    %31 = arith.xori %27, %30 : vector<1x16x16xi1>
    %32 = arith.andi %31, %25 : vector<1x16x16xi1>
    %33 = vector.broadcast %21 : i32 to vector<1x16x16xi32>
    %34 = arith.addi %23, %33 : vector<1x16x16xi32>
    %35 = arith.select %32, %34, %23 : vector<1x16x16xi1>, vector<1x16x16xi32>
    %c0_i32_10 = arith.constant 0 : i32
    %36 = vector.broadcast %c0_i32_10 : i32 to vector<1x16x16xi32>
    %37 = arith.cmpi eq, %35, %36 : vector<1x16x16xi32>
    %38 = arith.andi %19, %37 : vector<1x16x16xi1>
    %cst = arith.constant 4.000000e+00 : f32
    %cst_11 = arith.constant 0.000000e+00 : f32
    %39 = vector.broadcast %cst : f32 to vector<1x16x16xf32>
    %40 = vector.broadcast %cst_11 : f32 to vector<1x16x16xf32>
    %41 = arith.select %38, %39, %40 : vector<1x16x16xi1>, vector<1x16x16xf32>
    %c0 = arith.constant 0 : index
    %c0_12 = arith.constant 0 : index
    %c0_13 = arith.constant 0 : index
    %42 = vector.load %arg1[%c0, %c0_12, %c0_13] : memref<6x16x16xf32, #tpu.memory_space<vmem>>, vector<6x16x16xf32>
    %43 = vector.extract_strided_slice %42 {offsets = [0, 0, 0], sizes = [6, 1, 16], strides = [1, 1, 1]} : vector<6x16x16xf32> to vector<6x1x16xf32>
    %44 = vector.extract_strided_slice %42 {offsets = [0, 15, 0], sizes = [6, 1, 16], strides = [1, 1, 1]} : vector<6x16x16xf32> to vector<6x1x16xf32>
    %c0_14 = arith.constant 0 : index
    %c2 = arith.constant 2 : index
    %c0_15 = arith.constant 0 : index
    %45 = vector.load %arg4[%c0_14, %c2, %c0_15] : memref<6x20x16xf32, #tpu.memory_space<vmem>>, vector<6x16x16xf32>
    tpu.vector_store %arg4[%c0_14, %c2, %c0_15], %42 {strides = array<i32>} : memref<6x20x16xf32, #tpu.memory_space<vmem>>, vector<6x16x16xf32>,
    %c0_16 = arith.constant 0 : index
    %c0_17 = arith.constant 0 : index
    %c0_18 = arith.constant 0 : index
    %46 = vector.load %arg4[%c0_16, %c0_17, %c0_18] : memref<6x20x16xf32, #tpu.memory_space<vmem>>, vector<6x1x16xf32>
    tpu.vector_store %arg4[%c0_16, %c0_17, %c0_18], %43 {strides = array<i32>} : memref<6x20x16xf32, #tpu.memory_space<vmem>>, vector<6x1x16xf32>,
    %c0_19 = arith.constant 0 : index
    %c1 = arith.constant 1 : index
    %c0_20 = arith.constant 0 : index
    %47 = vector.load %arg4[%c0_19, %c1, %c0_20] : memref<6x20x16xf32, #tpu.memory_space<vmem>>, vector<6x1x16xf32>
    tpu.vector_store %arg4[%c0_19, %c1, %c0_20], %43 {strides = array<i32>} : memref<6x20x16xf32, #tpu.memory_space<vmem>>, vector<6x1x16xf32>,
    %c0_21 = arith.constant 0 : index
    %c18 = arith.constant 18 : index
    %c0_22 = arith.constant 0 : index
    %48 = vector.load %arg4[%c0_21, %c18, %c0_22] : memref<6x20x16xf32, #tpu.memory_space<vmem>>, vector<6x1x16xf32>
    tpu.vector_store %arg4[%c0_21, %c18, %c0_22], %44 {strides = array<i32>} : memref<6x20x16xf32, #tpu.memory_space<vmem>>, vector<6x1x16xf32>,
    %c0_23 = arith.constant 0 : index
    %c19 = arith.constant 19 : index
    %c0_24 = arith.constant 0 : index
    %49 = vector.load %arg4[%c0_23, %c19, %c0_24] : memref<6x20x16xf32, #tpu.memory_space<vmem>>, vector<6x1x16xf32>
    tpu.vector_store %arg4[%c0_23, %c19, %c0_24], %44 {strides = array<i32>} : memref<6x20x16xf32, #tpu.memory_space<vmem>>, vector<6x1x16xf32>,
    %c0_25 = arith.constant 0 : index
    %c0_26 = arith.constant 0 : index
    %c0_27 = arith.constant 0 : index
    %50 = vector.load %arg4[%c0_25, %c0_26, %c0_27] : memref<6x20x16xf32, #tpu.memory_space<vmem>>, vector<6x16x16xf32>
    %cst_28 = arith.constant 5.000000e-02 : f32
    %51 = vector.broadcast %cst_28 : f32 to vector<6x16x16xf32>
    %52 = arith.mulf %51, %50 : vector<6x16x16xf32>
    %c0_29 = arith.constant 0 : index
    %c1_30 = arith.constant 1 : index
    %c0_31 = arith.constant 0 : index
    %53 = vector.load %arg4[%c0_29, %c1_30, %c0_31] : memref<6x20x16xf32, #tpu.memory_space<vmem>>, vector<6x16x16xf32>
    %cst_32 = arith.constant 2.500000e-01 : f32
    %54 = vector.broadcast %cst_32 : f32 to vector<6x16x16xf32>
    %55 = arith.mulf %54, %53 : vector<6x16x16xf32>
    %56 = arith.addf %52, %55 : vector<6x16x16xf32>
    %c0_33 = arith.constant 0 : index
    %c2_34 = arith.constant 2 : index
    %c0_35 = arith.constant 0 : index
    %57 = vector.load %arg4[%c0_33, %c2_34, %c0_35] : memref<6x20x16xf32, #tpu.memory_space<vmem>>, vector<6x16x16xf32>
    %cst_36 = arith.constant 4.000000e-01 : f32
    %58 = vector.broadcast %cst_36 : f32 to vector<6x16x16xf32>
    %59 = arith.mulf %58, %57 : vector<6x16x16xf32>
    %60 = arith.addf %56, %59 : vector<6x16x16xf32>
    %c0_37 = arith.constant 0 : index
    %c3 = arith.constant 3 : index
    %c0_38 = arith.constant 0 : index
    %61 = vector.load %arg4[%c0_37, %c3, %c0_38] : memref<6x20x16xf32, #tpu.memory_space<vmem>>, vector<6x16x16xf32>
    %cst_39 = arith.constant 2.500000e-01 : f32
    %62 = vector.broadcast %cst_39 : f32 to vector<6x16x16xf32>
    %63 = arith.mulf %62, %61 : vector<6x16x16xf32>
    %64 = arith.addf %60, %63 : vector<6x16x16xf32>
    %c0_40 = arith.constant 0 : index
    %c4 = arith.constant 4 : index
    %c0_41 = arith.constant 0 : index
    %65 = vector.load %arg4[%c0_40, %c4, %c0_41] : memref<6x20x16xf32, #tpu.memory_space<vmem>>, vector<6x16x16xf32>
    %cst_42 = arith.constant 5.000000e-02 : f32
    %66 = vector.broadcast %cst_42 : f32 to vector<6x16x16xf32>
    %67 = arith.mulf %66, %65 : vector<6x16x16xf32>
    %68 = arith.addf %64, %67 : vector<6x16x16xf32>
    %69 = vector.extract_strided_slice %68 {offsets = [0, 0, 0], sizes = [6, 16, 1], strides = [1, 1, 1]} : vector<6x16x16xf32> to vector<6x16x1xf32>
    %70 = vector.extract_strided_slice %68 {offsets = [0, 0, 15], sizes = [6, 16, 1], strides = [1, 1, 1]} : vector<6x16x16xf32> to vector<6x16x1xf32>
    %c0_43 = arith.constant 0 : index
    %c0_44 = arith.constant 0 : index
    %c2_45 = arith.constant 2 : index
    %71 = vector.load %arg5[%c0_43, %c0_44, %c2_45] : memref<6x16x20xf32, #tpu.memory_space<vmem>>, vector<6x16x16xf32>
    tpu.vector_store %arg5[%c0_43, %c0_44, %c2_45], %68 {strides = array<i32>} : memref<6x16x20xf32, #tpu.memory_space<vmem>>, vector<6x16x16xf32>,
    %c0_46 = arith.constant 0 : index
    %c0_47 = arith.constant 0 : index
    %c0_48 = arith.constant 0 : index
    %72 = vector.load %arg5[%c0_46, %c0_47, %c0_48] : memref<6x16x20xf32, #tpu.memory_space<vmem>>, vector<6x16x1xf32>
    tpu.vector_store %arg5[%c0_46, %c0_47, %c0_48], %69 {strides = array<i32>} : memref<6x16x20xf32, #tpu.memory_space<vmem>>, vector<6x16x1xf32>,
    %c0_49 = arith.constant 0 : index
    %c0_50 = arith.constant 0 : index
    %c1_51 = arith.constant 1 : index
    %73 = vector.load %arg5[%c0_49, %c0_50, %c1_51] : memref<6x16x20xf32, #tpu.memory_space<vmem>>, vector<6x16x1xf32>
    tpu.vector_store %arg5[%c0_49, %c0_50, %c1_51], %69 {strides = array<i32>} : memref<6x16x20xf32, #tpu.memory_space<vmem>>, vector<6x16x1xf32>,
    %c0_52 = arith.constant 0 : index
    %c0_53 = arith.constant 0 : index
    %c18_54 = arith.constant 18 : index
    %74 = vector.load %arg5[%c0_52, %c0_53, %c18_54] : memref<6x16x20xf32, #tpu.memory_space<vmem>>, vector<6x16x1xf32>
    tpu.vector_store %arg5[%c0_52, %c0_53, %c18_54], %70 {strides = array<i32>} : memref<6x16x20xf32, #tpu.memory_space<vmem>>, vector<6x16x1xf32>,
    %c0_55 = arith.constant 0 : index
    %c0_56 = arith.constant 0 : index
    %c19_57 = arith.constant 19 : index
    %75 = vector.load %arg5[%c0_55, %c0_56, %c19_57] : memref<6x16x20xf32, #tpu.memory_space<vmem>>, vector<6x16x1xf32>
    tpu.vector_store %arg5[%c0_55, %c0_56, %c19_57], %70 {strides = array<i32>} : memref<6x16x20xf32, #tpu.memory_space<vmem>>, vector<6x16x1xf32>,
    %c0_58 = arith.constant 0 : index
    %c0_59 = arith.constant 0 : index
    %c0_60 = arith.constant 0 : index
    %76 = vector.load %arg5[%c0_58, %c0_59, %c0_60] : memref<6x16x20xf32, #tpu.memory_space<vmem>>, vector<6x16x16xf32>
    %cst_61 = arith.constant 5.000000e-02 : f32
    %77 = vector.broadcast %cst_61 : f32 to vector<6x16x16xf32>
    %78 = arith.mulf %77, %76 : vector<6x16x16xf32>
    %c0_62 = arith.constant 0 : index
    %c0_63 = arith.constant 0 : index
    %c1_64 = arith.constant 1 : index
    %79 = vector.load %arg5[%c0_62, %c0_63, %c1_64] : memref<6x16x20xf32, #tpu.memory_space<vmem>>, vector<6x16x16xf32>
    %cst_65 = arith.constant 2.500000e-01 : f32
    %80 = vector.broadcast %cst_65 : f32 to vector<6x16x16xf32>
    %81 = arith.mulf %80, %79 : vector<6x16x16xf32>
    %82 = arith.addf %78, %81 : vector<6x16x16xf32>
    %c0_66 = arith.constant 0 : index
    %c0_67 = arith.constant 0 : index
    %c2_68 = arith.constant 2 : index
    %83 = vector.load %arg5[%c0_66, %c0_67, %c2_68] : memref<6x16x20xf32, #tpu.memory_space<vmem>>, vector<6x16x16xf32>
    %cst_69 = arith.constant 4.000000e-01 : f32
    %84 = vector.broadcast %cst_69 : f32 to vector<6x16x16xf32>
    %85 = arith.mulf %84, %83 : vector<6x16x16xf32>
    %86 = arith.addf %82, %85 : vector<6x16x16xf32>
    %c0_70 = arith.constant 0 : index
    %c0_71 = arith.constant 0 : index
    %c3_72 = arith.constant 3 : index
    %87 = vector.load %arg5[%c0_70, %c0_71, %c3_72] : memref<6x16x20xf32, #tpu.memory_space<vmem>>, vector<6x16x16xf32>
    %cst_73 = arith.constant 2.500000e-01 : f32
    %88 = vector.broadcast %cst_73 : f32 to vector<6x16x16xf32>
    %89 = arith.mulf %88, %87 : vector<6x16x16xf32>
    %90 = arith.addf %86, %89 : vector<6x16x16xf32>
    %c0_74 = arith.constant 0 : index
    %c0_75 = arith.constant 0 : index
    %c4_76 = arith.constant 4 : index
    %91 = vector.load %arg5[%c0_74, %c0_75, %c4_76] : memref<6x16x20xf32, #tpu.memory_space<vmem>>, vector<6x16x16xf32>
    %cst_77 = arith.constant 5.000000e-02 : f32
    %92 = vector.broadcast %cst_77 : f32 to vector<6x16x16xf32>
    %93 = arith.mulf %92, %91 : vector<6x16x16xf32>
    %94 = arith.addf %90, %93 : vector<6x16x16xf32>
    %95 = vector.broadcast %41 : vector<1x16x16xf32> to vector<6x16x16xf32>
    %96 = arith.mulf %94, %95 : vector<6x16x16xf32>
    %97 = vector.extract_strided_slice %96 {offsets = [0, 0, 0], sizes = [6, 1, 16], strides = [1, 1, 1]} : vector<6x16x16xf32> to vector<6x1x16xf32>
    %98 = vector.extract_strided_slice %96 {offsets = [0, 15, 0], sizes = [6, 1, 16], strides = [1, 1, 1]} : vector<6x16x16xf32> to vector<6x1x16xf32>
    %c0_78 = arith.constant 0 : index
    %c2_79 = arith.constant 2 : index
    %c0_80 = arith.constant 0 : index
    %99 = vector.load %arg4[%c0_78, %c2_79, %c0_80] : memref<6x20x16xf32, #tpu.memory_space<vmem>>, vector<6x16x16xf32>
    tpu.vector_store %arg4[%c0_78, %c2_79, %c0_80], %96 {strides = array<i32>} : memref<6x20x16xf32, #tpu.memory_space<vmem>>, vector<6x16x16xf32>,
    %c0_81 = arith.constant 0 : index
    %c0_82 = arith.constant 0 : index
    %c0_83 = arith.constant 0 : index
    %100 = vector.load %arg4[%c0_81, %c0_82, %c0_83] : memref<6x20x16xf32, #tpu.memory_space<vmem>>, vector<6x1x16xf32>
    tpu.vector_store %arg4[%c0_81, %c0_82, %c0_83], %97 {strides = array<i32>} : memref<6x20x16xf32, #tpu.memory_space<vmem>>, vector<6x1x16xf32>,
    %c0_84 = arith.constant 0 : index
    %c1_85 = arith.constant 1 : index
    %c0_86 = arith.constant 0 : index
    %101 = vector.load %arg4[%c0_84, %c1_85, %c0_86] : memref<6x20x16xf32, #tpu.memory_space<vmem>>, vector<6x1x16xf32>
    tpu.vector_store %arg4[%c0_84, %c1_85, %c0_86], %97 {strides = array<i32>} : memref<6x20x16xf32, #tpu.memory_space<vmem>>, vector<6x1x16xf32>,
    %c0_87 = arith.constant 0 : index
    %c18_88 = arith.constant 18 : index
    %c0_89 = arith.constant 0 : index
    %102 = vector.load %arg4[%c0_87, %c18_88, %c0_89] : memref<6x20x16xf32, #tpu.memory_space<vmem>>, vector<6x1x16xf32>
    tpu.vector_store %arg4[%c0_87, %c18_88, %c0_89], %98 {strides = array<i32>} : memref<6x20x16xf32, #tpu.memory_space<vmem>>, vector<6x1x16xf32>,
    %c0_90 = arith.constant 0 : index
    %c19_91 = arith.constant 19 : index
    %c0_92 = arith.constant 0 : index
    %103 = vector.load %arg4[%c0_90, %c19_91, %c0_92] : memref<6x20x16xf32, #tpu.memory_space<vmem>>, vector<6x1x16xf32>
    tpu.vector_store %arg4[%c0_90, %c19_91, %c0_92], %98 {strides = array<i32>} : memref<6x20x16xf32, #tpu.memory_space<vmem>>, vector<6x1x16xf32>,
    %c0_93 = arith.constant 0 : index
    %c0_94 = arith.constant 0 : index
    %c0_95 = arith.constant 0 : index
    %104 = vector.load %arg4[%c0_93, %c0_94, %c0_95] : memref<6x20x16xf32, #tpu.memory_space<vmem>>, vector<6x16x16xf32>
    %cst_96 = arith.constant 5.000000e-02 : f32
    %105 = vector.broadcast %cst_96 : f32 to vector<6x16x16xf32>
    %106 = arith.mulf %105, %104 : vector<6x16x16xf32>
    %c0_97 = arith.constant 0 : index
    %c1_98 = arith.constant 1 : index
    %c0_99 = arith.constant 0 : index
    %107 = vector.load %arg4[%c0_97, %c1_98, %c0_99] : memref<6x20x16xf32, #tpu.memory_space<vmem>>, vector<6x16x16xf32>
    %cst_100 = arith.constant 2.500000e-01 : f32
    %108 = vector.broadcast %cst_100 : f32 to vector<6x16x16xf32>
    %109 = arith.mulf %108, %107 : vector<6x16x16xf32>
    %110 = arith.addf %106, %109 : vector<6x16x16xf32>
    %c0_101 = arith.constant 0 : index
    %c2_102 = arith.constant 2 : index
    %c0_103 = arith.constant 0 : index
    %111 = vector.load %arg4[%c0_101, %c2_102, %c0_103] : memref<6x20x16xf32, #tpu.memory_space<vmem>>, vector<6x16x16xf32>
    %cst_104 = arith.constant 4.000000e-01 : f32
    %112 = vector.broadcast %cst_104 : f32 to vector<6x16x16xf32>
    %113 = arith.mulf %112, %111 : vector<6x16x16xf32>
    %114 = arith.addf %110, %113 : vector<6x16x16xf32>
    %c0_105 = arith.constant 0 : index
    %c3_106 = arith.constant 3 : index
    %c0_107 = arith.constant 0 : index
    %115 = vector.load %arg4[%c0_105, %c3_106, %c0_107] : memref<6x20x16xf32, #tpu.memory_space<vmem>>, vector<6x16x16xf32>
    %cst_108 = arith.constant 2.500000e-01 : f32
    %116 = vector.broadcast %cst_108 : f32 to vector<6x16x16xf32>
    %117 = arith.mulf %116, %115 : vector<6x16x16xf32>
    %118 = arith.addf %114, %117 : vector<6x16x16xf32>
    %c0_109 = arith.constant 0 : index
    %c4_110 = arith.constant 4 : index
    %c0_111 = arith.constant 0 : index
    %119 = vector.load %arg4[%c0_109, %c4_110, %c0_111] : memref<6x20x16xf32, #tpu.memory_space<vmem>>, vector<6x16x16xf32>
    %cst_112 = arith.constant 5.000000e-02 : f32
    %120 = vector.broadcast %cst_112 : f32 to vector<6x16x16xf32>
    %121 = arith.mulf %120, %119 : vector<6x16x16xf32>
    %122 = arith.addf %118, %121 : vector<6x16x16xf32>
    %123 = vector.extract_strided_slice %122 {offsets = [0, 0, 0], sizes = [6, 16, 1], strides = [1, 1, 1]} : vector<6x16x16xf32> to vector<6x16x1xf32>
    %124 = vector.extract_strided_slice %122 {offsets = [0, 0, 15], sizes = [6, 16, 1], strides = [1, 1, 1]} : vector<6x16x16xf32> to vector<6x16x1xf32>
    %c0_113 = arith.constant 0 : index
    %c0_114 = arith.constant 0 : index
    %c2_115 = arith.constant 2 : index
    %125 = vector.load %arg5[%c0_113, %c0_114, %c2_115] : memref<6x16x20xf32, #tpu.memory_space<vmem>>, vector<6x16x16xf32>
    tpu.vector_store %arg5[%c0_113, %c0_114, %c2_115], %122 {strides = array<i32>} : memref<6x16x20xf32, #tpu.memory_space<vmem>>, vector<6x16x16xf32>,
    %c0_116 = arith.constant 0 : index
    %c0_117 = arith.constant 0 : index
    %c0_118 = arith.constant 0 : index
    %126 = vector.load %arg5[%c0_116, %c0_117, %c0_118] : memref<6x16x20xf32, #tpu.memory_space<vmem>>, vector<6x16x1xf32>
    tpu.vector_store %arg5[%c0_116, %c0_117, %c0_118], %123 {strides = array<i32>} : memref<6x16x20xf32, #tpu.memory_space<vmem>>, vector<6x16x1xf32>,
    %c0_119 = arith.constant 0 : index
    %c0_120 = arith.constant 0 : index
    %c1_121 = arith.constant 1 : index
    %127 = vector.load %arg5[%c0_119, %c0_120, %c1_121] : memref<6x16x20xf32, #tpu.memory_space<vmem>>, vector<6x16x1xf32>
    tpu.vector_store %arg5[%c0_119, %c0_120, %c1_121], %123 {strides = array<i32>} : memref<6x16x20xf32, #tpu.memory_space<vmem>>, vector<6x16x1xf32>,
    %c0_122 = arith.constant 0 : index
    %c0_123 = arith.constant 0 : index
    %c18_124 = arith.constant 18 : index
    %128 = vector.load %arg5[%c0_122, %c0_123, %c18_124] : memref<6x16x20xf32, #tpu.memory_space<vmem>>, vector<6x16x1xf32>
    tpu.vector_store %arg5[%c0_122, %c0_123, %c18_124], %124 {strides = array<i32>} : memref<6x16x20xf32, #tpu.memory_space<vmem>>, vector<6x16x1xf32>,
    %c0_125 = arith.constant 0 : index
    %c0_126 = arith.constant 0 : index
    %c19_127 = arith.constant 19 : index
    %129 = vector.load %arg5[%c0_125, %c0_126, %c19_127] : memref<6x16x20xf32, #tpu.memory_space<vmem>>, vector<6x16x1xf32>
    tpu.vector_store %arg5[%c0_125, %c0_126, %c19_127], %124 {strides = array<i32>} : memref<6x16x20xf32, #tpu.memory_space<vmem>>, vector<6x16x1xf32>,
    %c0_128 = arith.constant 0 : index
    %c0_129 = arith.constant 0 : index
    %c0_130 = arith.constant 0 : index
    %130 = vector.load %arg5[%c0_128, %c0_129, %c0_130] : memref<6x16x20xf32, #tpu.memory_space<vmem>>, vector<6x16x16xf32>
    %cst_131 = arith.constant 5.000000e-02 : f32
    %131 = vector.broadcast %cst_131 : f32 to vector<6x16x16xf32>
    %132 = arith.mulf %131, %130 : vector<6x16x16xf32>
    %c0_132 = arith.constant 0 : index
    %c0_133 = arith.constant 0 : index
    %c1_134 = arith.constant 1 : index
    %133 = vector.load %arg5[%c0_132, %c0_133, %c1_134] : memref<6x16x20xf32, #tpu.memory_space<vmem>>, vector<6x16x16xf32>
    %cst_135 = arith.constant 2.500000e-01 : f32
    %134 = vector.broadcast %cst_135 : f32 to vector<6x16x16xf32>
    %135 = arith.mulf %134, %133 : vector<6x16x16xf32>
    %136 = arith.addf %132, %135 : vector<6x16x16xf32>
    %c0_136 = arith.constant 0 : index
    %c0_137 = arith.constant 0 : index
    %c2_138 = arith.constant 2 : index
    %137 = vector.load %arg5[%c0_136, %c0_137, %c2_138] : memref<6x16x20xf32, #tpu.memory_space<vmem>>, vector<6x16x16xf32>
    %cst_139 = arith.constant 4.000000e-01 : f32
    %138 = vector.broadcast %cst_139 : f32 to vector<6x16x16xf32>
    %139 = arith.mulf %138, %137 : vector<6x16x16xf32>
    %140 = arith.addf %136, %139 : vector<6x16x16xf32>
    %c0_140 = arith.constant 0 : index
    %c0_141 = arith.constant 0 : index
    %c3_142 = arith.constant 3 : index
    %141 = vector.load %arg5[%c0_140, %c0_141, %c3_142] : memref<6x16x20xf32, #tpu.memory_space<vmem>>, vector<6x16x16xf32>
    %cst_143 = arith.constant 2.500000e-01 : f32
    %142 = vector.broadcast %cst_143 : f32 to vector<6x16x16xf32>
    %143 = arith.mulf %142, %141 : vector<6x16x16xf32>
    %144 = arith.addf %140, %143 : vector<6x16x16xf32>
    %c0_144 = arith.constant 0 : index
    %c0_145 = arith.constant 0 : index
    %c4_146 = arith.constant 4 : index
    %145 = vector.load %arg5[%c0_144, %c0_145, %c4_146] : memref<6x16x20xf32, #tpu.memory_space<vmem>>, vector<6x16x16xf32>
    %cst_147 = arith.constant 5.000000e-02 : f32
    %146 = vector.broadcast %cst_147 : f32 to vector<6x16x16xf32>
    %147 = arith.mulf %146, %145 : vector<6x16x16xf32>
    %148 = arith.addf %144, %147 : vector<6x16x16xf32>
    %149 = arith.subf %42, %148 : vector<6x16x16xf32>
    %c0_148 = arith.constant 0 : index
    %c0_149 = arith.constant 0 : index
    %c0_150 = arith.constant 0 : index
    %150 = vector.load %arg2[%c0_148, %c0_149, %c0_150] : memref<6x16x16xf32, #tpu.memory_space<vmem>>, vector<6x16x16xf32>
    %151 = vector.extract_strided_slice %150 {offsets = [0, 0, 0], sizes = [6, 1, 16], strides = [1, 1, 1]} : vector<6x16x16xf32> to vector<6x1x16xf32>
    %152 = vector.extract_strided_slice %150 {offsets = [0, 15, 0], sizes = [6, 1, 16], strides = [1, 1, 1]} : vector<6x16x16xf32> to vector<6x1x16xf32>
    %c0_151 = arith.constant 0 : index
    %c2_152 = arith.constant 2 : index
    %c0_153 = arith.constant 0 : index
    %153 = vector.load %arg4[%c0_151, %c2_152, %c0_153] : memref<6x20x16xf32, #tpu.memory_space<vmem>>, vector<6x16x16xf32>
    tpu.vector_store %arg4[%c0_151, %c2_152, %c0_153], %150 {strides = array<i32>} : memref<6x20x16xf32, #tpu.memory_space<vmem>>, vector<6x16x16xf32>,
    %c0_154 = arith.constant 0 : index
    %c0_155 = arith.constant 0 : index
    %c0_156 = arith.constant 0 : index
    %154 = vector.load %arg4[%c0_154, %c0_155, %c0_156] : memref<6x20x16xf32, #tpu.memory_space<vmem>>, vector<6x1x16xf32>
    tpu.vector_store %arg4[%c0_154, %c0_155, %c0_156], %151 {strides = array<i32>} : memref<6x20x16xf32, #tpu.memory_space<vmem>>, vector<6x1x16xf32>,
    %c0_157 = arith.constant 0 : index
    %c1_158 = arith.constant 1 : index
    %c0_159 = arith.constant 0 : index
    %155 = vector.load %arg4[%c0_157, %c1_158, %c0_159] : memref<6x20x16xf32, #tpu.memory_space<vmem>>, vector<6x1x16xf32>
    tpu.vector_store %arg4[%c0_157, %c1_158, %c0_159], %151 {strides = array<i32>} : memref<6x20x16xf32, #tpu.memory_space<vmem>>, vector<6x1x16xf32>,
    %c0_160 = arith.constant 0 : index
    %c18_161 = arith.constant 18 : index
    %c0_162 = arith.constant 0 : index
    %156 = vector.load %arg4[%c0_160, %c18_161, %c0_162] : memref<6x20x16xf32, #tpu.memory_space<vmem>>, vector<6x1x16xf32>
    tpu.vector_store %arg4[%c0_160, %c18_161, %c0_162], %152 {strides = array<i32>} : memref<6x20x16xf32, #tpu.memory_space<vmem>>, vector<6x1x16xf32>,
    %c0_163 = arith.constant 0 : index
    %c19_164 = arith.constant 19 : index
    %c0_165 = arith.constant 0 : index
    %157 = vector.load %arg4[%c0_163, %c19_164, %c0_165] : memref<6x20x16xf32, #tpu.memory_space<vmem>>, vector<6x1x16xf32>
    tpu.vector_store %arg4[%c0_163, %c19_164, %c0_165], %152 {strides = array<i32>} : memref<6x20x16xf32, #tpu.memory_space<vmem>>, vector<6x1x16xf32>,
    %c0_166 = arith.constant 0 : index
    %c0_167 = arith.constant 0 : index
    %c0_168 = arith.constant 0 : index
    %158 = vector.load %arg4[%c0_166, %c0_167, %c0_168] : memref<6x20x16xf32, #tpu.memory_space<vmem>>, vector<6x16x16xf32>
    %cst_169 = arith.constant 5.000000e-02 : f32
    %159 = vector.broadcast %cst_169 : f32 to vector<6x16x16xf32>
    %160 = arith.mulf %159, %158 : vector<6x16x16xf32>
    %c0_170 = arith.constant 0 : index
    %c1_171 = arith.constant 1 : index
    %c0_172 = arith.constant 0 : index
    %161 = vector.load %arg4[%c0_170, %c1_171, %c0_172] : memref<6x20x16xf32, #tpu.memory_space<vmem>>, vector<6x16x16xf32>
    %cst_173 = arith.constant 2.500000e-01 : f32
    %162 = vector.broadcast %cst_173 : f32 to vector<6x16x16xf32>
    %163 = arith.mulf %162, %161 : vector<6x16x16xf32>
    %164 = arith.addf %160, %163 : vector<6x16x16xf32>
    %c0_174 = arith.constant 0 : index
    %c2_175 = arith.constant 2 : index
    %c0_176 = arith.constant 0 : index
    %165 = vector.load %arg4[%c0_174, %c2_175, %c0_176] : memref<6x20x16xf32, #tpu.memory_space<vmem>>, vector<6x16x16xf32>
    %cst_177 = arith.constant 4.000000e-01 : f32
    %166 = vector.broadcast %cst_177 : f32 to vector<6x16x16xf32>
    %167 = arith.mulf %166, %165 : vector<6x16x16xf32>
    %168 = arith.addf %164, %167 : vector<6x16x16xf32>
    %c0_178 = arith.constant 0 : index
    %c3_179 = arith.constant 3 : index
    %c0_180 = arith.constant 0 : index
    %169 = vector.load %arg4[%c0_178, %c3_179, %c0_180] : memref<6x20x16xf32, #tpu.memory_space<vmem>>, vector<6x16x16xf32>
    %cst_181 = arith.constant 2.500000e-01 : f32
    %170 = vector.broadcast %cst_181 : f32 to vector<6x16x16xf32>
    %171 = arith.mulf %170, %169 : vector<6x16x16xf32>
    %172 = arith.addf %168, %171 : vector<6x16x16xf32>
    %c0_182 = arith.constant 0 : index
    %c4_183 = arith.constant 4 : index
    %c0_184 = arith.constant 0 : index
    %173 = vector.load %arg4[%c0_182, %c4_183, %c0_184] : memref<6x20x16xf32, #tpu.memory_space<vmem>>, vector<6x16x16xf32>
    %cst_185 = arith.constant 5.000000e-02 : f32
    %174 = vector.broadcast %cst_185 : f32 to vector<6x16x16xf32>
    %175 = arith.mulf %174, %173 : vector<6x16x16xf32>
    %176 = arith.addf %172, %175 : vector<6x16x16xf32>
    %177 = vector.extract_strided_slice %176 {offsets = [0, 0, 0], sizes = [6, 16, 1], strides = [1, 1, 1]} : vector<6x16x16xf32> to vector<6x16x1xf32>
    %178 = vector.extract_strided_slice %176 {offsets = [0, 0, 15], sizes = [6, 16, 1], strides = [1, 1, 1]} : vector<6x16x16xf32> to vector<6x16x1xf32>
    %c0_186 = arith.constant 0 : index
    %c0_187 = arith.constant 0 : index
    %c2_188 = arith.constant 2 : index
    %179 = vector.load %arg5[%c0_186, %c0_187, %c2_188] : memref<6x16x20xf32, #tpu.memory_space<vmem>>, vector<6x16x16xf32>
    tpu.vector_store %arg5[%c0_186, %c0_187, %c2_188], %176 {strides = array<i32>} : memref<6x16x20xf32, #tpu.memory_space<vmem>>, vector<6x16x16xf32>,
    %c0_189 = arith.constant 0 : index
    %c0_190 = arith.constant 0 : index
    %c0_191 = arith.constant 0 : index
    %180 = vector.load %arg5[%c0_189, %c0_190, %c0_191] : memref<6x16x20xf32, #tpu.memory_space<vmem>>, vector<6x16x1xf32>
    tpu.vector_store %arg5[%c0_189, %c0_190, %c0_191], %177 {strides = array<i32>} : memref<6x16x20xf32, #tpu.memory_space<vmem>>, vector<6x16x1xf32>,
    %c0_192 = arith.constant 0 : index
    %c0_193 = arith.constant 0 : index
    %c1_194 = arith.constant 1 : index
    %181 = vector.load %arg5[%c0_192, %c0_193, %c1_194] : memref<6x16x20xf32, #tpu.memory_space<vmem>>, vector<6x16x1xf32>
    tpu.vector_store %arg5[%c0_192, %c0_193, %c1_194], %177 {strides = array<i32>} : memref<6x16x20xf32, #tpu.memory_space<vmem>>, vector<6x16x1xf32>,
    %c0_195 = arith.constant 0 : index
    %c0_196 = arith.constant 0 : index
    %c18_197 = arith.constant 18 : index
    %182 = vector.load %arg5[%c0_195, %c0_196, %c18_197] : memref<6x16x20xf32, #tpu.memory_space<vmem>>, vector<6x16x1xf32>
    tpu.vector_store %arg5[%c0_195, %c0_196, %c18_197], %178 {strides = array<i32>} : memref<6x16x20xf32, #tpu.memory_space<vmem>>, vector<6x16x1xf32>,
    %c0_198 = arith.constant 0 : index
    %c0_199 = arith.constant 0 : index
    %c19_200 = arith.constant 19 : index
    %183 = vector.load %arg5[%c0_198, %c0_199, %c19_200] : memref<6x16x20xf32, #tpu.memory_space<vmem>>, vector<6x16x1xf32>
    tpu.vector_store %arg5[%c0_198, %c0_199, %c19_200], %178 {strides = array<i32>} : memref<6x16x20xf32, #tpu.memory_space<vmem>>, vector<6x16x1xf32>,
    %c0_201 = arith.constant 0 : index
    %c0_202 = arith.constant 0 : index
    %c0_203 = arith.constant 0 : index
    %184 = vector.load %arg5[%c0_201, %c0_202, %c0_203] : memref<6x16x20xf32, #tpu.memory_space<vmem>>, vector<6x16x16xf32>
    %cst_204 = arith.constant 5.000000e-02 : f32
    %185 = vector.broadcast %cst_204 : f32 to vector<6x16x16xf32>
    %186 = arith.mulf %185, %184 : vector<6x16x16xf32>
    %c0_205 = arith.constant 0 : index
    %c0_206 = arith.constant 0 : index
    %c1_207 = arith.constant 1 : index
    %187 = vector.load %arg5[%c0_205, %c0_206, %c1_207] : memref<6x16x20xf32, #tpu.memory_space<vmem>>, vector<6x16x16xf32>
    %cst_208 = arith.constant 2.500000e-01 : f32
    %188 = vector.broadcast %cst_208 : f32 to vector<6x16x16xf32>
    %189 = arith.mulf %188, %187 : vector<6x16x16xf32>
    %190 = arith.addf %186, %189 : vector<6x16x16xf32>
    %c0_209 = arith.constant 0 : index
    %c0_210 = arith.constant 0 : index
    %c2_211 = arith.constant 2 : index
    %191 = vector.load %arg5[%c0_209, %c0_210, %c2_211] : memref<6x16x20xf32, #tpu.memory_space<vmem>>, vector<6x16x16xf32>
    %cst_212 = arith.constant 4.000000e-01 : f32
    %192 = vector.broadcast %cst_212 : f32 to vector<6x16x16xf32>
    %193 = arith.mulf %192, %191 : vector<6x16x16xf32>
    %194 = arith.addf %190, %193 : vector<6x16x16xf32>
    %c0_213 = arith.constant 0 : index
    %c0_214 = arith.constant 0 : index
    %c3_215 = arith.constant 3 : index
    %195 = vector.load %arg5[%c0_213, %c0_214, %c3_215] : memref<6x16x20xf32, #tpu.memory_space<vmem>>, vector<6x16x16xf32>
    %cst_216 = arith.constant 2.500000e-01 : f32
    %196 = vector.broadcast %cst_216 : f32 to vector<6x16x16xf32>
    %197 = arith.mulf %196, %195 : vector<6x16x16xf32>
    %198 = arith.addf %194, %197 : vector<6x16x16xf32>
    %c0_217 = arith.constant 0 : index
    %c0_218 = arith.constant 0 : index
    %c4_219 = arith.constant 4 : index
    %199 = vector.load %arg5[%c0_217, %c0_218, %c4_219] : memref<6x16x20xf32, #tpu.memory_space<vmem>>, vector<6x16x16xf32>
    %cst_220 = arith.constant 5.000000e-02 : f32
    %200 = vector.broadcast %cst_220 : f32 to vector<6x16x16xf32>
    %201 = arith.mulf %200, %199 : vector<6x16x16xf32>
    %202 = arith.addf %198, %201 : vector<6x16x16xf32>
    %203 = vector.broadcast %41 : vector<1x16x16xf32> to vector<6x16x16xf32>
    %204 = arith.mulf %202, %203 : vector<6x16x16xf32>
    %205 = vector.extract_strided_slice %204 {offsets = [0, 0, 0], sizes = [6, 1, 16], strides = [1, 1, 1]} : vector<6x16x16xf32> to vector<6x1x16xf32>
    %206 = vector.extract_strided_slice %204 {offsets = [0, 15, 0], sizes = [6, 1, 16], strides = [1, 1, 1]} : vector<6x16x16xf32> to vector<6x1x16xf32>
    %c0_221 = arith.constant 0 : index
    %c2_222 = arith.constant 2 : index
    %c0_223 = arith.constant 0 : index
    %207 = vector.load %arg4[%c0_221, %c2_222, %c0_223] : memref<6x20x16xf32, #tpu.memory_space<vmem>>, vector<6x16x16xf32>
    tpu.vector_store %arg4[%c0_221, %c2_222, %c0_223], %204 {strides = array<i32>} : memref<6x20x16xf32, #tpu.memory_space<vmem>>, vector<6x16x16xf32>,
    %c0_224 = arith.constant 0 : index
    %c0_225 = arith.constant 0 : index
    %c0_226 = arith.constant 0 : index
    %208 = vector.load %arg4[%c0_224, %c0_225, %c0_226] : memref<6x20x16xf32, #tpu.memory_space<vmem>>, vector<6x1x16xf32>
    tpu.vector_store %arg4[%c0_224, %c0_225, %c0_226], %205 {strides = array<i32>} : memref<6x20x16xf32, #tpu.memory_space<vmem>>, vector<6x1x16xf32>,
    %c0_227 = arith.constant 0 : index
    %c1_228 = arith.constant 1 : index
    %c0_229 = arith.constant 0 : index
    %209 = vector.load %arg4[%c0_227, %c1_228, %c0_229] : memref<6x20x16xf32, #tpu.memory_space<vmem>>, vector<6x1x16xf32>
    tpu.vector_store %arg4[%c0_227, %c1_228, %c0_229], %205 {strides = array<i32>} : memref<6x20x16xf32, #tpu.memory_space<vmem>>, vector<6x1x16xf32>,
    %c0_230 = arith.constant 0 : index
    %c18_231 = arith.constant 18 : index
    %c0_232 = arith.constant 0 : index
    %210 = vector.load %arg4[%c0_230, %c18_231, %c0_232] : memref<6x20x16xf32, #tpu.memory_space<vmem>>, vector<6x1x16xf32>
    tpu.vector_store %arg4[%c0_230, %c18_231, %c0_232], %206 {strides = array<i32>} : memref<6x20x16xf32, #tpu.memory_space<vmem>>, vector<6x1x16xf32>,
    %c0_233 = arith.constant 0 : index
    %c19_234 = arith.constant 19 : index
    %c0_235 = arith.constant 0 : index
    %211 = vector.load %arg4[%c0_233, %c19_234, %c0_235] : memref<6x20x16xf32, #tpu.memory_space<vmem>>, vector<6x1x16xf32>
    tpu.vector_store %arg4[%c0_233, %c19_234, %c0_235], %206 {strides = array<i32>} : memref<6x20x16xf32, #tpu.memory_space<vmem>>, vector<6x1x16xf32>,
    %c0_236 = arith.constant 0 : index
    %c0_237 = arith.constant 0 : index
    %c0_238 = arith.constant 0 : index
    %212 = vector.load %arg4[%c0_236, %c0_237, %c0_238] : memref<6x20x16xf32, #tpu.memory_space<vmem>>, vector<6x16x16xf32>
    %cst_239 = arith.constant 5.000000e-02 : f32
    %213 = vector.broadcast %cst_239 : f32 to vector<6x16x16xf32>
    %214 = arith.mulf %213, %212 : vector<6x16x16xf32>
    %c0_240 = arith.constant 0 : index
    %c1_241 = arith.constant 1 : index
    %c0_242 = arith.constant 0 : index
    %215 = vector.load %arg4[%c0_240, %c1_241, %c0_242] : memref<6x20x16xf32, #tpu.memory_space<vmem>>, vector<6x16x16xf32>
    %cst_243 = arith.constant 2.500000e-01 : f32
    %216 = vector.broadcast %cst_243 : f32 to vector<6x16x16xf32>
    %217 = arith.mulf %216, %215 : vector<6x16x16xf32>
    %218 = arith.addf %214, %217 : vector<6x16x16xf32>
    %c0_244 = arith.constant 0 : index
    %c2_245 = arith.constant 2 : index
    %c0_246 = arith.constant 0 : index
    %219 = vector.load %arg4[%c0_244, %c2_245, %c0_246] : memref<6x20x16xf32, #tpu.memory_space<vmem>>, vector<6x16x16xf32>
    %cst_247 = arith.constant 4.000000e-01 : f32
    %220 = vector.broadcast %cst_247 : f32 to vector<6x16x16xf32>
    %221 = arith.mulf %220, %219 : vector<6x16x16xf32>
    %222 = arith.addf %218, %221 : vector<6x16x16xf32>
    %c0_248 = arith.constant 0 : index
    %c3_249 = arith.constant 3 : index
    %c0_250 = arith.constant 0 : index
    %223 = vector.load %arg4[%c0_248, %c3_249, %c0_250] : memref<6x20x16xf32, #tpu.memory_space<vmem>>, vector<6x16x16xf32>
    %cst_251 = arith.constant 2.500000e-01 : f32
    %224 = vector.broadcast %cst_251 : f32 to vector<6x16x16xf32>
    %225 = arith.mulf %224, %223 : vector<6x16x16xf32>
    %226 = arith.addf %222, %225 : vector<6x16x16xf32>
    %c0_252 = arith.constant 0 : index
    %c4_253 = arith.constant 4 : index
    %c0_254 = arith.constant 0 : index
    %227 = vector.load %arg4[%c0_252, %c4_253, %c0_254] : memref<6x20x16xf32, #tpu.memory_space<vmem>>, vector<6x16x16xf32>
    %cst_255 = arith.constant 5.000000e-02 : f32
    %228 = vector.broadcast %cst_255 : f32 to vector<6x16x16xf32>
    %229 = arith.mulf %228, %227 : vector<6x16x16xf32>
    %230 = arith.addf %226, %229 : vector<6x16x16xf32>
    %231 = vector.extract_strided_slice %230 {offsets = [0, 0, 0], sizes = [6, 16, 1], strides = [1, 1, 1]} : vector<6x16x16xf32> to vector<6x16x1xf32>
    %232 = vector.extract_strided_slice %230 {offsets = [0, 0, 15], sizes = [6, 16, 1], strides = [1, 1, 1]} : vector<6x16x16xf32> to vector<6x16x1xf32>
    %c0_256 = arith.constant 0 : index
    %c0_257 = arith.constant 0 : index
    %c2_258 = arith.constant 2 : index
    %233 = vector.load %arg5[%c0_256, %c0_257, %c2_258] : memref<6x16x20xf32, #tpu.memory_space<vmem>>, vector<6x16x16xf32>
    tpu.vector_store %arg5[%c0_256, %c0_257, %c2_258], %230 {strides = array<i32>} : memref<6x16x20xf32, #tpu.memory_space<vmem>>, vector<6x16x16xf32>,
    %c0_259 = arith.constant 0 : index
    %c0_260 = arith.constant 0 : index
    %c0_261 = arith.constant 0 : index
    %234 = vector.load %arg5[%c0_259, %c0_260, %c0_261] : memref<6x16x20xf32, #tpu.memory_space<vmem>>, vector<6x16x1xf32>
    tpu.vector_store %arg5[%c0_259, %c0_260, %c0_261], %231 {strides = array<i32>} : memref<6x16x20xf32, #tpu.memory_space<vmem>>, vector<6x16x1xf32>,
    %c0_262 = arith.constant 0 : index
    %c0_263 = arith.constant 0 : index
    %c1_264 = arith.constant 1 : index
    %235 = vector.load %arg5[%c0_262, %c0_263, %c1_264] : memref<6x16x20xf32, #tpu.memory_space<vmem>>, vector<6x16x1xf32>
    tpu.vector_store %arg5[%c0_262, %c0_263, %c1_264], %231 {strides = array<i32>} : memref<6x16x20xf32, #tpu.memory_space<vmem>>, vector<6x16x1xf32>,
    %c0_265 = arith.constant 0 : index
    %c0_266 = arith.constant 0 : index
    %c18_267 = arith.constant 18 : index
    %236 = vector.load %arg5[%c0_265, %c0_266, %c18_267] : memref<6x16x20xf32, #tpu.memory_space<vmem>>, vector<6x16x1xf32>
    tpu.vector_store %arg5[%c0_265, %c0_266, %c18_267], %232 {strides = array<i32>} : memref<6x16x20xf32, #tpu.memory_space<vmem>>, vector<6x16x1xf32>,
    %c0_268 = arith.constant 0 : index
    %c0_269 = arith.constant 0 : index
    %c19_270 = arith.constant 19 : index
    %237 = vector.load %arg5[%c0_268, %c0_269, %c19_270] : memref<6x16x20xf32, #tpu.memory_space<vmem>>, vector<6x16x1xf32>
    tpu.vector_store %arg5[%c0_268, %c0_269, %c19_270], %232 {strides = array<i32>} : memref<6x16x20xf32, #tpu.memory_space<vmem>>, vector<6x16x1xf32>,
    %c0_271 = arith.constant 0 : index
    %c0_272 = arith.constant 0 : index
    %c0_273 = arith.constant 0 : index
    %238 = vector.load %arg5[%c0_271, %c0_272, %c0_273] : memref<6x16x20xf32, #tpu.memory_space<vmem>>, vector<6x16x16xf32>
    %cst_274 = arith.constant 5.000000e-02 : f32
    %239 = vector.broadcast %cst_274 : f32 to vector<6x16x16xf32>
    %240 = arith.mulf %239, %238 : vector<6x16x16xf32>
    %c0_275 = arith.constant 0 : index
    %c0_276 = arith.constant 0 : index
    %c1_277 = arith.constant 1 : index
    %241 = vector.load %arg5[%c0_275, %c0_276, %c1_277] : memref<6x16x20xf32, #tpu.memory_space<vmem>>, vector<6x16x16xf32>
    %cst_278 = arith.constant 2.500000e-01 : f32
    %242 = vector.broadcast %cst_278 : f32 to vector<6x16x16xf32>
    %243 = arith.mulf %242, %241 : vector<6x16x16xf32>
    %244 = arith.addf %240, %243 : vector<6x16x16xf32>
    %c0_279 = arith.constant 0 : index
    %c0_280 = arith.constant 0 : index
    %c2_281 = arith.constant 2 : index
    %245 = vector.load %arg5[%c0_279, %c0_280, %c2_281] : memref<6x16x20xf32, #tpu.memory_space<vmem>>, vector<6x16x16xf32>
    %cst_282 = arith.constant 4.000000e-01 : f32
    %246 = vector.broadcast %cst_282 : f32 to vector<6x16x16xf32>
    %247 = arith.mulf %246, %245 : vector<6x16x16xf32>
    %248 = arith.addf %244, %247 : vector<6x16x16xf32>
    %c0_283 = arith.constant 0 : index
    %c0_284 = arith.constant 0 : index
    %c3_285 = arith.constant 3 : index
    %249 = vector.load %arg5[%c0_283, %c0_284, %c3_285] : memref<6x16x20xf32, #tpu.memory_space<vmem>>, vector<6x16x16xf32>
    %cst_286 = arith.constant 2.500000e-01 : f32
    %250 = vector.broadcast %cst_286 : f32 to vector<6x16x16xf32>
    %251 = arith.mulf %250, %249 : vector<6x16x16xf32>
    %252 = arith.addf %248, %251 : vector<6x16x16xf32>
    %c0_287 = arith.constant 0 : index
    %c0_288 = arith.constant 0 : index
    %c4_289 = arith.constant 4 : index
    %253 = vector.load %arg5[%c0_287, %c0_288, %c4_289] : memref<6x16x20xf32, #tpu.memory_space<vmem>>, vector<6x16x16xf32>
    %cst_290 = arith.constant 5.000000e-02 : f32
    %254 = vector.broadcast %cst_290 : f32 to vector<6x16x16xf32>
    %255 = arith.mulf %254, %253 : vector<6x16x16xf32>
    %256 = arith.addf %252, %255 : vector<6x16x16xf32>
    %257 = arith.subf %150, %256 : vector<6x16x16xf32>
    %258 = arith.subf %149, %257 : vector<6x16x16xf32>
    %259 = arith.mulf %258, %258 : vector<6x16x16xf32>
    %cst_291 = arith.constant 9.99999997E-7 : f32
    %260 = vector.broadcast %cst_291 : f32 to vector<6x16x16xf32>
    %261 = arith.addf %259, %260 : vector<6x16x16xf32>
    %262 = math.sqrt %261 : vector<6x16x16xf32>
    %263 = vector.shape_cast %262 : vector<6x16x16xf32> to vector<1x6x16x16xf32>
    %cst_292 = arith.constant dense<0.000000e+00> : vector<1xf32>
    %264 = vector.multi_reduction <add>, %263, %cst_292 [1, 2, 3] : vector<1x6x16x16xf32> to vector<1xf32>
    %265 = vector.shape_cast %264 : vector<1xf32> to vector<1x1x1x1xf32>
    %266 = vector.extract %265[0, 0, 0, 0] : f32 from vector<1x1x1x1xf32>
    %267 = vector.broadcast %266 : f32 to vector<1x1x1xf32>
    %c0_293 = arith.constant 0 : index
    %c0_294 = arith.constant 0 : index
    %c0_295 = arith.constant 0 : index
    %268 = vector.load %arg3[%c0_293, %c0_294, %c0_295] : memref<1x1x1xf32, #tpu.memory_space<vmem>>, vector<1x1x1xf32>
    tpu.vector_store %arg3[%c0_293, %c0_294, %c0_295], %267 {strides = array<i32>} : memref<1x1x1xf32, #tpu.memory_space<vmem>>, vector<1x1x1xf32>,
    return
  }
  func.func @transform_0(%arg0: i32) -> (i32, i32, i32) {
    %c0_i32 = arith.constant 0 : i32
    %c0_i32_0 = arith.constant 0 : i32
    %c0_i32_1 = arith.constant 0 : i32
    return %arg0, %c0_i32, %c0_i32_0 : i32, i32, i32
  }
  func.func @transform_1(%arg0: i32) -> (i32, i32, i32) {
    %c0_i32 = arith.constant 0 : i32
    %c0_i32_0 = arith.constant 0 : i32
    %c0_i32_1 = arith.constant 0 : i32
    return %arg0, %c0_i32, %c0_i32_0 : i32, i32, i32
  }
  func.func @transform_2(%arg0: i32) -> (i32, i32, i32) {
    %c0_i32 = arith.constant 0 : i32
    %c0_i32_0 = arith.constant 0 : i32
    %c0_i32_1 = arith.constant 0 : i32
    return %arg0, %c0_i32, %c0_i32_0 : i32, i32, i32
  }
}

</mosaic_0001>

<llo_original>
// kernel: edge_loss.1
$region0: #{edge_loss.1}
  #allocation0 [shape = 'u32[]', space=smem, size = 0x4, offset = 0x4, fixed_abs, tag = 'smem constant byte address 0x4 - core index']
  #allocation1 [shape = 'u32[144,128]{1,0:T(1,128)}', space=vmem, size = 0x12000, scoped, tag = 'internal scratch']
  #allocation2 [shape = 'f32[6,20,16]{2,1,0:T(8,128)}', space=vmem, size = 0x12000, scoped, tag = 'scratch operand']
  #allocation3 [shape = 'f32[6,16,20]{2,1,0:T(8,128)}', space=vmem, size = 0xc000, scoped, tag = 'scratch operand']
  %s0 = inlined_call_operand.hbm [shape: f32[6,16,16], index: 0, kind: input, shape index: {}]
  %s1 = inlined_call_operand.hbm [shape: f32[6,16,16], index: 1, kind: input, shape index: {}]
  %s2 = inlined_call_operand.hbm [shape: f32[1,1,1], index: 2, kind: output, shape index: {}]
  %s3 = sld [smem:[#allocation0]]
  $region26: #{edge_loss.1} parent=0
    _
  %s5 = ssub.s32 1, %s3
  %s6 = scalar_select 0, %s5, %s3
  $region1: #{edge_loss.1} parent=0
    #allocation4 [shape = 'u8[49152]{0}', space=vmem, size = 0xc000, scoped, tag = 'input window, operand 0, single buffered']
    #allocation5 [shape = 's32[1]{0}', space=sflag, size = 0x4, scoped, tag = 'scoped memory for edge_loss.1']
    #allocation6 [shape = 's32[1]{0}', space=sflag, size = 0x4, scoped, tag = 'scoped memory for edge_loss.1']
    #allocation7 [shape = 'u8[49152]{0}', space=vmem, size = 0xc000, scoped, tag = 'input window, operand 1, single buffered']
    #allocation8 [shape = 's32[1]{0}', space=sflag, size = 0x4, scoped, tag = 'scoped memory for edge_loss.1']
    #allocation9 [shape = 'u8[512]{0}', space=vmem, size = 0x400, scoped, tag = 'output window, operand 0, single buffered']
    %7 = vsyncpa [#allocation5], 0
    %8 = vsyncpa [#allocation8], 0
    %9 = vsyncpa [#allocation6], 0
    // Predicated region
    $region2: #{edge_loss.1} parent=1 // pred_check
      _
    $region3: #{edge_loss.1} parent=1 // pred_check_branch
      %11 = sbr.rel (0) target = $region5
    $region4: #{edge_loss.1} parent=1 // pred_region
      %s13 = ssub.s32 1536, 1536
      %14 = vsyncadd [#allocation5], %s13
      %s15 = sshll.u32 [#allocation4], 4
      %s16 = int_to_ptr.vmem [resolvable:$true] %s15
      %21 = dma.hbm_to_vmem [thread:$0]  %s0, 1536, %s16, [#allocation5], 128, 128, 8
    $region5: #{edge_loss.1} parent=1 // pred_fallthru
      _
    // Predicated region
    $region6: #{edge_loss.1} parent=1 // pred_check
      _
    $region7: #{edge_loss.1} parent=1 // pred_check_branch
      %23 = sbr.rel (0) target = $region9
    $region8: #{edge_loss.1} parent=1 // pred_region
      %s25 = ssub.s32 1536, 1536
      %26 = vsyncadd [#allocation8], %s25
      %s27 = sshll.u32 [#allocation7], 4
      %s28 = int_to_ptr.vmem [resolvable:$true] %s27
      %33 = dma.hbm_to_vmem [thread:$0]  %s1, 1536, %s28, [#allocation8], 128, 128, 8
    $region9: #{edge_loss.1} parent=1 // pred_fallthru
      _
    // Predicated region
    $region10: #{edge_loss.1} parent=1 // pred_check
      _
    $region11: #{edge_loss.1} parent=1 // pred_check_branch
      %35 = sbr.rel (0) target = $region13
    $region12: #{edge_loss.1} parent=1 // pred_region
      %36 = dma.done [#allocation5], 1536
    $region13: #{edge_loss.1} parent=1 // pred_fallthru
      _
    // Predicated region
    $region14: #{edge_loss.1} parent=1 // pred_check
      _
    $region15: #{edge_loss.1} parent=1 // pred_check_branch
      %38 = sbr.rel (0) target = $region17
    $region16: #{edge_loss.1} parent=1 // pred_region
      %39 = dma.done [#allocation8], 1536
    $region17: #{edge_loss.1} parent=1 // pred_fallthru
      _
    %v40 = vlaneseq
    %v41 = vshrl.u32 %v40, 7
    %v42 = vadd.s32 %v41, 8
    %v43 = vlaneseq
    %v44 = vand.u32 %v43, 127
    %vm45 = vcmp.lt.s32.totalorder %v41, 0
    %v46 = vsub.s32 0, %v41
    %v47 = vsel %vm45, %v46, %v41
    %v48 = vshrl.u32 %v47, 1
    %v49 = vand.u32 %v47, 1
    %v50 = vsub.s32 0, %v49
    %v51 = vsel %vm45, %v50, %v49
    %vm52 = vcmp.lt.s32.totalorder %v42, 0
    %v53 = vsub.s32 0, %v42
    %v54 = vsel %vm52, %v53, %v42
    %v55 = vshrl.u32 %v54, 1
    %v56 = vand.u32 %v54, 1
    %v57 = vsub.s32 0, %v56
    %v58 = vsel %vm52, %v57, %v56
    %vm59 = vcmp.ne.s32.totalorder %v51, 0
    %vm60 = vcmp.ne.s32.totalorder %v58, 0
    %vm61 = vcmp.lt.s32.totalorder %v51, 0
    %vm62 = vcmp.lt.s32.totalorder %v58, 0
    %vm63 = vmand %vm61, %vm59
    %vm64 = vmand %vm62, %vm60
    %v65 = vadd.s32 %v51, 2
    %v66 = vadd.s32 %v58, 2
    %v67 = vsel %vm63, %v65, %v51
    %v68 = vsel %vm64, %v66, %v58
    %vm69 = vcmp.eq.s32.totalorder %v67, 0
    %vm70 = vcmp.eq.s32.totalorder %v68, 0
    %vm71 = vcmp.lt.s32.totalorder %v44, 0
    %v72 = vsub.s32 0, %v44
    %v73 = vsel %vm71, %v72, %v44
    %v74 = vshrl.u32 %v73, 1
    %v75 = vand.u32 %v73, 1
    %v76 = vsub.s32 0, %v75
    %v77 = vsel %vm71, %v76, %v75
    %vm78 = vcmp.ne.s32.totalorder %v77, 0
    %vm79 = vcmp.lt.s32.totalorder %v77, 0
    %vm80 = vmand %vm79, %vm78
    %v81 = vadd.s32 %v77, 2
    %v82 = vsel %vm80, %v81, %v77
    %vm83 = vcmp.eq.s32.totalorder %v82, 0
    %vm84 = vmand %vm69, %vm83
    %vm85 = vmand %vm70, %vm83
    %v86 = vsel %vm84, 4.0, 0.0
    %v87 = vsel %vm85, 4.0, 0.0
    %v88 = vld [vmem:[#allocation4] sm:$0xff]
    %v89 = vld [vmem:[#allocation4 + $0x8] sm:$0xff]
    %v90 = vld [vmem:[#allocation4 + $0x10] sm:$0xff]
    %v91 = vld [vmem:[#allocation4 + $0x18] sm:$0xff]
    %v92 = vld [vmem:[#allocation4 + $0x20] sm:$0xff]
    %v93 = vld [vmem:[#allocation4 + $0x28] sm:$0xff]
    %v94 = vld [vmem:[#allocation4 + $0x30] sm:$0xff]
    %v95 = vld [vmem:[#allocation4 + $0x38] sm:$0xff]
    %v96 = vld [vmem:[#allocation4 + $0x40] sm:$0xff]
    %v97 = vld [vmem:[#allocation4 + $0x48] sm:$0xff]
    %v98 = vld [vmem:[#allocation4 + $0x50] sm:$0xff]
    %v99 = vld [vmem:[#allocation4 + $0x58] sm:$0xff]
    %vm100 = vcmask 130048
    %101 = vst.msk [vmem:[#allocation2 + $0x2] sm:$0xff] %vm100, %v88
    %102 = vst.msk [vmem:[#allocation2 + $0xa] sm:$0xff] %vm100, %v89
    %103 = vst.msk [vmem:[#allocation2 + $0x1a] sm:$0xff] %vm100, %v90
    %104 = vst.msk [vmem:[#allocation2 + $0x22] sm:$0xff] %vm100, %v91
    %105 = vst.msk [vmem:[#allocation2 + $0x32] sm:$0xff] %vm100, %v92
    %106 = vst.msk [vmem:[#allocation2 + $0x3a] sm:$0xff] %vm100, %v93
    %107 = vst.msk [vmem:[#allocation2 + $0x4a] sm:$0xff] %vm100, %v94
    %108 = vst.msk [vmem:[#allocation2 + $0x52] sm:$0xff] %vm100, %v95
    %109 = vst.msk [vmem:[#allocation2 + $0x62] sm:$0xff] %vm100, %v96
    %110 = vst.msk [vmem:[#allocation2 + $0x6a] sm:$0xff] %vm100, %v97
    %111 = vst.msk [vmem:[#allocation2 + $0x7a] sm:$0xff] %vm100, %v98
    %112 = vst.msk [vmem:[#allocation2 + $0x82] sm:$0xff] %vm100, %v99
    %vm113 = vcmask 122880
    %114 = vst.msk [vmem:[#allocation2] sm:$0x1] %vm113, %v88
    %115 = vst.msk [vmem:[#allocation2 + $0x18] sm:$0x1] %vm113, %v90
    %116 = vst.msk [vmem:[#allocation2 + $0x30] sm:$0x1] %vm113, %v92
    %117 = vst.msk [vmem:[#allocation2 + $0x48] sm:$0x1] %vm113, %v94
    %118 = vst.msk [vmem:[#allocation2 + $0x60] sm:$0x1] %vm113, %v96
    %119 = vst.msk [vmem:[#allocation2 + $0x78] sm:$0x1] %vm113, %v98
    %120 = vst.msk [vmem:[#allocation2 + $0x1] sm:$0x1] %vm113, %v88
    %121 = vst.msk [vmem:[#allocation2 + $0x19] sm:$0x1] %vm113, %v90
    %122 = vst.msk [vmem:[#allocation2 + $0x31] sm:$0x1] %vm113, %v92
    %123 = vst.msk [vmem:[#allocation2 + $0x49] sm:$0x1] %vm113, %v94
    %124 = vst.msk [vmem:[#allocation2 + $0x61] sm:$0x1] %vm113, %v96
    %125 = vst.msk [vmem:[#allocation2 + $0x79] sm:$0x1] %vm113, %v98
    %vm126 = vcmask 130055
    %127 = vst.msk [vmem:[#allocation2 + $0xb] sm:$0x80] %vm126, %v89
    %128 = vst.msk [vmem:[#allocation2 + $0x23] sm:$0x80] %vm126, %v91
    %129 = vst.msk [vmem:[#allocation2 + $0x3b] sm:$0x80] %vm126, %v93
    %130 = vst.msk [vmem:[#allocation2 + $0x53] sm:$0x80] %vm126, %v95
    %131 = vst.msk [vmem:[#allocation2 + $0x6b] sm:$0x80] %vm126, %v97
    %132 = vst.msk [vmem:[#allocation2 + $0x83] sm:$0x80] %vm126, %v99
    %133 = vst.msk [vmem:[#allocation2 + $0xc] sm:$0x80] %vm126, %v89
    %134 = vst.msk [vmem:[#allocation2 + $0x24] sm:$0x80] %vm126, %v91
    %135 = vst.msk [vmem:[#allocation2 + $0x3c] sm:$0x80] %vm126, %v93
    %136 = vst.msk [vmem:[#allocation2 + $0x54] sm:$0x80] %vm126, %v95
    %137 = vst.msk [vmem:[#allocation2 + $0x6c] sm:$0x80] %vm126, %v97
    %138 = vst.msk [vmem:[#allocation2 + $0x84] sm:$0x80] %vm126, %v99
    %v139 = vld [vmem:[#allocation2] sm:$0xff]
    %v140 = vld [vmem:[#allocation2 + $0x8] sm:$0xff]
    %v141 = vld [vmem:[#allocation2 + $0x18] sm:$0xff]
    %v142 = vld [vmem:[#allocation2 + $0x20] sm:$0xff]
    %v143 = vld [vmem:[#allocation2 + $0x30] sm:$0xff]
    %v144 = vld [vmem:[#allocation2 + $0x38] sm:$0xff]
    %v145 = vld [vmem:[#allocation2 + $0x48] sm:$0xff]
    %v146 = vld [vmem:[#allocation2 + $0x50] sm:$0xff]
    %v147 = vld [vmem:[#allocation2 + $0x60] sm:$0xff]
    %v148 = vld [vmem:[#allocation2 + $0x68] sm:$0xff]
    %v149 = vld [vmem:[#allocation2 + $0x78] sm:$0xff]
    %v150 = vld [vmem:[#allocation2 + $0x80] sm:$0xff]
    %v151 = vmul.f32 %v139, 0.05
    %v152 = vmul.f32 %v140, 0.05
    %v153 = vmul.f32 %v141, 0.05
    %v154 = vmul.f32 %v142, 0.05
    %v155 = vmul.f32 %v143, 0.05
    %v156 = vmul.f32 %v144, 0.05
    %v157 = vmul.f32 %v145, 0.05
    %v158 = vmul.f32 %v146, 0.05
    %v159 = vmul.f32 %v147, 0.05
    %v160 = vmul.f32 %v148, 0.05
    %v161 = vmul.f32 %v149, 0.05
    %v162 = vmul.f32 %v150, 0.05
    %v163 = vld [vmem:[#allocation2 + $0x1] sm:$0xff]
    %v164 = vld [vmem:[#allocation2 + $0x9] sm:$0xff]
    %v165 = vld [vmem:[#allocation2 + $0x19] sm:$0xff]
    %v166 = vld [vmem:[#allocation2 + $0x21] sm:$0xff]
    %v167 = vld [vmem:[#allocation2 + $0x31] sm:$0xff]
    %v168 = vld [vmem:[#allocation2 + $0x39] sm:$0xff]
    %v169 = vld [vmem:[#allocation2 + $0x49] sm:$0xff]
    %v170 = vld [vmem:[#allocation2 + $0x51] sm:$0xff]
    %v171 = vld [vmem:[#allocation2 + $0x61] sm:$0xff]
    %v172 = vld [vmem:[#allocation2 + $0x69] sm:$0xff]
    %v173 = vld [vmem:[#allocation2 + $0x79] sm:$0xff]
    %v174 = vld [vmem:[#allocation2 + $0x81] sm:$0xff]
    %v175 = vmul.f32 %v163, 0.25
    %v176 = vmul.f32 %v164, 0.25
    %v177 = vmul.f32 %v165, 0.25
    %v178 = vmul.f32 %v166, 0.25
    %v179 = vmul.f32 %v167, 0.25
    %v180 = vmul.f32 %v168, 0.25
    %v181 = vmul.f32 %v169, 0.25
    %v182 = vmul.f32 %v170, 0.25
    %v183 = vmul.f32 %v171, 0.25
    %v184 = vmul.f32 %v172, 0.25
    %v185 = vmul.f32 %v173, 0.25
    %v186 = vmul.f32 %v174, 0.25
    %v187 = vadd.f32 %v151, %v175
    %v188 = vadd.f32 %v152, %v176
    %v189 = vadd.f32 %v153, %v177
    %v190 = vadd.f32 %v154, %v178
    %v191 = vadd.f32 %v155, %v179
    %v192 = vadd.f32 %v156, %v180
    %v193 = vadd.f32 %v157, %v181
    %v194 = vadd.f32 %v158, %v182
    %v195 = vadd.f32 %v159, %v183
    %v196 = vadd.f32 %v160, %v184
    %v197 = vadd.f32 %v161, %v185
    %v198 = vadd.f32 %v162, %v186
    %v199 = vld [vmem:[#allocation2 + $0x2] sm:$0xff]
    %v200 = vld [vmem:[#allocation2 + $0xa] sm:$0xff]
    %v201 = vld [vmem:[#allocation2 + $0x1a] sm:$0xff]
    %v202 = vld [vmem:[#allocation2 + $0x22] sm:$0xff]
    %v203 = vld [vmem:[#allocation2 + $0x32] sm:$0xff]
    %v204 = vld [vmem:[#allocation2 + $0x3a] sm:$0xff]
    %v205 = vld [vmem:[#allocation2 + $0x4a] sm:$0xff]
    %v206 = vld [vmem:[#allocation2 + $0x52] sm:$0xff]
    %v207 = vld [vmem:[#allocation2 + $0x62] sm:$0xff]
    %v208 = vld [vmem:[#allocation2 + $0x6a] sm:$0xff]
    %v209 = vld [vmem:[#allocation2 + $0x7a] sm:$0xff]
    %v210 = vld [vmem:[#allocation2 + $0x82] sm:$0xff]
    %v211 = vmul.f32 %v199, 0.4
    %v212 = vmul.f32 %v200, 0.4
    %v213 = vmul.f32 %v201, 0.4
    %v214 = vmul.f32 %v202, 0.4
    %v215 = vmul.f32 %v203, 0.4
    %v216 = vmul.f32 %v204, 0.4
    %v217 = vmul.f32 %v205, 0.4
    %v218 = vmul.f32 %v206, 0.4
    %v219 = vmul.f32 %v207, 0.4
    %v220 = vmul.f32 %v208, 0.4
    %v221 = vmul.f32 %v209, 0.4
    %v222 = vmul.f32 %v210, 0.4
    %v223 = vadd.f32 %v187, %v211
    %v224 = vadd.f32 %v188, %v212
    %v225 = vadd.f32 %v189, %v213
    %v226 = vadd.f32 %v190, %v214
    %v227 = vadd.f32 %v191, %v215
    %v228 = vadd.f32 %v192, %v216
    %v229 = vadd.f32 %v193, %v217
    %v230 = vadd.f32 %v194, %v218
    %v231 = vadd.f32 %v195, %v219
    %v232 = vadd.f32 %v196, %v220
    %v233 = vadd.f32 %v197, %v221
    %v234 = vadd.f32 %v198, %v222
    %v235 = vld [vmem:[#allocation2 + $0x3] sm:$0xff]
    %v236 = vld [vmem:[#allocation2 + $0xb] sm:$0xff]
    %v237 = vld [vmem:[#allocation2 + $0x1b] sm:$0xff]
    %v238 = vld [vmem:[#allocation2 + $0x23] sm:$0xff]
    %v239 = vld [vmem:[#allocation2 + $0x33] sm:$0xff]
    %v240 = vld [vmem:[#allocation2 + $0x3b] sm:$0xff]
    %v241 = vld [vmem:[#allocation2 + $0x4b] sm:$0xff]
    %v242 = vld [vmem:[#allocation2 + $0x53] sm:$0xff]
    %v243 = vld [vmem:[#allocation2 + $0x63] sm:$0xff]
    %v244 = vld [vmem:[#allocation2 + $0x6b] sm:$0xff]
    %v245 = vld [vmem:[#allocation2 + $0x7b] sm:$0xff]
    %v246 = vld [vmem:[#allocation2 + $0x83] sm:$0xff]
    %v247 = vmul.f32 %v235, 0.25
    %v248 = vmul.f32 %v236, 0.25
    %v249 = vmul.f32 %v237, 0.25
    %v250 = vmul.f32 %v238, 0.25
    %v251 = vmul.f32 %v239, 0.25
    %v252 = vmul.f32 %v240, 0.25
    %v253 = vmul.f32 %v241, 0.25
    %v254 = vmul.f32 %v242, 0.25
    %v255 = vmul.f32 %v243, 0.25
    %v256 = vmul.f32 %v244, 0.25
    %v257 = vmul.f32 %v245, 0.25
    %v258 = vmul.f32 %v246, 0.25
    %v259 = vadd.f32 %v223, %v247
    %v260 = vadd.f32 %v224, %v248
    %v261 = vadd.f32 %v225, %v249
    %v262 = vadd.f32 %v226, %v250
    %v263 = vadd.f32 %v227, %v251
    %v264 = vadd.f32 %v228, %v252
    %v265 = vadd.f32 %v229, %v253
    %v266 = vadd.f32 %v230, %v254
    %v267 = vadd.f32 %v231, %v255
    %v268 = vadd.f32 %v232, %v256
    %v269 = vadd.f32 %v233, %v257
    %v270 = vadd.f32 %v234, %v258
    %v271 = vld [vmem:[#allocation2 + $0x4] sm:$0xff]
    %v272 = vld [vmem:[#allocation2 + $0xc] sm:$0xff]
    %v273 = vld [vmem:[#allocation2 + $0x1c] sm:$0xff]
    %v274 = vld [vmem:[#allocation2 + $0x24] sm:$0xff]
    %v275 = vld [vmem:[#allocation2 + $0x34] sm:$0xff]
    %v276 = vld [vmem:[#allocation2 + $0x3c] sm:$0xff]
    %v277 = vld [vmem:[#allocation2 + $0x4c] sm:$0xff]
    %v278 = vld [vmem:[#allocation2 + $0x54] sm:$0xff]
    %v279 = vld [vmem:[#allocation2 + $0x64] sm:$0xff]
    %v280 = vld [vmem:[#allocation2 + $0x6c] sm:$0xff]
    %v281 = vld [vmem:[#allocation2 + $0x7c] sm:$0xff]
    %v282 = vld [vmem:[#allocation2 + $0x84] sm:$0xff]
    %v283 = vmul.f32 %v271, 0.05
    %v284 = vmul.f32 %v272, 0.05
    %v285 = vmul.f32 %v273, 0.05
    %v286 = vmul.f32 %v274, 0.05
    %v287 = vmul.f32 %v275, 0.05
    %v288 = vmul.f32 %v276, 0.05
    %v289 = vmul.f32 %v277, 0.05
    %v290 = vmul.f32 %v278, 0.05
    %v291 = vmul.f32 %v279, 0.05
    %v292 = vmul.f32 %v280, 0.05
    %v293 = vmul.f32 %v281, 0.05
    %v294 = vmul.f32 %v282, 0.05
    %v295 = vadd.f32 %v259, %v283
    %v296 = vadd.f32 %v260, %v284
    %v297 = vadd.f32 %v261, %v285
    %v298 = vadd.f32 %v262, %v286
    %v299 = vadd.f32 %v263, %v287
    %v300 = vadd.f32 %v264, %v288
    %v301 = vadd.f32 %v265, %v289
    %v302 = vadd.f32 %v266, %v290
    %v303 = vadd.f32 %v267, %v291
    %v304 = vadd.f32 %v268, %v292
    %v305 = vadd.f32 %v269, %v293
    %v306 = vadd.f32 %v270, %v294
    %319 = vrot.lane.b32.xlu0 %v295, 2
    %v320 = vpop.permute.xlu0 %319
    %321 = vrot.lane.b32.xlu0 %v296, 2
    %v322 = vpop.permute.xlu0 %321
    %323 = vrot.lane.b32.xlu0 %v297, 2
    %v324 = vpop.permute.xlu0 %323
    %325 = vrot.lane.b32.xlu0 %v298, 2
    %v326 = vpop.permute.xlu0 %325
    %327 = vrot.lane.b32.xlu0 %v299, 2
    %v328 = vpop.permute.xlu0 %327
    %329 = vrot.lane.b32.xlu0 %v300, 2
    %v330 = vpop.permute.xlu0 %329
    %331 = vrot.lane.b32.xlu0 %v301, 2
    %v332 = vpop.permute.xlu0 %331
    %333 = vrot.lane.b32.xlu0 %v302, 2
    %v334 = vpop.permute.xlu0 %333
    %335 = vrot.lane.b32.xlu0 %v303, 2
    %v336 = vpop.permute.xlu0 %335
    %337 = vrot.lane.b32.xlu0 %v304, 2
    %v338 = vpop.permute.xlu0 %337
    %339 = vrot.lane.b32.xlu0 %v305, 2
    %v340 = vpop.permute.xlu0 %339
    %341 = vrot.lane.b32.xlu0 %v306, 2
    %v342 = vpop.permute.xlu0 %341
    %vm355 = vcmask 146448
    %356 = vst.msk [vmem:[#allocation3] sm:$0xff] %vm355, %v320
    %357 = vst.msk [vmem:[#allocation3 + $0x8] sm:$0xff] %vm355, %v322
    %358 = vst.msk [vmem:[#allocation3 + $0x10] sm:$0xff] %vm355, %v324
    %359 = vst.msk [vmem:[#allocation3 + $0x18] sm:$0xff] %vm355, %v326
    %360 = vst.msk [vmem:[#allocation3 + $0x20] sm:$0xff] %vm355, %v328
    %361 = vst.msk [vmem:[#allocation3 + $0x28] sm:$0xff] %vm355, %v330
    %362 = vst.msk [vmem:[#allocation3 + $0x30] sm:$0xff] %vm355, %v332
    %363 = vst.msk [vmem:[#allocation3 + $0x38] sm:$0xff] %vm355, %v334
    %364 = vst.msk [vmem:[#allocation3 + $0x40] sm:$0xff] %vm355, %v336
    %365 = vst.msk [vmem:[#allocation3 + $0x48] sm:$0xff] %vm355, %v338
    %366 = vst.msk [vmem:[#allocation3 + $0x50] sm:$0xff] %vm355, %v340
    %367 = vst.msk [vmem:[#allocation3 + $0x58] sm:$0xff] %vm355, %v342
    %vm368 = vcmask 7168
    %369 = vst.msk [vmem:[#allocation3] sm:$0xff] %vm368, %v295
    %370 = vst.msk [vmem:[#allocation3 + $0x8] sm:$0xff] %vm368, %v296
    %371 = vst.msk [vmem:[#allocation3 + $0x10] sm:$0xff] %vm368, %v297
    %372 = vst.msk [vmem:[#allocation3 + $0x18] sm:$0xff] %vm368, %v298
    %373 = vst.msk [vmem:[#allocation3 + $0x20] sm:$0xff] %vm368, %v299
    %374 = vst.msk [vmem:[#allocation3 + $0x28] sm:$0xff] %vm368, %v300
    %375 = vst.msk [vmem:[#allocation3 + $0x30] sm:$0xff] %vm368, %v301
    %376 = vst.msk [vmem:[#allocation3 + $0x38] sm:$0xff] %vm368, %v302
    %377 = vst.msk [vmem:[#allocation3 + $0x40] sm:$0xff] %vm368, %v303
    %378 = vst.msk [vmem:[#allocation3 + $0x48] sm:$0xff] %vm368, %v304
    %379 = vst.msk [vmem:[#allocation3 + $0x50] sm:$0xff] %vm368, %v305
    %380 = vst.msk [vmem:[#allocation3 + $0x58] sm:$0xff] %vm368, %v306
    %381 = vrot.lane.b32.xlu0 %v295, 1
    %v382 = vpop.permute.xlu0 %381
    %383 = vrot.lane.b32.xlu0 %v296, 1
    %v384 = vpop.permute.xlu0 %383
    %385 = vrot.lane.b32.xlu0 %v297, 1
    %v386 = vpop.permute.xlu0 %385
    %387 = vrot.lane.b32.xlu0 %v298, 1
    %v388 = vpop.permute.xlu0 %387
    %389 = vrot.lane.b32.xlu0 %v299, 1
    %v390 = vpop.permute.xlu0 %389
    %391 = vrot.lane.b32.xlu0 %v300, 1
    %v392 = vpop.permute.xlu0 %391
    %393 = vrot.lane.b32.xlu0 %v301, 1
    %v394 = vpop.permute.xlu0 %393
    %395 = vrot.lane.b32.xlu0 %v302, 1
    %v396 = vpop.permute.xlu0 %395
    %397 = vrot.lane.b32.xlu0 %v303, 1
    %v398 = vpop.permute.xlu0 %397
    %399 = vrot.lane.b32.xlu0 %v304, 1
    %v400 = vpop.permute.xlu0 %399
    %401 = vrot.lane.b32.xlu0 %v305, 1
    %v402 = vpop.permute.xlu0 %401
    %403 = vrot.lane.b32.xlu0 %v306, 1
    %v404 = vpop.permute.xlu0 %403
    %vm417 = vcmask 15368
    %418 = vst.msk [vmem:[#allocation3] sm:$0xff] %vm417, %v382
    %419 = vst.msk [vmem:[#allocation3 + $0x8] sm:$0xff] %vm417, %v384
    %420 = vst.msk [vmem:[#allocation3 + $0x10] sm:$0xff] %vm417, %v386
    %421 = vst.msk [vmem:[#allocation3 + $0x18] sm:$0xff] %vm417, %v388
    %422 = vst.msk [vmem:[#allocation3 + $0x20] sm:$0xff] %vm417, %v390
    %423 = vst.msk [vmem:[#allocation3 + $0x28] sm:$0xff] %vm417, %v392
    %424 = vst.msk [vmem:[#allocation3 + $0x30] sm:$0xff] %vm417, %v394
    %425 = vst.msk [vmem:[#allocation3 + $0x38] sm:$0xff] %vm417, %v396
    %426 = vst.msk [vmem:[#allocation3 + $0x40] sm:$0xff] %vm417, %v398
    %427 = vst.msk [vmem:[#allocation3 + $0x48] sm:$0xff] %vm417, %v400
    %428 = vst.msk [vmem:[#allocation3 + $0x50] sm:$0xff] %vm417, %v402
    %429 = vst.msk [vmem:[#allocation3 + $0x58] sm:$0xff] %vm417, %v404
    %430 = vrot.lane.b32.xlu0 %v295, 3
    %v431 = vpop.permute.xlu0 %430
    %432 = vrot.lane.b32.xlu0 %v296, 3
    %v433 = vpop.permute.xlu0 %432
    %434 = vrot.lane.b32.xlu0 %v297, 3
    %v435 = vpop.permute.xlu0 %434
    %436 = vrot.lane.b32.xlu0 %v298, 3
    %v437 = vpop.permute.xlu0 %436
    %438 = vrot.lane.b32.xlu0 %v299, 3
    %v439 = vpop.permute.xlu0 %438
    %440 = vrot.lane.b32.xlu0 %v300, 3
    %v441 = vpop.permute.xlu0 %440
    %442 = vrot.lane.b32.xlu0 %v301, 3
    %v443 = vpop.permute.xlu0 %442
    %444 = vrot.lane.b32.xlu0 %v302, 3
    %v445 = vpop.permute.xlu0 %444
    %446 = vrot.lane.b32.xlu0 %v303, 3
    %v447 = vpop.permute.xlu0 %446
    %448 = vrot.lane.b32.xlu0 %v304, 3
    %v449 = vpop.permute.xlu0 %448
    %450 = vrot.lane.b32.xlu0 %v305, 3
    %v451 = vpop.permute.xlu0 %450
    %452 = vrot.lane.b32.xlu0 %v306, 3
    %v453 = vpop.permute.xlu0 %452
    %vm466 = vcmask 154768
    %467 = vst.msk [vmem:[#allocation3] sm:$0xff] %vm466, %v431
    %468 = vst.msk [vmem:[#allocation3 + $0x8] sm:$0xff] %vm466, %v433
    %469 = vst.msk [vmem:[#allocation3 + $0x10] sm:$0xff] %vm466, %v435
    %470 = vst.msk [vmem:[#allocation3 + $0x18] sm:$0xff] %vm466, %v437
    %471 = vst.msk [vmem:[#allocation3 + $0x20] sm:$0xff] %vm466, %v439
    %472 = vst.msk [vmem:[#allocation3 + $0x28] sm:$0xff] %vm466, %v441
    %473 = vst.msk [vmem:[#allocation3 + $0x30] sm:$0xff] %vm466, %v443
    %474 = vst.msk [vmem:[#allocation3 + $0x38] sm:$0xff] %vm466, %v445
    %475 = vst.msk [vmem:[#allocation3 + $0x40] sm:$0xff] %vm466, %v447
    %476 = vst.msk [vmem:[#allocation3 + $0x48] sm:$0xff] %vm466, %v449
    %477 = vst.msk [vmem:[#allocation3 + $0x50] sm:$0xff] %vm466, %v451
    %478 = vst.msk [vmem:[#allocation3 + $0x58] sm:$0xff] %vm466, %v453
    %479 = vrot.lane.b32.xlu0 %v295, 4
    %v480 = vpop.permute.xlu0 %479
    %481 = vrot.lane.b32.xlu0 %v296, 4
    %v482 = vpop.permute.xlu0 %481
    %483 = vrot.lane.b32.xlu0 %v297, 4
    %v484 = vpop.permute.xlu0 %483
    %485 = vrot.lane.b32.xlu0 %v298, 4
    %v486 = vpop.permute.xlu0 %485
    %487 = vrot.lane.b32.xlu0 %v299, 4
    %v488 = vpop.permute.xlu0 %487
    %489 = vrot.lane.b32.xlu0 %v300, 4
    %v490 = vpop.permute.xlu0 %489
    %491 = vrot.lane.b32.xlu0 %v301, 4
    %v492 = vpop.permute.xlu0 %491
    %493 = vrot.lane.b32.xlu0 %v302, 4
    %v494 = vpop.permute.xlu0 %493
    %495 = vrot.lane.b32.xlu0 %v303, 4
    %v496 = vpop.permute.xlu0 %495
    %497 = vrot.lane.b32.xlu0 %v304, 4
    %v498 = vpop.permute.xlu0 %497
    %499 = vrot.lane.b32.xlu0 %v305, 4
    %v500 = vpop.permute.xlu0 %499
    %501 = vrot.lane.b32.xlu0 %v306, 4
    %v502 = vpop.permute.xlu0 %501
    %vm515 = vcmask 162968
    %516 = vst.msk [vmem:[#allocation3] sm:$0xff] %vm515, %v480
    %517 = vst.msk [vmem:[#allocation3 + $0x8] sm:$0xff] %vm515, %v482
    %518 = vst.msk [vmem:[#allocation3 + $0x10] sm:$0xff] %vm515, %v484
    %519 = vst.msk [vmem:[#allocation3 + $0x18] sm:$0xff] %vm515, %v486
    %520 = vst.msk [vmem:[#allocation3 + $0x20] sm:$0xff] %vm515, %v488
    %521 = vst.msk [vmem:[#allocation3 + $0x28] sm:$0xff] %vm515, %v490
    %522 = vst.msk [vmem:[#allocation3 + $0x30] sm:$0xff] %vm515, %v492
    %523 = vst.msk [vmem:[#allocation3 + $0x38] sm:$0xff] %vm515, %v494
    %524 = vst.msk [vmem:[#allocation3 + $0x40] sm:$0xff] %vm515, %v496
    %525 = vst.msk [vmem:[#allocation3 + $0x48] sm:$0xff] %vm515, %v498
    %526 = vst.msk [vmem:[#allocation3 + $0x50] sm:$0xff] %vm515, %v500
    %527 = vst.msk [vmem:[#allocation3 + $0x58] sm:$0xff] %vm515, %v502
    %v528 = vld [vmem:[#allocation3] sm:$0xff]
    %v529 = vld [vmem:[#allocation3 + $0x8] sm:$0xff]
    %v530 = vld [vmem:[#allocation3 + $0x10] sm:$0xff]
    %v531 = vld [vmem:[#allocation3 + $0x18] sm:$0xff]
    %v532 = vld [vmem:[#allocation3 + $0x20] sm:$0xff]
    %v533 = vld [vmem:[#allocation3 + $0x28] sm:$0xff]
    %v534 = vld [vmem:[#allocation3 + $0x30] sm:$0xff]
    %v535 = vld [vmem:[#allocation3 + $0x38] sm:$0xff]
    %v536 = vld [vmem:[#allocation3 + $0x40] sm:$0xff]
    %v537 = vld [vmem:[#allocation3 + $0x48] sm:$0xff]
    %v538 = vld [vmem:[#allocation3 + $0x50] sm:$0xff]
    %v539 = vld [vmem:[#allocation3 + $0x58] sm:$0xff]
    %v540 = vmul.f32 %v528, 0.05
    %v541 = vmul.f32 %v529, 0.05
    %v542 = vmul.f32 %v530, 0.05
    %v543 = vmul.f32 %v531, 0.05
    %v544 = vmul.f32 %v532, 0.05
    %v545 = vmul.f32 %v533, 0.05
    %v546 = vmul.f32 %v534, 0.05
    %v547 = vmul.f32 %v535, 0.05
    %v548 = vmul.f32 %v536, 0.05
    %v549 = vmul.f32 %v537, 0.05
    %v550 = vmul.f32 %v538, 0.05
    %v551 = vmul.f32 %v539, 0.05
    %v552 = vmul.f32 %v528, 0.25
    %v553 = vmul.f32 %v529, 0.25
    %v554 = vmul.f32 %v530, 0.25
    %v555 = vmul.f32 %v531, 0.25
    %v556 = vmul.f32 %v532, 0.25
    %v557 = vmul.f32 %v533, 0.25
    %v558 = vmul.f32 %v534, 0.25
    %v559 = vmul.f32 %v535, 0.25
    %v560 = vmul.f32 %v536, 0.25
    %v561 = vmul.f32 %v537, 0.25
    %v562 = vmul.f32 %v538, 0.25
    %v563 = vmul.f32 %v539, 0.25
    %576 = vrot.lane.b32.xlu0 %v552, 127
    %v577 = vpop.permute.xlu0 %576
    %578 = vrot.lane.b32.xlu0 %v553, 127
    %v579 = vpop.permute.xlu0 %578
    %580 = vrot.lane.b32.xlu0 %v554, 127
    %v581 = vpop.permute.xlu0 %580
    %582 = vrot.lane.b32.xlu0 %v555, 127
    %v583 = vpop.permute.xlu0 %582
    %584 = vrot.lane.b32.xlu0 %v556, 127
    %v585 = vpop.permute.xlu0 %584
    %586 = vrot.lane.b32.xlu0 %v557, 127
    %v587 = vpop.permute.xlu0 %586
    %588 = vrot.lane.b32.xlu0 %v558, 127
    %v589 = vpop.permute.xlu0 %588
    %590 = vrot.lane.b32.xlu0 %v559, 127
    %v591 = vpop.permute.xlu0 %590
    %592 = vrot.lane.b32.xlu0 %v560, 127
    %v593 = vpop.permute.xlu0 %592
    %594 = vrot.lane.b32.xlu0 %v561, 127
    %v595 = vpop.permute.xlu0 %594
    %596 = vrot.lane.b32.xlu0 %v562, 127
    %v597 = vpop.permute.xlu0 %596
    %598 = vrot.lane.b32.xlu0 %v563, 127
    %v599 = vpop.permute.xlu0 %598
    %v612 = vadd.f32 %v540, %v577
    %v613 = vadd.f32 %v541, %v579
    %v614 = vadd.f32 %v542, %v581
    %v615 = vadd.f32 %v543, %v583
    %v616 = vadd.f32 %v544, %v585
    %v617 = vadd.f32 %v545, %v587
    %v618 = vadd.f32 %v546, %v589
    %v619 = vadd.f32 %v547, %v591
    %v620 = vadd.f32 %v548, %v593
    %v621 = vadd.f32 %v549, %v595
    %v622 = vadd.f32 %v550, %v597
    %v623 = vadd.f32 %v551, %v599
    %v624 = vmul.f32 %v528, 0.4
    %v625 = vmul.f32 %v529, 0.4
    %v626 = vmul.f32 %v530, 0.4
    %v627 = vmul.f32 %v531, 0.4
    %v628 = vmul.f32 %v532, 0.4
    %v629 = vmul.f32 %v533, 0.4
    %v630 = vmul.f32 %v534, 0.4
    %v631 = vmul.f32 %v535, 0.4
    %v632 = vmul.f32 %v536, 0.4
    %v633 = vmul.f32 %v537, 0.4
    %v634 = vmul.f32 %v538, 0.4
    %v635 = vmul.f32 %v539, 0.4
    %648 = vrot.lane.b32.xlu0 %v624, 126
    %v649 = vpop.permute.xlu0 %648
    %650 = vrot.lane.b32.xlu0 %v625, 126
    %v651 = vpop.permute.xlu0 %650
    %652 = vrot.lane.b32.xlu0 %v626, 126
    %v653 = vpop.permute.xlu0 %652
    %654 = vrot.lane.b32.xlu0 %v627, 126
    %v655 = vpop.permute.xlu0 %654
    %656 = vrot.lane.b32.xlu0 %v628, 126
    %v657 = vpop.permute.xlu0 %656
    %658 = vrot.lane.b32.xlu0 %v629, 126
    %v659 = vpop.permute.xlu0 %658
    %660 = vrot.lane.b32.xlu0 %v630, 126
    %v661 = vpop.permute.xlu0 %660
    %662 = vrot.lane.b32.xlu0 %v631, 126
    %v663 = vpop.permute.xlu0 %662
    %664 = vrot.lane.b32.xlu0 %v632, 126
    %v665 = vpop.permute.xlu0 %664
    %666 = vrot.lane.b32.xlu0 %v633, 126
    %v667 = vpop.permute.xlu0 %666
    %668 = vrot.lane.b32.xlu0 %v634, 126
    %v669 = vpop.permute.xlu0 %668
    %670 = vrot.lane.b32.xlu0 %v635, 126
    %v671 = vpop.permute.xlu0 %670
    %v684 = vadd.f32 %v612, %v649
    %v685 = vadd.f32 %v613, %v651
    %v686 = vadd.f32 %v614, %v653
    %v687 = vadd.f32 %v615, %v655
    %v688 = vadd.f32 %v616, %v657
    %v689 = vadd.f32 %v617, %v659
    %v690 = vadd.f32 %v618, %v661
    %v691 = vadd.f32 %v619, %v663
    %v692 = vadd.f32 %v620, %v665
    %v693 = vadd.f32 %v621, %v667
    %v694 = vadd.f32 %v622, %v669
    %v695 = vadd.f32 %v623, %v671
    %696 = vrot.lane.b32.xlu0 %v552, 125
    %v697 = vpop.permute.xlu0 %696
    %698 = vrot.lane.b32.xlu0 %v553, 125
    %v699 = vpop.permute.xlu0 %698
    %700 = vrot.lane.b32.xlu0 %v554, 125
    %v701 = vpop.permute.xlu0 %700
    %702 = vrot.lane.b32.xlu0 %v555, 125
    %v703 = vpop.permute.xlu0 %702
    %704 = vrot.lane.b32.xlu0 %v556, 125
    %v705 = vpop.permute.xlu0 %704
    %706 = vrot.lane.b32.xlu0 %v557, 125
    %v707 = vpop.permute.xlu0 %706
    %708 = vrot.lane.b32.xlu0 %v558, 125
    %v709 = vpop.permute.xlu0 %708
    %710 = vrot.lane.b32.xlu0 %v559, 125
    %v711 = vpop.permute.xlu0 %710
    %712 = vrot.lane.b32.xlu0 %v560, 125
    %v713 = vpop.permute.xlu0 %712
    %714 = vrot.lane.b32.xlu0 %v561, 125
    %v715 = vpop.permute.xlu0 %714
    %716 = vrot.lane.b32.xlu0 %v562, 125
    %v717 = vpop.permute.xlu0 %716
    %718 = vrot.lane.b32.xlu0 %v563, 125
    %v719 = vpop.permute.xlu0 %718
    %v732 = vadd.f32 %v684, %v697
    %v733 = vadd.f32 %v685, %v699
    %v734 = vadd.f32 %v686, %v701
    %v735 = vadd.f32 %v687, %v703
    %v736 = vadd.f32 %v688, %v705
    %v737 = vadd.f32 %v689, %v707
    %v738 = vadd.f32 %v690, %v709
    %v739 = vadd.f32 %v691, %v711
    %v740 = vadd.f32 %v692, %v713
    %v741 = vadd.f32 %v693, %v715
    %v742 = vadd.f32 %v694, %v717
    %v743 = vadd.f32 %v695, %v719
    %756 = vrot.lane.b32.xlu0 %v540, 124
    %v757 = vpop.permute.xlu0 %756
    %758 = vrot.lane.b32.xlu0 %v541, 124
    %v759 = vpop.permute.xlu0 %758
    %760 = vrot.lane.b32.xlu0 %v542, 124
    %v761 = vpop.permute.xlu0 %760
    %762 = vrot.lane.b32.xlu0 %v543, 124
    %v763 = vpop.permute.xlu0 %762
    %764 = vrot.lane.b32.xlu0 %v544, 124
    %v765 = vpop.permute.xlu0 %764
    %766 = vrot.lane.b32.xlu0 %v545, 124
    %v767 = vpop.permute.xlu0 %766
    %768 = vrot.lane.b32.xlu0 %v546, 124
    %v769 = vpop.permute.xlu0 %768
    %770 = vrot.lane.b32.xlu0 %v547, 124
    %v771 = vpop.permute.xlu0 %770
    %772 = vrot.lane.b32.xlu0 %v548, 124
    %v773 = vpop.permute.xlu0 %772
    %774 = vrot.lane.b32.xlu0 %v549, 124
    %v775 = vpop.permute.xlu0 %774
    %776 = vrot.lane.b32.xlu0 %v550, 124
    %v777 = vpop.permute.xlu0 %776
    %778 = vrot.lane.b32.xlu0 %v551, 124
    %v779 = vpop.permute.xlu0 %778
    %v792 = vadd.f32 %v732, %v757
    %v793 = vadd.f32 %v733, %v759
    %v794 = vadd.f32 %v734, %v761
    %v795 = vadd.f32 %v735, %v763
    %v796 = vadd.f32 %v736, %v765
    %v797 = vadd.f32 %v737, %v767
    %v798 = vadd.f32 %v738, %v769
    %v799 = vadd.f32 %v739, %v771
    %v800 = vadd.f32 %v740, %v773
    %v801 = vadd.f32 %v741, %v775
    %v802 = vadd.f32 %v742, %v777
    %v803 = vadd.f32 %v743, %v779
    %v804 = vmul.f32 %v792, %v86
    %v805 = vmul.f32 %v793, %v87
    %v806 = vmul.f32 %v794, %v86
    %v807 = vmul.f32 %v795, %v87
    %v808 = vmul.f32 %v796, %v86
    %v809 = vmul.f32 %v797, %v87
    %v810 = vmul.f32 %v798, %v86
    %v811 = vmul.f32 %v799, %v87
    %v812 = vmul.f32 %v800, %v86
    %v813 = vmul.f32 %v801, %v87
    %v814 = vmul.f32 %v802, %v86
    %v815 = vmul.f32 %v803, %v87
    %816 = vst.msk [vmem:[#allocation2 + $0x2] sm:$0xff] %vm100, %v804
    %817 = vst.msk [vmem:[#allocation2 + $0xa] sm:$0xff] %vm100, %v805
    %818 = vst.msk [vmem:[#allocation2 + $0x1a] sm:$0xff] %vm100, %v806
    %819 = vst.msk [vmem:[#allocation2 + $0x22] sm:$0xff] %vm100, %v807
    %820 = vst.msk [vmem:[#allocation2 + $0x32] sm:$0xff] %vm100, %v808
    %821 = vst.msk [vmem:[#allocation2 + $0x3a] sm:$0xff] %vm100, %v809
    %822 = vst.msk [vmem:[#allocation2 + $0x4a] sm:$0xff] %vm100, %v810
    %823 = vst.msk [vmem:[#allocation2 + $0x52] sm:$0xff] %vm100, %v811
    %824 = vst.msk [vmem:[#allocation2 + $0x62] sm:$0xff] %vm100, %v812
    %825 = vst.msk [vmem:[#allocation2 + $0x6a] sm:$0xff] %vm100, %v813
    %826 = vst.msk [vmem:[#allocation2 + $0x7a] sm:$0xff] %vm100, %v814
    %827 = vst.msk [vmem:[#allocation2 + $0x82] sm:$0xff] %vm100, %v815
    %828 = vst.msk [vmem:[#allocation2] sm:$0x1] %vm113, %v804
    %829 = vst.msk [vmem:[#allocation2 + $0x18] sm:$0x1] %vm113, %v806
    %830 = vst.msk [vmem:[#allocation2 + $0x30] sm:$0x1] %vm113, %v808
    %831 = vst.msk [vmem:[#allocation2 + $0x48] sm:$0x1] %vm113, %v810
    %832 = vst.msk [vmem:[#allocation2 + $0x60] sm:$0x1] %vm113, %v812
    %833 = vst.msk [vmem:[#allocation2 + $0x78] sm:$0x1] %vm113, %v814
    %834 = vst.msk [vmem:[#allocation2 + $0x1] sm:$0x1] %vm113, %v804
    %835 = vst.msk [vmem:[#allocation2 + $0x19] sm:$0x1] %vm113, %v806
    %836 = vst.msk [vmem:[#allocation2 + $0x31] sm:$0x1] %vm113, %v808
    %837 = vst.msk [vmem:[#allocation2 + $0x49] sm:$0x1] %vm113, %v810
    %838 = vst.msk [vmem:[#allocation2 + $0x61] sm:$0x1] %vm113, %v812
    %839 = vst.msk [vmem:[#allocation2 + $0x79] sm:$0x1] %vm113, %v814
    %840 = vst.msk [vmem:[#allocation2 + $0xb] sm:$0x80] %vm126, %v805
    %841 = vst.msk [vmem:[#allocation2 + $0x23] sm:$0x80] %vm126, %v807
    %842 = vst.msk [vmem:[#allocation2 + $0x3b] sm:$0x80] %vm126, %v809
    %843 = vst.msk [vmem:[#allocation2 + $0x53] sm:$0x80] %vm126, %v811
    %844 = vst.msk [vmem:[#allocation2 + $0x6b] sm:$0x80] %vm126, %v813
    %845 = vst.msk [vmem:[#allocation2 + $0x83] sm:$0x80] %vm126, %v815
    %846 = vst.msk [vmem:[#allocation2 + $0xc] sm:$0x80] %vm126, %v805
    %847 = vst.msk [vmem:[#allocation2 + $0x24] sm:$0x80] %vm126, %v807
    %848 = vst.msk [vmem:[#allocation2 + $0x3c] sm:$0x80] %vm126, %v809
    %849 = vst.msk [vmem:[#allocation2 + $0x54] sm:$0x80] %vm126, %v811
    %850 = vst.msk [vmem:[#allocation2 + $0x6c] sm:$0x80] %vm126, %v813
    %851 = vst.msk [vmem:[#allocation2 + $0x84] sm:$0x80] %vm126, %v815
    %v852 = vld [vmem:[#allocation2] sm:$0xff]
    %v853 = vld [vmem:[#allocation2 + $0x8] sm:$0xff]
    %v854 = vld [vmem:[#allocation2 + $0x18] sm:$0xff]
    %v855 = vld [vmem:[#allocation2 + $0x20] sm:$0xff]
    %v856 = vld [vmem:[#allocation2 + $0x30] sm:$0xff]
    %v857 = vld [vmem:[#allocation2 + $0x38] sm:$0xff]
    %v858 = vld [vmem:[#allocation2 + $0x48] sm:$0xff]
    %v859 = vld [vmem:[#allocation2 + $0x50] sm:$0xff]
    %v860 = vld [vmem:[#allocation2 + $0x60] sm:$0xff]
    %v861 = vld [vmem:[#allocation2 + $0x68] sm:$0xff]
    %v862 = vld [vmem:[#allocation2 + $0x78] sm:$0xff]
    %v863 = vld [vmem:[#allocation2 + $0x80] sm:$0xff]
    %v864 = vmul.f32 %v852, 0.05
    %v865 = vmul.f32 %v853, 0.05
    %v866 = vmul.f32 %v854, 0.05
    %v867 = vmul.f32 %v855, 0.05
    %v868 = vmul.f32 %v856, 0.05
    %v869 = vmul.f32 %v857, 0.05
    %v870 = vmul.f32 %v858, 0.05
    %v871 = vmul.f32 %v859, 0.05
    %v872 = vmul.f32 %v860, 0.05
    %v873 = vmul.f32 %v861, 0.05
    %v874 = vmul.f32 %v862, 0.05
    %v875 = vmul.f32 %v863, 0.05
    %v876 = vld [vmem:[#allocation2 + $0x1] sm:$0xff]
    %v877 = vld [vmem:[#allocation2 + $0x9] sm:$0xff]
    %v878 = vld [vmem:[#allocation2 + $0x19] sm:$0xff]
    %v879 = vld [vmem:[#allocation2 + $0x21] sm:$0xff]
    %v880 = vld [vmem:[#allocation2 + $0x31] sm:$0xff]
    %v881 = vld [vmem:[#allocation2 + $0x39] sm:$0xff]
    %v882 = vld [vmem:[#allocation2 + $0x49] sm:$0xff]
    %v883 = vld [vmem:[#allocation2 + $0x51] sm:$0xff]
    %v884 = vld [vmem:[#allocation2 + $0x61] sm:$0xff]
    %v885 = vld [vmem:[#allocation2 + $0x69] sm:$0xff]
    %v886 = vld [vmem:[#allocation2 + $0x79] sm:$0xff]
    %v887 = vld [vmem:[#allocation2 + $0x81] sm:$0xff]
    %v888 = vmul.f32 %v876, 0.25
    %v889 = vmul.f32 %v877, 0.25
    %v890 = vmul.f32 %v878, 0.25
    %v891 = vmul.f32 %v879, 0.25
    %v892 = vmul.f32 %v880, 0.25
    %v893 = vmul.f32 %v881, 0.25
    %v894 = vmul.f32 %v882, 0.25
    %v895 = vmul.f32 %v883, 0.25
    %v896 = vmul.f32 %v884, 0.25
    %v897 = vmul.f32 %v885, 0.25
    %v898 = vmul.f32 %v886, 0.25
    %v899 = vmul.f32 %v887, 0.25
    %v900 = vadd.f32 %v864, %v888
    %v901 = vadd.f32 %v865, %v889
    %v902 = vadd.f32 %v866, %v890
    %v903 = vadd.f32 %v867, %v891
    %v904 = vadd.f32 %v868, %v892
    %v905 = vadd.f32 %v869, %v893
    %v906 = vadd.f32 %v870, %v894
    %v907 = vadd.f32 %v871, %v895
    %v908 = vadd.f32 %v872, %v896
    %v909 = vadd.f32 %v873, %v897
    %v910 = vadd.f32 %v874, %v898
    %v911 = vadd.f32 %v875, %v899
    %v912 = vld [vmem:[#allocation2 + $0x2] sm:$0xff]
    %v913 = vld [vmem:[#allocation2 + $0xa] sm:$0xff]
    %v914 = vld [vmem:[#allocation2 + $0x1a] sm:$0xff]
    %v915 = vld [vmem:[#allocation2 + $0x22] sm:$0xff]
    %v916 = vld [vmem:[#allocation2 + $0x32] sm:$0xff]
    %v917 = vld [vmem:[#allocation2 + $0x3a] sm:$0xff]
    %v918 = vld [vmem:[#allocation2 + $0x4a] sm:$0xff]
    %v919 = vld [vmem:[#allocation2 + $0x52] sm:$0xff]
    %v920 = vld [vmem:[#allocation2 + $0x62] sm:$0xff]
    %v921 = vld [vmem:[#allocation2 + $0x6a] sm:$0xff]
    %v922 = vld [vmem:[#allocation2 + $0x7a] sm:$0xff]
    %v923 = vld [vmem:[#allocation2 + $0x82] sm:$0xff]
    %v924 = vmul.f32 %v912, 0.4
    %v925 = vmul.f32 %v913, 0.4
    %v926 = vmul.f32 %v914, 0.4
    %v927 = vmul.f32 %v915, 0.4
    %v928 = vmul.f32 %v916, 0.4
    %v929 = vmul.f32 %v917, 0.4
    %v930 = vmul.f32 %v918, 0.4
    %v931 = vmul.f32 %v919, 0.4
    %v932 = vmul.f32 %v920, 0.4
    %v933 = vmul.f32 %v921, 0.4
    %v934 = vmul.f32 %v922, 0.4
    %v935 = vmul.f32 %v923, 0.4
    %v936 = vadd.f32 %v900, %v924
    %v937 = vadd.f32 %v901, %v925
    %v938 = vadd.f32 %v902, %v926
    %v939 = vadd.f32 %v903, %v927
    %v940 = vadd.f32 %v904, %v928
    %v941 = vadd.f32 %v905, %v929
    %v942 = vadd.f32 %v906, %v930
    %v943 = vadd.f32 %v907, %v931
    %v944 = vadd.f32 %v908, %v932
    %v945 = vadd.f32 %v909, %v933
    %v946 = vadd.f32 %v910, %v934
    %v947 = vadd.f32 %v911, %v935
    %v948 = vld [vmem:[#allocation2 + $0x3] sm:$0xff]
    %v949 = vld [vmem:[#allocation2 + $0xb] sm:$0xff]
    %v950 = vld [vmem:[#allocation2 + $0x1b] sm:$0xff]
    %v951 = vld [vmem:[#allocation2 + $0x23] sm:$0xff]
    %v952 = vld [vmem:[#allocation2 + $0x33] sm:$0xff]
    %v953 = vld [vmem:[#allocation2 + $0x3b] sm:$0xff]
    %v954 = vld [vmem:[#allocation2 + $0x4b] sm:$0xff]
    %v955 = vld [vmem:[#allocation2 + $0x53] sm:$0xff]
    %v956 = vld [vmem:[#allocation2 + $0x63] sm:$0xff]
    %v957 = vld [vmem:[#allocation2 + $0x6b] sm:$0xff]
    %v958 = vld [vmem:[#allocation2 + $0x7b] sm:$0xff]
    %v959 = vld [vmem:[#allocation2 + $0x83] sm:$0xff]
    %v960 = vmul.f32 %v948, 0.25
    %v961 = vmul.f32 %v949, 0.25
    %v962 = vmul.f32 %v950, 0.25
    %v963 = vmul.f32 %v951, 0.25
    %v964 = vmul.f32 %v952, 0.25
    %v965 = vmul.f32 %v953, 0.25
    %v966 = vmul.f32 %v954, 0.25
    %v967 = vmul.f32 %v955, 0.25
    %v968 = vmul.f32 %v956, 0.25
    %v969 = vmul.f32 %v957, 0.25
    %v970 = vmul.f32 %v958, 0.25
    %v971 = vmul.f32 %v959, 0.25
    %v972 = vadd.f32 %v936, %v960
    %v973 = vadd.f32 %v937, %v961
    %v974 = vadd.f32 %v938, %v962
    %v975 = vadd.f32 %v939, %v963
    %v976 = vadd.f32 %v940, %v964
    %v977 = vadd.f32 %v941, %v965
    %v978 = vadd.f32 %v942, %v966
    %v979 = vadd.f32 %v943, %v967
    %v980 = vadd.f32 %v944, %v968
    %v981 = vadd.f32 %v945, %v969
    %v982 = vadd.f32 %v946, %v970
    %v983 = vadd.f32 %v947, %v971
    %v984 = vld [vmem:[#allocation2 + $0x4] sm:$0xff]
    %v985 = vld [vmem:[#allocation2 + $0xc] sm:$0xff]
    %v986 = vld [vmem:[#allocation2 + $0x1c] sm:$0xff]
    %v987 = vld [vmem:[#allocation2 + $0x24] sm:$0xff]
    %v988 = vld [vmem:[#allocation2 + $0x34] sm:$0xff]
    %v989 = vld [vmem:[#allocation2 + $0x3c] sm:$0xff]
    %v990 = vld [vmem:[#allocation2 + $0x4c] sm:$0xff]
    %v991 = vld [vmem:[#allocation2 + $0x54] sm:$0xff]
    %v992 = vld [vmem:[#allocation2 + $0x64] sm:$0xff]
    %v993 = vld [vmem:[#allocation2 + $0x6c] sm:$0xff]
    %v994 = vld [vmem:[#allocation2 + $0x7c] sm:$0xff]
    %v995 = vld [vmem:[#allocation2 + $0x84] sm:$0xff]
    %v996 = vmul.f32 %v984, 0.05
    %v997 = vmul.f32 %v985, 0.05
    %v998 = vmul.f32 %v986, 0.05
    %v999 = vmul.f32 %v987, 0.05
    %v1000 = vmul.f32 %v988, 0.05
    %v1001 = vmul.f32 %v989, 0.05
    %v1002 = vmul.f32 %v990, 0.05
    %v1003 = vmul.f32 %v991, 0.05
    %v1004 = vmul.f32 %v992, 0.05
    %v1005 = vmul.f32 %v993, 0.05
    %v1006 = vmul.f32 %v994, 0.05
    %v1007 = vmul.f32 %v995, 0.05
    %v1008 = vadd.f32 %v972, %v996
    %v1009 = vadd.f32 %v973, %v997
    %v1010 = vadd.f32 %v974, %v998
    %v1011 = vadd.f32 %v975, %v999
    %v1012 = vadd.f32 %v976, %v1000
    %v1013 = vadd.f32 %v977, %v1001
    %v1014 = vadd.f32 %v978, %v1002
    %v1015 = vadd.f32 %v979, %v1003
    %v1016 = vadd.f32 %v980, %v1004
    %v1017 = vadd.f32 %v981, %v1005
    %v1018 = vadd.f32 %v982, %v1006
    %v1019 = vadd.f32 %v983, %v1007
    %1032 = vrot.lane.b32.xlu0 %v1008, 2
    %v1033 = vpop.permute.xlu0 %1032
    %1034 = vrot.lane.b32.xlu0 %v1009, 2
    %v1035 = vpop.permute.xlu0 %1034
    %1036 = vrot.lane.b32.xlu0 %v1010, 2
    %v1037 = vpop.permute.xlu0 %1036
    %1038 = vrot.lane.b32.xlu0 %v1011, 2
    %v1039 = vpop.permute.xlu0 %1038
    %1040 = vrot.lane.b32.xlu0 %v1012, 2
    %v1041 = vpop.permute.xlu0 %1040
    %1042 = vrot.lane.b32.xlu0 %v1013, 2
    %v1043 = vpop.permute.xlu0 %1042
    %1044 = vrot.lane.b32.xlu0 %v1014, 2
    %v1045 = vpop.permute.xlu0 %1044
    %1046 = vrot.lane.b32.xlu0 %v1015, 2
    %v1047 = vpop.permute.xlu0 %1046
    %1048 = vrot.lane.b32.xlu0 %v1016, 2
    %v1049 = vpop.permute.xlu0 %1048
    %1050 = vrot.lane.b32.xlu0 %v1017, 2
    %v1051 = vpop.permute.xlu0 %1050
    %1052 = vrot.lane.b32.xlu0 %v1018, 2
    %v1053 = vpop.permute.xlu0 %1052
    %1054 = vrot.lane.b32.xlu0 %v1019, 2
    %v1055 = vpop.permute.xlu0 %1054
    %1068 = vst.msk [vmem:[#allocation3] sm:$0xff] %vm355, %v1033
    %1069 = vst.msk [vmem:[#allocation3 + $0x8] sm:$0xff] %vm355, %v1035
    %1070 = vst.msk [vmem:[#allocation3 + $0x10] sm:$0xff] %vm355, %v1037
    %1071 = vst.msk [vmem:[#allocation3 + $0x18] sm:$0xff] %vm355, %v1039
    %1072 = vst.msk [vmem:[#allocation3 + $0x20] sm:$0xff] %vm355, %v1041
    %1073 = vst.msk [vmem:[#allocation3 + $0x28] sm:$0xff] %vm355, %v1043
    %1074 = vst.msk [vmem:[#allocation3 + $0x30] sm:$0xff] %vm355, %v1045
    %1075 = vst.msk [vmem:[#allocation3 + $0x38] sm:$0xff] %vm355, %v1047
    %1076 = vst.msk [vmem:[#allocation3 + $0x40] sm:$0xff] %vm355, %v1049
    %1077 = vst.msk [vmem:[#allocation3 + $0x48] sm:$0xff] %vm355, %v1051
    %1078 = vst.msk [vmem:[#allocation3 + $0x50] sm:$0xff] %vm355, %v1053
    %1079 = vst.msk [vmem:[#allocation3 + $0x58] sm:$0xff] %vm355, %v1055
    %1080 = vst.msk [vmem:[#allocation3] sm:$0xff] %vm368, %v1008
    %1081 = vst.msk [vmem:[#allocation3 + $0x8] sm:$0xff] %vm368, %v1009
    %1082 = vst.msk [vmem:[#allocation3 + $0x10] sm:$0xff] %vm368, %v1010
    %1083 = vst.msk [vmem:[#allocation3 + $0x18] sm:$0xff] %vm368, %v1011
    %1084 = vst.msk [vmem:[#allocation3 + $0x20] sm:$0xff] %vm368, %v1012
    %1085 = vst.msk [vmem:[#allocation3 + $0x28] sm:$0xff] %vm368, %v1013
    %1086 = vst.msk [vmem:[#allocation3 + $0x30] sm:$0xff] %vm368, %v1014
    %1087 = vst.msk [vmem:[#allocation3 + $0x38] sm:$0xff] %vm368, %v1015
    %1088 = vst.msk [vmem:[#allocation3 + $0x40] sm:$0xff] %vm368, %v1016
    %1089 = vst.msk [vmem:[#allocation3 + $0x48] sm:$0xff] %vm368, %v1017
    %1090 = vst.msk [vmem:[#allocation3 + $0x50] sm:$0xff] %vm368, %v1018
    %1091 = vst.msk [vmem:[#allocation3 + $0x58] sm:$0xff] %vm368, %v1019
    %1092 = vrot.lane.b32.xlu0 %v1008, 1
    %v1093 = vpop.permute.xlu0 %1092
    %1094 = vrot.lane.b32.xlu0 %v1009, 1
    %v1095 = vpop.permute.xlu0 %1094
    %1096 = vrot.lane.b32.xlu0 %v1010, 1
    %v1097 = vpop.permute.xlu0 %1096
    %1098 = vrot.lane.b32.xlu0 %v1011, 1
    %v1099 = vpop.permute.xlu0 %1098
    %1100 = vrot.lane.b32.xlu0 %v1012, 1
    %v1101 = vpop.permute.xlu0 %1100
    %1102 = vrot.lane.b32.xlu0 %v1013, 1
    %v1103 = vpop.permute.xlu0 %1102
    %1104 = vrot.lane.b32.xlu0 %v1014, 1
    %v1105 = vpop.permute.xlu0 %1104
    %1106 = vrot.lane.b32.xlu0 %v1015, 1
    %v1107 = vpop.permute.xlu0 %1106
    %1108 = vrot.lane.b32.xlu0 %v1016, 1
    %v1109 = vpop.permute.xlu0 %1108
    %1110 = vrot.lane.b32.xlu0 %v1017, 1
    %v1111 = vpop.permute.xlu0 %1110
    %1112 = vrot.lane.b32.xlu0 %v1018, 1
    %v1113 = vpop.permute.xlu0 %1112
    %1114 = vrot.lane.b32.xlu0 %v1019, 1
    %v1115 = vpop.permute.xlu0 %1114
    %1128 = vst.msk [vmem:[#allocation3] sm:$0xff] %vm417, %v1093
    %1129 = vst.msk [vmem:[#allocation3 + $0x8] sm:$0xff] %vm417, %v1095
    %1130 = vst.msk [vmem:[#allocation3 + $0x10] sm:$0xff] %vm417, %v1097
    %1131 = vst.msk [vmem:[#allocation3 + $0x18] sm:$0xff] %vm417, %v1099
    %1132 = vst.msk [vmem:[#allocation3 + $0x20] sm:$0xff] %vm417, %v1101
    %1133 = vst.msk [vmem:[#allocation3 + $0x28] sm:$0xff] %vm417, %v1103
    %1134 = vst.msk [vmem:[#allocation3 + $0x30] sm:$0xff] %vm417, %v1105
    %1135 = vst.msk [vmem:[#allocation3 + $0x38] sm:$0xff] %vm417, %v1107
    %1136 = vst.msk [vmem:[#allocation3 + $0x40] sm:$0xff] %vm417, %v1109
    %1137 = vst.msk [vmem:[#allocation3 + $0x48] sm:$0xff] %vm417, %v1111
    %1138 = vst.msk [vmem:[#allocation3 + $0x50] sm:$0xff] %vm417, %v1113
    %1139 = vst.msk [vmem:[#allocation3 + $0x58] sm:$0xff] %vm417, %v1115
    %1140 = vrot.lane.b32.xlu0 %v1008, 3
    %v1141 = vpop.permute.xlu0 %1140
    %1142 = vrot.lane.b32.xlu0 %v1009, 3
    %v1143 = vpop.permute.xlu0 %1142
    %1144 = vrot.lane.b32.xlu0 %v1010, 3
    %v1145 = vpop.permute.xlu0 %1144
    %1146 = vrot.lane.b32.xlu0 %v1011, 3
    %v1147 = vpop.permute.xlu0 %1146
    %1148 = vrot.lane.b32.xlu0 %v1012, 3
    %v1149 = vpop.permute.xlu0 %1148
    %1150 = vrot.lane.b32.xlu0 %v1013, 3
    %v1151 = vpop.permute.xlu0 %1150
    %1152 = vrot.lane.b32.xlu0 %v1014, 3
    %v1153 = vpop.permute.xlu0 %1152
    %1154 = vrot.lane.b32.xlu0 %v1015, 3
    %v1155 = vpop.permute.xlu0 %1154
    %1156 = vrot.lane.b32.xlu0 %v1016, 3
    %v1157 = vpop.permute.xlu0 %1156
    %1158 = vrot.lane.b32.xlu0 %v1017, 3
    %v1159 = vpop.permute.xlu0 %1158
    %1160 = vrot.lane.b32.xlu0 %v1018, 3
    %v1161 = vpop.permute.xlu0 %1160
    %1162 = vrot.lane.b32.xlu0 %v1019, 3
    %v1163 = vpop.permute.xlu0 %1162
    %1176 = vst.msk [vmem:[#allocation3] sm:$0xff] %vm466, %v1141
    %1177 = vst.msk [vmem:[#allocation3 + $0x8] sm:$0xff] %vm466, %v1143
    %1178 = vst.msk [vmem:[#allocation3 + $0x10] sm:$0xff] %vm466, %v1145
    %1179 = vst.msk [vmem:[#allocation3 + $0x18] sm:$0xff] %vm466, %v1147
    %1180 = vst.msk [vmem:[#allocation3 + $0x20] sm:$0xff] %vm466, %v1149
    %1181 = vst.msk [vmem:[#allocation3 + $0x28] sm:$0xff] %vm466, %v1151
    %1182 = vst.msk [vmem:[#allocation3 + $0x30] sm:$0xff] %vm466, %v1153
    %1183 = vst.msk [vmem:[#allocation3 + $0x38] sm:$0xff] %vm466, %v1155
    %1184 = vst.msk [vmem:[#allocation3 + $0x40] sm:$0xff] %vm466, %v1157
    %1185 = vst.msk [vmem:[#allocation3 + $0x48] sm:$0xff] %vm466, %v1159
    %1186 = vst.msk [vmem:[#allocation3 + $0x50] sm:$0xff] %vm466, %v1161
    %1187 = vst.msk [vmem:[#allocation3 + $0x58] sm:$0xff] %vm466, %v1163
    %1188 = vrot.lane.b32.xlu0 %v1008, 4
    %v1189 = vpop.permute.xlu0 %1188
    %1190 = vrot.lane.b32.xlu0 %v1009, 4
    %v1191 = vpop.permute.xlu0 %1190
    %1192 = vrot.lane.b32.xlu0 %v1010, 4
    %v1193 = vpop.permute.xlu0 %1192
    %1194 = vrot.lane.b32.xlu0 %v1011, 4
    %v1195 = vpop.permute.xlu0 %1194
    %1196 = vrot.lane.b32.xlu0 %v1012, 4
    %v1197 = vpop.permute.xlu0 %1196
    %1198 = vrot.lane.b32.xlu0 %v1013, 4
    %v1199 = vpop.permute.xlu0 %1198
    %1200 = vrot.lane.b32.xlu0 %v1014, 4
    %v1201 = vpop.permute.xlu0 %1200
    %1202 = vrot.lane.b32.xlu0 %v1015, 4
    %v1203 = vpop.permute.xlu0 %1202
    %1204 = vrot.lane.b32.xlu0 %v1016, 4
    %v1205 = vpop.permute.xlu0 %1204
    %1206 = vrot.lane.b32.xlu0 %v1017, 4
    %v1207 = vpop.permute.xlu0 %1206
    %1208 = vrot.lane.b32.xlu0 %v1018, 4
    %v1209 = vpop.permute.xlu0 %1208
    %1210 = vrot.lane.b32.xlu0 %v1019, 4
    %v1211 = vpop.permute.xlu0 %1210
    %1224 = vst.msk [vmem:[#allocation3] sm:$0xff] %vm515, %v1189
    %1225 = vst.msk [vmem:[#allocation3 + $0x8] sm:$0xff] %vm515, %v1191
    %1226 = vst.msk [vmem:[#allocation3 + $0x10] sm:$0xff] %vm515, %v1193
    %1227 = vst.msk [vmem:[#allocation3 + $0x18] sm:$0xff] %vm515, %v1195
    %1228 = vst.msk [vmem:[#allocation3 + $0x20] sm:$0xff] %vm515, %v1197
    %1229 = vst.msk [vmem:[#allocation3 + $0x28] sm:$0xff] %vm515, %v1199
    %1230 = vst.msk [vmem:[#allocation3 + $0x30] sm:$0xff] %vm515, %v1201
    %1231 = vst.msk [vmem:[#allocation3 + $0x38] sm:$0xff] %vm515, %v1203
    %1232 = vst.msk [vmem:[#allocation3 + $0x40] sm:$0xff] %vm515, %v1205
    %1233 = vst.msk [vmem:[#allocation3 + $0x48] sm:$0xff] %vm515, %v1207
    %1234 = vst.msk [vmem:[#allocation3 + $0x50] sm:$0xff] %vm515, %v1209
    %1235 = vst.msk [vmem:[#allocation3 + $0x58] sm:$0xff] %vm515, %v1211
    %v1236 = vld [vmem:[#allocation3] sm:$0xff]
    %v1237 = vld [vmem:[#allocation3 + $0x8] sm:$0xff]
    %v1238 = vld [vmem:[#allocation3 + $0x10] sm:$0xff]
    %v1239 = vld [vmem:[#allocation3 + $0x18] sm:$0xff]
    %v1240 = vld [vmem:[#allocation3 + $0x20] sm:$0xff]
    %v1241 = vld [vmem:[#allocation3 + $0x28] sm:$0xff]
    %v1242 = vld [vmem:[#allocation3 + $0x30] sm:$0xff]
    %v1243 = vld [vmem:[#allocation3 + $0x38] sm:$0xff]
    %v1244 = vld [vmem:[#allocation3 + $0x40] sm:$0xff]
    %v1245 = vld [vmem:[#allocation3 + $0x48] sm:$0xff]
    %v1246 = vld [vmem:[#allocation3 + $0x50] sm:$0xff]
    %v1247 = vld [vmem:[#allocation3 + $0x58] sm:$0xff]
    %v1248 = vmul.f32 %v1236, 0.05
    %v1249 = vmul.f32 %v1237, 0.05
    %v1250 = vmul.f32 %v1238, 0.05
    %v1251 = vmul.f32 %v1239, 0.05
    %v1252 = vmul.f32 %v1240, 0.05
    %v1253 = vmul.f32 %v1241, 0.05
    %v1254 = vmul.f32 %v1242, 0.05
    %v1255 = vmul.f32 %v1243, 0.05
    %v1256 = vmul.f32 %v1244, 0.05
    %v1257 = vmul.f32 %v1245, 0.05
    %v1258 = vmul.f32 %v1246, 0.05
    %v1259 = vmul.f32 %v1247, 0.05
    %v1260 = vmul.f32 %v1236, 0.25
    %v1261 = vmul.f32 %v1237, 0.25
    %v1262 = vmul.f32 %v1238, 0.25
    %v1263 = vmul.f32 %v1239, 0.25
    %v1264 = vmul.f32 %v1240, 0.25
    %v1265 = vmul.f32 %v1241, 0.25
    %v1266 = vmul.f32 %v1242, 0.25
    %v1267 = vmul.f32 %v1243, 0.25
    %v1268 = vmul.f32 %v1244, 0.25
    %v1269 = vmul.f32 %v1245, 0.25
    %v1270 = vmul.f32 %v1246, 0.25
    %v1271 = vmul.f32 %v1247, 0.25
    %1284 = vrot.lane.b32.xlu0 %v1260, 127
    %v1285 = vpop.permute.xlu0 %1284
    %1286 = vrot.lane.b32.xlu0 %v1261, 127
    %v1287 = vpop.permute.xlu0 %1286
    %1288 = vrot.lane.b32.xlu0 %v1262, 127
    %v1289 = vpop.permute.xlu0 %1288
    %1290 = vrot.lane.b32.xlu0 %v1263, 127
    %v1291 = vpop.permute.xlu0 %1290
    %1292 = vrot.lane.b32.xlu0 %v1264, 127
    %v1293 = vpop.permute.xlu0 %1292
    %1294 = vrot.lane.b32.xlu0 %v1265, 127
    %v1295 = vpop.permute.xlu0 %1294
    %1296 = vrot.lane.b32.xlu0 %v1266, 127
    %v1297 = vpop.permute.xlu0 %1296
    %1298 = vrot.lane.b32.xlu0 %v1267, 127
    %v1299 = vpop.permute.xlu0 %1298
    %1300 = vrot.lane.b32.xlu0 %v1268, 127
    %v1301 = vpop.permute.xlu0 %1300
    %1302 = vrot.lane.b32.xlu0 %v1269, 127
    %v1303 = vpop.permute.xlu0 %1302
    %1304 = vrot.lane.b32.xlu0 %v1270, 127
    %v1305 = vpop.permute.xlu0 %1304
    %1306 = vrot.lane.b32.xlu0 %v1271, 127
    %v1307 = vpop.permute.xlu0 %1306
    %v1320 = vadd.f32 %v1248, %v1285
    %v1321 = vadd.f32 %v1249, %v1287
    %v1322 = vadd.f32 %v1250, %v1289
    %v1323 = vadd.f32 %v1251, %v1291
    %v1324 = vadd.f32 %v1252, %v1293
    %v1325 = vadd.f32 %v1253, %v1295
    %v1326 = vadd.f32 %v1254, %v1297
    %v1327 = vadd.f32 %v1255, %v1299
    %v1328 = vadd.f32 %v1256, %v1301
    %v1329 = vadd.f32 %v1257, %v1303
    %v1330 = vadd.f32 %v1258, %v1305
    %v1331 = vadd.f32 %v1259, %v1307
    %v1332 = vmul.f32 %v1236, 0.4
    %v1333 = vmul.f32 %v1237, 0.4
    %v1334 = vmul.f32 %v1238, 0.4
    %v1335 = vmul.f32 %v1239, 0.4
    %v1336 = vmul.f32 %v1240, 0.4
    %v1337 = vmul.f32 %v1241, 0.4
    %v1338 = vmul.f32 %v1242, 0.4
    %v1339 = vmul.f32 %v1243, 0.4
    %v1340 = vmul.f32 %v1244, 0.4
    %v1341 = vmul.f32 %v1245, 0.4
    %v1342 = vmul.f32 %v1246, 0.4
    %v1343 = vmul.f32 %v1247, 0.4
    %1356 = vrot.lane.b32.xlu0 %v1332, 126
    %v1357 = vpop.permute.xlu0 %1356
    %1358 = vrot.lane.b32.xlu0 %v1333, 126
    %v1359 = vpop.permute.xlu0 %1358
    %1360 = vrot.lane.b32.xlu0 %v1334, 126
    %v1361 = vpop.permute.xlu0 %1360
    %1362 = vrot.lane.b32.xlu0 %v1335, 126
    %v1363 = vpop.permute.xlu0 %1362
    %1364 = vrot.lane.b32.xlu0 %v1336, 126
    %v1365 = vpop.permute.xlu0 %1364
    %1366 = vrot.lane.b32.xlu0 %v1337, 126
    %v1367 = vpop.permute.xlu0 %1366
    %1368 = vrot.lane.b32.xlu0 %v1338, 126
    %v1369 = vpop.permute.xlu0 %1368
    %1370 = vrot.lane.b32.xlu0 %v1339, 126
    %v1371 = vpop.permute.xlu0 %1370
    %1372 = vrot.lane.b32.xlu0 %v1340, 126
    %v1373 = vpop.permute.xlu0 %1372
    %1374 = vrot.lane.b32.xlu0 %v1341, 126
    %v1375 = vpop.permute.xlu0 %1374
    %1376 = vrot.lane.b32.xlu0 %v1342, 126
    %v1377 = vpop.permute.xlu0 %1376
    %1378 = vrot.lane.b32.xlu0 %v1343, 126
    %v1379 = vpop.permute.xlu0 %1378
    %v1392 = vadd.f32 %v1320, %v1357
    %v1393 = vadd.f32 %v1321, %v1359
    %v1394 = vadd.f32 %v1322, %v1361
    %v1395 = vadd.f32 %v1323, %v1363
    %v1396 = vadd.f32 %v1324, %v1365
    %v1397 = vadd.f32 %v1325, %v1367
    %v1398 = vadd.f32 %v1326, %v1369
    %v1399 = vadd.f32 %v1327, %v1371
    %v1400 = vadd.f32 %v1328, %v1373
    %v1401 = vadd.f32 %v1329, %v1375
    %v1402 = vadd.f32 %v1330, %v1377
    %v1403 = vadd.f32 %v1331, %v1379
    %1404 = vrot.lane.b32.xlu0 %v1260, 125
    %v1405 = vpop.permute.xlu0 %1404
    %1406 = vrot.lane.b32.xlu0 %v1261, 125
    %v1407 = vpop.permute.xlu0 %1406
    %1408 = vrot.lane.b32.xlu0 %v1262, 125
    %v1409 = vpop.permute.xlu0 %1408
    %1410 = vrot.lane.b32.xlu0 %v1263, 125
    %v1411 = vpop.permute.xlu0 %1410
    %1412 = vrot.lane.b32.xlu0 %v1264, 125
    %v1413 = vpop.permute.xlu0 %1412
    %1414 = vrot.lane.b32.xlu0 %v1265, 125
    %v1415 = vpop.permute.xlu0 %1414
    %1416 = vrot.lane.b32.xlu0 %v1266, 125
    %v1417 = vpop.permute.xlu0 %1416
    %1418 = vrot.lane.b32.xlu0 %v1267, 125
    %v1419 = vpop.permute.xlu0 %1418
    %1420 = vrot.lane.b32.xlu0 %v1268, 125
    %v1421 = vpop.permute.xlu0 %1420
    %1422 = vrot.lane.b32.xlu0 %v1269, 125
    %v1423 = vpop.permute.xlu0 %1422
    %1424 = vrot.lane.b32.xlu0 %v1270, 125
    %v1425 = vpop.permute.xlu0 %1424
    %1426 = vrot.lane.b32.xlu0 %v1271, 125
    %v1427 = vpop.permute.xlu0 %1426
    %v1440 = vadd.f32 %v1392, %v1405
    %v1441 = vadd.f32 %v1393, %v1407
    %v1442 = vadd.f32 %v1394, %v1409
    %v1443 = vadd.f32 %v1395, %v1411
    %v1444 = vadd.f32 %v1396, %v1413
    %v1445 = vadd.f32 %v1397, %v1415
    %v1446 = vadd.f32 %v1398, %v1417
    %v1447 = vadd.f32 %v1399, %v1419
    %v1448 = vadd.f32 %v1400, %v1421
    %v1449 = vadd.f32 %v1401, %v1423
    %v1450 = vadd.f32 %v1402, %v1425
    %v1451 = vadd.f32 %v1403, %v1427
    %1464 = vrot.lane.b32.xlu0 %v1248, 124
    %v1465 = vpop.permute.xlu0 %1464
    %1466 = vrot.lane.b32.xlu0 %v1249, 124
    %v1467 = vpop.permute.xlu0 %1466
    %1468 = vrot.lane.b32.xlu0 %v1250, 124
    %v1469 = vpop.permute.xlu0 %1468
    %1470 = vrot.lane.b32.xlu0 %v1251, 124
    %v1471 = vpop.permute.xlu0 %1470
    %1472 = vrot.lane.b32.xlu0 %v1252, 124
    %v1473 = vpop.permute.xlu0 %1472
    %1474 = vrot.lane.b32.xlu0 %v1253, 124
    %v1475 = vpop.permute.xlu0 %1474
    %1476 = vrot.lane.b32.xlu0 %v1254, 124
    %v1477 = vpop.permute.xlu0 %1476
    %1478 = vrot.lane.b32.xlu0 %v1255, 124
    %v1479 = vpop.permute.xlu0 %1478
    %1480 = vrot.lane.b32.xlu0 %v1256, 124
    %v1481 = vpop.permute.xlu0 %1480
    %1482 = vrot.lane.b32.xlu0 %v1257, 124
    %v1483 = vpop.permute.xlu0 %1482
    %1484 = vrot.lane.b32.xlu0 %v1258, 124
    %v1485 = vpop.permute.xlu0 %1484
    %1486 = vrot.lane.b32.xlu0 %v1259, 124
    %v1487 = vpop.permute.xlu0 %1486
    %v1500 = vadd.f32 %v1440, %v1465
    %v1501 = vadd.f32 %v1441, %v1467
    %v1502 = vadd.f32 %v1442, %v1469
    %v1503 = vadd.f32 %v1443, %v1471
    %v1504 = vadd.f32 %v1444, %v1473
    %v1505 = vadd.f32 %v1445, %v1475
    %v1506 = vadd.f32 %v1446, %v1477
    %v1507 = vadd.f32 %v1447, %v1479
    %v1508 = vadd.f32 %v1448, %v1481
    %v1509 = vadd.f32 %v1449, %v1483
    %v1510 = vadd.f32 %v1450, %v1485
    %v1511 = vadd.f32 %v1451, %v1487
    %v1512 = vsub.f32 %v88, %v1500
    %v1513 = vsub.f32 %v89, %v1501
    %v1514 = vsub.f32 %v90, %v1502
    %v1515 = vsub.f32 %v91, %v1503
    %v1516 = vsub.f32 %v92, %v1504
    %v1517 = vsub.f32 %v93, %v1505
    %v1518 = vsub.f32 %v94, %v1506
    %v1519 = vsub.f32 %v95, %v1507
    %v1520 = vsub.f32 %v96, %v1508
    %v1521 = vsub.f32 %v97, %v1509
    %v1522 = vsub.f32 %v98, %v1510
    %v1523 = vsub.f32 %v99, %v1511
    %v1524 = vld [vmem:[#allocation7] sm:$0xff]
    %v1525 = vld [vmem:[#allocation7 + $0x8] sm:$0xff]
    %v1526 = vld [vmem:[#allocation7 + $0x10] sm:$0xff]
    %v1527 = vld [vmem:[#allocation7 + $0x18] sm:$0xff]
    %v1528 = vld [vmem:[#allocation7 + $0x20] sm:$0xff]
    %v1529 = vld [vmem:[#allocation7 + $0x28] sm:$0xff]
    %v1530 = vld [vmem:[#allocation7 + $0x30] sm:$0xff]
    %v1531 = vld [vmem:[#allocation7 + $0x38] sm:$0xff]
    %v1532 = vld [vmem:[#allocation7 + $0x40] sm:$0xff]
    %v1533 = vld [vmem:[#allocation7 + $0x48] sm:$0xff]
    %v1534 = vld [vmem:[#allocation7 + $0x50] sm:$0xff]
    %v1535 = vld [vmem:[#allocation7 + $0x58] sm:$0xff]
    %1536 = vst.msk [vmem:[#allocation2 + $0x2] sm:$0xff] %vm100, %v1524
    %1537 = vst.msk [vmem:[#allocation2 + $0xa] sm:$0xff] %vm100, %v1525
    %1538 = vst.msk [vmem:[#allocation2 + $0x1a] sm:$0xff] %vm100, %v1526
    %1539 = vst.msk [vmem:[#allocation2 + $0x22] sm:$0xff] %vm100, %v1527
    %1540 = vst.msk [vmem:[#allocation2 + $0x32] sm:$0xff] %vm100, %v1528
    %1541 = vst.msk [vmem:[#allocation2 + $0x3a] sm:$0xff] %vm100, %v1529
    %1542 = vst.msk [vmem:[#allocation2 + $0x4a] sm:$0xff] %vm100, %v1530
    %1543 = vst.msk [vmem:[#allocation2 + $0x52] sm:$0xff] %vm100, %v1531
    %1544 = vst.msk [vmem:[#allocation2 + $0x62] sm:$0xff] %vm100, %v1532
    %1545 = vst.msk [vmem:[#allocation2 + $0x6a] sm:$0xff] %vm100, %v1533
    %1546 = vst.msk [vmem:[#allocation2 + $0x7a] sm:$0xff] %vm100, %v1534
    %1547 = vst.msk [vmem:[#allocation2 + $0x82] sm:$0xff] %vm100, %v1535
    %1548 = vst.msk [vmem:[#allocation2] sm:$0x1] %vm113, %v1524
    %1549 = vst.msk [vmem:[#allocation2 + $0x18] sm:$0x1] %vm113, %v1526
    %1550 = vst.msk [vmem:[#allocation2 + $0x30] sm:$0x1] %vm113, %v1528
    %1551 = vst.msk [vmem:[#allocation2 + $0x48] sm:$0x1] %vm113, %v1530
    %1552 = vst.msk [vmem:[#allocation2 + $0x60] sm:$0x1] %vm113, %v1532
    %1553 = vst.msk [vmem:[#allocation2 + $0x78] sm:$0x1] %vm113, %v1534
    %1554 = vst.msk [vmem:[#allocation2 + $0x1] sm:$0x1] %vm113, %v1524
    %1555 = vst.msk [vmem:[#allocation2 + $0x19] sm:$0x1] %vm113, %v1526
    %1556 = vst.msk [vmem:[#allocation2 + $0x31] sm:$0x1] %vm113, %v1528
    %1557 = vst.msk [vmem:[#allocation2 + $0x49] sm:$0x1] %vm113, %v1530
    %1558 = vst.msk [vmem:[#allocation2 + $0x61] sm:$0x1] %vm113, %v1532
    %1559 = vst.msk [vmem:[#allocation2 + $0x79] sm:$0x1] %vm113, %v1534
    %1560 = vst.msk [vmem:[#allocation2 + $0xb] sm:$0x80] %vm126, %v1525
    %1561 = vst.msk [vmem:[#allocation2 + $0x23] sm:$0x80] %vm126, %v1527
    %1562 = vst.msk [vmem:[#allocation2 + $0x3b] sm:$0x80] %vm126, %v1529
    %1563 = vst.msk [vmem:[#allocation2 + $0x53] sm:$0x80] %vm126, %v1531
    %1564 = vst.msk [vmem:[#allocation2 + $0x6b] sm:$0x80] %vm126, %v1533
    %1565 = vst.msk [vmem:[#allocation2 + $0x83] sm:$0x80] %vm126, %v1535
    %1566 = vst.msk [vmem:[#allocation2 + $0xc] sm:$0x80] %vm126, %v1525
    %1567 = vst.msk [vmem:[#allocation2 + $0x24] sm:$0x80] %vm126, %v1527
    %1568 = vst.msk [vmem:[#allocation2 + $0x3c] sm:$0x80] %vm126, %v1529
    %1569 = vst.msk [vmem:[#allocation2 + $0x54] sm:$0x80] %vm126, %v1531
    %1570 = vst.msk [vmem:[#allocation2 + $0x6c] sm:$0x80] %vm126, %v1533
    %1571 = vst.msk [vmem:[#allocation2 + $0x84] sm:$0x80] %vm126, %v1535
    %v1572 = vld [vmem:[#allocation2] sm:$0xff]
    %v1573 = vld [vmem:[#allocation2 + $0x8] sm:$0xff]
    %v1574 = vld [vmem:[#allocation2 + $0x18] sm:$0xff]
    %v1575 = vld [vmem:[#allocation2 + $0x20] sm:$0xff]
    %v1576 = vld [vmem:[#allocation2 + $0x30] sm:$0xff]
    %v1577 = vld [vmem:[#allocation2 + $0x38] sm:$0xff]
    %v1578 = vld [vmem:[#allocation2 + $0x48] sm:$0xff]
    %v1579 = vld [vmem:[#allocation2 + $0x50] sm:$0xff]
    %v1580 = vld [vmem:[#allocation2 + $0x60] sm:$0xff]
    %v1581 = vld [vmem:[#allocation2 + $0x68] sm:$0xff]
    %v1582 = vld [vmem:[#allocation2 + $0x78] sm:$0xff]
    %v1583 = vld [vmem:[#allocation2 + $0x80] sm:$0xff]
    %v1584 = vmul.f32 %v1572, 0.05
    %v1585 = vmul.f32 %v1573, 0.05
    %v1586 = vmul.f32 %v1574, 0.05
    %v1587 = vmul.f32 %v1575, 0.05
    %v1588 = vmul.f32 %v1576, 0.05
    %v1589 = vmul.f32 %v1577, 0.05
    %v1590 = vmul.f32 %v1578, 0.05
    %v1591 = vmul.f32 %v1579, 0.05
    %v1592 = vmul.f32 %v1580, 0.05
    %v1593 = vmul.f32 %v1581, 0.05
    %v1594 = vmul.f32 %v1582, 0.05
    %v1595 = vmul.f32 %v1583, 0.05
    %v1596 = vld [vmem:[#allocation2 + $0x1] sm:$0xff]
    %v1597 = vld [vmem:[#allocation2 + $0x9] sm:$0xff]
    %v1598 = vld [vmem:[#allocation2 + $0x19] sm:$0xff]
    %v1599 = vld [vmem:[#allocation2 + $0x21] sm:$0xff]
    %v1600 = vld [vmem:[#allocation2 + $0x31] sm:$0xff]
    %v1601 = vld [vmem:[#allocation2 + $0x39] sm:$0xff]
    %v1602 = vld [vmem:[#allocation2 + $0x49] sm:$0xff]
    %v1603 = vld [vmem:[#allocation2 + $0x51] sm:$0xff]
    %v1604 = vld [vmem:[#allocation2 + $0x61] sm:$0xff]
    %v1605 = vld [vmem:[#allocation2 + $0x69] sm:$0xff]
    %v1606 = vld [vmem:[#allocation2 + $0x79] sm:$0xff]
    %v1607 = vld [vmem:[#allocation2 + $0x81] sm:$0xff]
    %v1608 = vmul.f32 %v1596, 0.25
    %v1609 = vmul.f32 %v1597, 0.25
    %v1610 = vmul.f32 %v1598, 0.25
    %v1611 = vmul.f32 %v1599, 0.25
    %v1612 = vmul.f32 %v1600, 0.25
    %v1613 = vmul.f32 %v1601, 0.25
    %v1614 = vmul.f32 %v1602, 0.25
    %v1615 = vmul.f32 %v1603, 0.25
    %v1616 = vmul.f32 %v1604, 0.25
    %v1617 = vmul.f32 %v1605, 0.25
    %v1618 = vmul.f32 %v1606, 0.25
    %v1619 = vmul.f32 %v1607, 0.25
    %v1620 = vadd.f32 %v1584, %v1608
    %v1621 = vadd.f32 %v1585, %v1609
    %v1622 = vadd.f32 %v1586, %v1610
    %v1623 = vadd.f32 %v1587, %v1611
    %v1624 = vadd.f32 %v1588, %v1612
    %v1625 = vadd.f32 %v1589, %v1613
    %v1626 = vadd.f32 %v1590, %v1614
    %v1627 = vadd.f32 %v1591, %v1615
    %v1628 = vadd.f32 %v1592, %v1616
    %v1629 = vadd.f32 %v1593, %v1617
    %v1630 = vadd.f32 %v1594, %v1618
    %v1631 = vadd.f32 %v1595, %v1619
    %v1632 = vld [vmem:[#allocation2 + $0x2] sm:$0xff]
    %v1633 = vld [vmem:[#allocation2 + $0xa] sm:$0xff]
    %v1634 = vld [vmem:[#allocation2 + $0x1a] sm:$0xff]
    %v1635 = vld [vmem:[#allocation2 + $0x22] sm:$0xff]
    %v1636 = vld [vmem:[#allocation2 + $0x32] sm:$0xff]
    %v1637 = vld [vmem:[#allocation2 + $0x3a] sm:$0xff]
    %v1638 = vld [vmem:[#allocation2 + $0x4a] sm:$0xff]
    %v1639 = vld [vmem:[#allocation2 + $0x52] sm:$0xff]
    %v1640 = vld [vmem:[#allocation2 + $0x62] sm:$0xff]
    %v1641 = vld [vmem:[#allocation2 + $0x6a] sm:$0xff]
    %v1642 = vld [vmem:[#allocation2 + $0x7a] sm:$0xff]
    %v1643 = vld [vmem:[#allocation2 + $0x82] sm:$0xff]
    %v1644 = vmul.f32 %v1632, 0.4
    %v1645 = vmul.f32 %v1633, 0.4
    %v1646 = vmul.f32 %v1634, 0.4
    %v1647 = vmul.f32 %v1635, 0.4
    %v1648 = vmul.f32 %v1636, 0.4
    %v1649 = vmul.f32 %v1637, 0.4
    %v1650 = vmul.f32 %v1638, 0.4
    %v1651 = vmul.f32 %v1639, 0.4
    %v1652 = vmul.f32 %v1640, 0.4
    %v1653 = vmul.f32 %v1641, 0.4
    %v1654 = vmul.f32 %v1642, 0.4
    %v1655 = vmul.f32 %v1643, 0.4
    %v1656 = vadd.f32 %v1620, %v1644
    %v1657 = vadd.f32 %v1621, %v1645
    %v1658 = vadd.f32 %v1622, %v1646
    %v1659 = vadd.f32 %v1623, %v1647
    %v1660 = vadd.f32 %v1624, %v1648
    %v1661 = vadd.f32 %v1625, %v1649
    %v1662 = vadd.f32 %v1626, %v1650
    %v1663 = vadd.f32 %v1627, %v1651
    %v1664 = vadd.f32 %v1628, %v1652
    %v1665 = vadd.f32 %v1629, %v1653
    %v1666 = vadd.f32 %v1630, %v1654
    %v1667 = vadd.f32 %v1631, %v1655
    %v1668 = vld [vmem:[#allocation2 + $0x3] sm:$0xff]
    %v1669 = vld [vmem:[#allocation2 + $0xb] sm:$0xff]
    %v1670 = vld [vmem:[#allocation2 + $0x1b] sm:$0xff]
    %v1671 = vld [vmem:[#allocation2 + $0x23] sm:$0xff]
    %v1672 = vld [vmem:[#allocation2 + $0x33] sm:$0xff]
    %v1673 = vld [vmem:[#allocation2 + $0x3b] sm:$0xff]
    %v1674 = vld [vmem:[#allocation2 + $0x4b] sm:$0xff]
    %v1675 = vld [vmem:[#allocation2 + $0x53] sm:$0xff]
    %v1676 = vld [vmem:[#allocation2 + $0x63] sm:$0xff]
    %v1677 = vld [vmem:[#allocation2 + $0x6b] sm:$0xff]
    %v1678 = vld [vmem:[#allocation2 + $0x7b] sm:$0xff]
    %v1679 = vld [vmem:[#allocation2 + $0x83] sm:$0xff]
    %v1680 = vmul.f32 %v1668, 0.25
    %v1681 = vmul.f32 %v1669, 0.25
    %v1682 = vmul.f32 %v1670, 0.25
    %v1683 = vmul.f32 %v1671, 0.25
    %v1684 = vmul.f32 %v1672, 0.25
    %v1685 = vmul.f32 %v1673, 0.25
    %v1686 = vmul.f32 %v1674, 0.25
    %v1687 = vmul.f32 %v1675, 0.25
    %v1688 = vmul.f32 %v1676, 0.25
    %v1689 = vmul.f32 %v1677, 0.25
    %v1690 = vmul.f32 %v1678, 0.25
    %v1691 = vmul.f32 %v1679, 0.25
    %v1692 = vadd.f32 %v1656, %v1680
    %v1693 = vadd.f32 %v1657, %v1681
    %v1694 = vadd.f32 %v1658, %v1682
    %v1695 = vadd.f32 %v1659, %v1683
    %v1696 = vadd.f32 %v1660, %v1684
    %v1697 = vadd.f32 %v1661, %v1685
    %v1698 = vadd.f32 %v1662, %v1686
    %v1699 = vadd.f32 %v1663, %v1687
    %v1700 = vadd.f32 %v1664, %v1688
    %v1701 = vadd.f32 %v1665, %v1689
    %v1702 = vadd.f32 %v1666, %v1690
    %v1703 = vadd.f32 %v1667, %v1691
    %v1704 = vld [vmem:[#allocation2 + $0x4] sm:$0xff]
    %v1705 = vld [vmem:[#allocation2 + $0xc] sm:$0xff]
    %v1706 = vld [vmem:[#allocation2 + $0x1c] sm:$0xff]
    %v1707 = vld [vmem:[#allocation2 + $0x24] sm:$0xff]
    %v1708 = vld [vmem:[#allocation2 + $0x34] sm:$0xff]
    %v1709 = vld [vmem:[#allocation2 + $0x3c] sm:$0xff]
    %v1710 = vld [vmem:[#allocation2 + $0x4c] sm:$0xff]
    %v1711 = vld [vmem:[#allocation2 + $0x54] sm:$0xff]
    %v1712 = vld [vmem:[#allocation2 + $0x64] sm:$0xff]
    %v1713 = vld [vmem:[#allocation2 + $0x6c] sm:$0xff]
    %v1714 = vld [vmem:[#allocation2 + $0x7c] sm:$0xff]
    %v1715 = vld [vmem:[#allocation2 + $0x84] sm:$0xff]
    %v1716 = vmul.f32 %v1704, 0.05
    %v1717 = vmul.f32 %v1705, 0.05
    %v1718 = vmul.f32 %v1706, 0.05
    %v1719 = vmul.f32 %v1707, 0.05
    %v1720 = vmul.f32 %v1708, 0.05
    %v1721 = vmul.f32 %v1709, 0.05
    %v1722 = vmul.f32 %v1710, 0.05
    %v1723 = vmul.f32 %v1711, 0.05
    %v1724 = vmul.f32 %v1712, 0.05
    %v1725 = vmul.f32 %v1713, 0.05
    %v1726 = vmul.f32 %v1714, 0.05
    %v1727 = vmul.f32 %v1715, 0.05
    %v1728 = vadd.f32 %v1692, %v1716
    %v1729 = vadd.f32 %v1693, %v1717
    %v1730 = vadd.f32 %v1694, %v1718
    %v1731 = vadd.f32 %v1695, %v1719
    %v1732 = vadd.f32 %v1696, %v1720
    %v1733 = vadd.f32 %v1697, %v1721
    %v1734 = vadd.f32 %v1698, %v1722
    %v1735 = vadd.f32 %v1699, %v1723
    %v1736 = vadd.f32 %v1700, %v1724
    %v1737 = vadd.f32 %v1701, %v1725
    %v1738 = vadd.f32 %v1702, %v1726
    %v1739 = vadd.f32 %v1703, %v1727
    %1752 = vrot.lane.b32.xlu0 %v1728, 2
    %v1753 = vpop.permute.xlu0 %1752
    %1754 = vrot.lane.b32.xlu0 %v1729, 2
    %v1755 = vpop.permute.xlu0 %1754
    %1756 = vrot.lane.b32.xlu0 %v1730, 2
    %v1757 = vpop.permute.xlu0 %1756
    %1758 = vrot.lane.b32.xlu0 %v1731, 2
    %v1759 = vpop.permute.xlu0 %1758
    %1760 = vrot.lane.b32.xlu0 %v1732, 2
    %v1761 = vpop.permute.xlu0 %1760
    %1762 = vrot.lane.b32.xlu0 %v1733, 2
    %v1763 = vpop.permute.xlu0 %1762
    %1764 = vrot.lane.b32.xlu0 %v1734, 2
    %v1765 = vpop.permute.xlu0 %1764
    %1766 = vrot.lane.b32.xlu0 %v1735, 2
    %v1767 = vpop.permute.xlu0 %1766
    %1768 = vrot.lane.b32.xlu0 %v1736, 2
    %v1769 = vpop.permute.xlu0 %1768
    %1770 = vrot.lane.b32.xlu0 %v1737, 2
    %v1771 = vpop.permute.xlu0 %1770
    %1772 = vrot.lane.b32.xlu0 %v1738, 2
    %v1773 = vpop.permute.xlu0 %1772
    %1774 = vrot.lane.b32.xlu0 %v1739, 2
    %v1775 = vpop.permute.xlu0 %1774
    %1788 = vst.msk [vmem:[#allocation3] sm:$0xff] %vm355, %v1753
    %1789 = vst.msk [vmem:[#allocation3 + $0x8] sm:$0xff] %vm355, %v1755
    %1790 = vst.msk [vmem:[#allocation3 + $0x10] sm:$0xff] %vm355, %v1757
    %1791 = vst.msk [vmem:[#allocation3 + $0x18] sm:$0xff] %vm355, %v1759
    %1792 = vst.msk [vmem:[#allocation3 + $0x20] sm:$0xff] %vm355, %v1761
    %1793 = vst.msk [vmem:[#allocation3 + $0x28] sm:$0xff] %vm355, %v1763
    %1794 = vst.msk [vmem:[#allocation3 + $0x30] sm:$0xff] %vm355, %v1765
    %1795 = vst.msk [vmem:[#allocation3 + $0x38] sm:$0xff] %vm355, %v1767
    %1796 = vst.msk [vmem:[#allocation3 + $0x40] sm:$0xff] %vm355, %v1769
    %1797 = vst.msk [vmem:[#allocation3 + $0x48] sm:$0xff] %vm355, %v1771
    %1798 = vst.msk [vmem:[#allocation3 + $0x50] sm:$0xff] %vm355, %v1773
    %1799 = vst.msk [vmem:[#allocation3 + $0x58] sm:$0xff] %vm355, %v1775
    %1800 = vst.msk [vmem:[#allocation3] sm:$0xff] %vm368, %v1728
    %1801 = vst.msk [vmem:[#allocation3 + $0x8] sm:$0xff] %vm368, %v1729
    %1802 = vst.msk [vmem:[#allocation3 + $0x10] sm:$0xff] %vm368, %v1730
    %1803 = vst.msk [vmem:[#allocation3 + $0x18] sm:$0xff] %vm368, %v1731
    %1804 = vst.msk [vmem:[#allocation3 + $0x20] sm:$0xff] %vm368, %v1732
    %1805 = vst.msk [vmem:[#allocation3 + $0x28] sm:$0xff] %vm368, %v1733
    %1806 = vst.msk [vmem:[#allocation3 + $0x30] sm:$0xff] %vm368, %v1734
    %1807 = vst.msk [vmem:[#allocation3 + $0x38] sm:$0xff] %vm368, %v1735
    %1808 = vst.msk [vmem:[#allocation3 + $0x40] sm:$0xff] %vm368, %v1736
    %1809 = vst.msk [vmem:[#allocation3 + $0x48] sm:$0xff] %vm368, %v1737
    %1810 = vst.msk [vmem:[#allocation3 + $0x50] sm:$0xff] %vm368, %v1738
    %1811 = vst.msk [vmem:[#allocation3 + $0x58] sm:$0xff] %vm368, %v1739
    %1812 = vrot.lane.b32.xlu0 %v1728, 1
    %v1813 = vpop.permute.xlu0 %1812
    %1814 = vrot.lane.b32.xlu0 %v1729, 1
    %v1815 = vpop.permute.xlu0 %1814
    %1816 = vrot.lane.b32.xlu0 %v1730, 1
    %v1817 = vpop.permute.xlu0 %1816
    %1818 = vrot.lane.b32.xlu0 %v1731, 1
    %v1819 = vpop.permute.xlu0 %1818
    %1820 = vrot.lane.b32.xlu0 %v1732, 1
    %v1821 = vpop.permute.xlu0 %1820
    %1822 = vrot.lane.b32.xlu0 %v1733, 1
    %v1823 = vpop.permute.xlu0 %1822
    %1824 = vrot.lane.b32.xlu0 %v1734, 1
    %v1825 = vpop.permute.xlu0 %1824
    %1826 = vrot.lane.b32.xlu0 %v1735, 1
    %v1827 = vpop.permute.xlu0 %1826
    %1828 = vrot.lane.b32.xlu0 %v1736, 1
    %v1829 = vpop.permute.xlu0 %1828
    %1830 = vrot.lane.b32.xlu0 %v1737, 1
    %v1831 = vpop.permute.xlu0 %1830
    %1832 = vrot.lane.b32.xlu0 %v1738, 1
    %v1833 = vpop.permute.xlu0 %1832
    %1834 = vrot.lane.b32.xlu0 %v1739, 1
    %v1835 = vpop.permute.xlu0 %1834
    %1848 = vst.msk [vmem:[#allocation3] sm:$0xff] %vm417, %v1813
    %1849 = vst.msk [vmem:[#allocation3 + $0x8] sm:$0xff] %vm417, %v1815
    %1850 = vst.msk [vmem:[#allocation3 + $0x10] sm:$0xff] %vm417, %v1817
    %1851 = vst.msk [vmem:[#allocation3 + $0x18] sm:$0xff] %vm417, %v1819
    %1852 = vst.msk [vmem:[#allocation3 + $0x20] sm:$0xff] %vm417, %v1821
    %1853 = vst.msk [vmem:[#allocation3 + $0x28] sm:$0xff] %vm417, %v1823
    %1854 = vst.msk [vmem:[#allocation3 + $0x30] sm:$0xff] %vm417, %v1825
    %1855 = vst.msk [vmem:[#allocation3 + $0x38] sm:$0xff] %vm417, %v1827
    %1856 = vst.msk [vmem:[#allocation3 + $0x40] sm:$0xff] %vm417, %v1829
    %1857 = vst.msk [vmem:[#allocation3 + $0x48] sm:$0xff] %vm417, %v1831
    %1858 = vst.msk [vmem:[#allocation3 + $0x50] sm:$0xff] %vm417, %v1833
    %1859 = vst.msk [vmem:[#allocation3 + $0x58] sm:$0xff] %vm417, %v1835
    %1860 = vrot.lane.b32.xlu0 %v1728, 3
    %v1861 = vpop.permute.xlu0 %1860
    %1862 = vrot.lane.b32.xlu0 %v1729, 3
    %v1863 = vpop.permute.xlu0 %1862
    %1864 = vrot.lane.b32.xlu0 %v1730, 3
    %v1865 = vpop.permute.xlu0 %1864
    %1866 = vrot.lane.b32.xlu0 %v1731, 3
    %v1867 = vpop.permute.xlu0 %1866
    %1868 = vrot.lane.b32.xlu0 %v1732, 3
    %v1869 = vpop.permute.xlu0 %1868
    %1870 = vrot.lane.b32.xlu0 %v1733, 3
    %v1871 = vpop.permute.xlu0 %1870
    %1872 = vrot.lane.b32.xlu0 %v1734, 3
    %v1873 = vpop.permute.xlu0 %1872
    %1874 = vrot.lane.b32.xlu0 %v1735, 3
    %v1875 = vpop.permute.xlu0 %1874
    %1876 = vrot.lane.b32.xlu0 %v1736, 3
    %v1877 = vpop.permute.xlu0 %1876
    %1878 = vrot.lane.b32.xlu0 %v1737, 3
    %v1879 = vpop.permute.xlu0 %1878
    %1880 = vrot.lane.b32.xlu0 %v1738, 3
    %v1881 = vpop.permute.xlu0 %1880
    %1882 = vrot.lane.b32.xlu0 %v1739, 3
    %v1883 = vpop.permute.xlu0 %1882
    %1896 = vst.msk [vmem:[#allocation3] sm:$0xff] %vm466, %v1861
    %1897 = vst.msk [vmem:[#allocation3 + $0x8] sm:$0xff] %vm466, %v1863
    %1898 = vst.msk [vmem:[#allocation3 + $0x10] sm:$0xff] %vm466, %v1865
    %1899 = vst.msk [vmem:[#allocation3 + $0x18] sm:$0xff] %vm466, %v1867
    %1900 = vst.msk [vmem:[#allocation3 + $0x20] sm:$0xff] %vm466, %v1869
    %1901 = vst.msk [vmem:[#allocation3 + $0x28] sm:$0xff] %vm466, %v1871
    %1902 = vst.msk [vmem:[#allocation3 + $0x30] sm:$0xff] %vm466, %v1873
    %1903 = vst.msk [vmem:[#allocation3 + $0x38] sm:$0xff] %vm466, %v1875
    %1904 = vst.msk [vmem:[#allocation3 + $0x40] sm:$0xff] %vm466, %v1877
    %1905 = vst.msk [vmem:[#allocation3 + $0x48] sm:$0xff] %vm466, %v1879
    %1906 = vst.msk [vmem:[#allocation3 + $0x50] sm:$0xff] %vm466, %v1881
    %1907 = vst.msk [vmem:[#allocation3 + $0x58] sm:$0xff] %vm466, %v1883
    %1908 = vrot.lane.b32.xlu0 %v1728, 4
    %v1909 = vpop.permute.xlu0 %1908
    %1910 = vrot.lane.b32.xlu0 %v1729, 4
    %v1911 = vpop.permute.xlu0 %1910
    %1912 = vrot.lane.b32.xlu0 %v1730, 4
    %v1913 = vpop.permute.xlu0 %1912
    %1914 = vrot.lane.b32.xlu0 %v1731, 4
    %v1915 = vpop.permute.xlu0 %1914
    %1916 = vrot.lane.b32.xlu0 %v1732, 4
    %v1917 = vpop.permute.xlu0 %1916
    %1918 = vrot.lane.b32.xlu0 %v1733, 4
    %v1919 = vpop.permute.xlu0 %1918
    %1920 = vrot.lane.b32.xlu0 %v1734, 4
    %v1921 = vpop.permute.xlu0 %1920
    %1922 = vrot.lane.b32.xlu0 %v1735, 4
    %v1923 = vpop.permute.xlu0 %1922
    %1924 = vrot.lane.b32.xlu0 %v1736, 4
    %v1925 = vpop.permute.xlu0 %1924
    %1926 = vrot.lane.b32.xlu0 %v1737, 4
    %v1927 = vpop.permute.xlu0 %1926
    %1928 = vrot.lane.b32.xlu0 %v1738, 4
    %v1929 = vpop.permute.xlu0 %1928
    %1930 = vrot.lane.b32.xlu0 %v1739, 4
    %v1931 = vpop.permute.xlu0 %1930
    %1944 = vst.msk [vmem:[#allocation3] sm:$0xff] %vm515, %v1909
    %1945 = vst.msk [vmem:[#allocation3 + $0x8] sm:$0xff] %vm515, %v1911
    %1946 = vst.msk [vmem:[#allocation3 + $0x10] sm:$0xff] %vm515, %v1913
    %1947 = vst.msk [vmem:[#allocation3 + $0x18] sm:$0xff] %vm515, %v1915
    %1948 = vst.msk [vmem:[#allocation3 + $0x20] sm:$0xff] %vm515, %v1917
    %1949 = vst.msk [vmem:[#allocation3 + $0x28] sm:$0xff] %vm515, %v1919
    %1950 = vst.msk [vmem:[#allocation3 + $0x30] sm:$0xff] %vm515, %v1921
    %1951 = vst.msk [vmem:[#allocation3 + $0x38] sm:$0xff] %vm515, %v1923
    %1952 = vst.msk [vmem:[#allocation3 + $0x40] sm:$0xff] %vm515, %v1925
    %1953 = vst.msk [vmem:[#allocation3 + $0x48] sm:$0xff] %vm515, %v1927
    %1954 = vst.msk [vmem:[#allocation3 + $0x50] sm:$0xff] %vm515, %v1929
    %1955 = vst.msk [vmem:[#allocation3 + $0x58] sm:$0xff] %vm515, %v1931
    %v1956 = vld [vmem:[#allocation3] sm:$0xff]
    %v1957 = vld [vmem:[#allocation3 + $0x8] sm:$0xff]
    %v1958 = vld [vmem:[#allocation3 + $0x10] sm:$0xff]
    %v1959 = vld [vmem:[#allocation3 + $0x18] sm:$0xff]
    %v1960 = vld [vmem:[#allocation3 + $0x20] sm:$0xff]
    %v1961 = vld [vmem:[#allocation3 + $0x28] sm:$0xff]
    %v1962 = vld [vmem:[#allocation3 + $0x30] sm:$0xff]
    %v1963 = vld [vmem:[#allocation3 + $0x38] sm:$0xff]
    %v1964 = vld [vmem:[#allocation3 + $0x40] sm:$0xff]
    %v1965 = vld [vmem:[#allocation3 + $0x48] sm:$0xff]
    %v1966 = vld [vmem:[#allocation3 + $0x50] sm:$0xff]
    %v1967 = vld [vmem:[#allocation3 + $0x58] sm:$0xff]
    %v1968 = vmul.f32 %v1956, 0.05
    %v1969 = vmul.f32 %v1957, 0.05
    %v1970 = vmul.f32 %v1958, 0.05
    %v1971 = vmul.f32 %v1959, 0.05
    %v1972 = vmul.f32 %v1960, 0.05
    %v1973 = vmul.f32 %v1961, 0.05
    %v1974 = vmul.f32 %v1962, 0.05
    %v1975 = vmul.f32 %v1963, 0.05
    %v1976 = vmul.f32 %v1964, 0.05
    %v1977 = vmul.f32 %v1965, 0.05
    %v1978 = vmul.f32 %v1966, 0.05
    %v1979 = vmul.f32 %v1967, 0.05
    %v1980 = vmul.f32 %v1956, 0.25
    %v1981 = vmul.f32 %v1957, 0.25
    %v1982 = vmul.f32 %v1958, 0.25
    %v1983 = vmul.f32 %v1959, 0.25
    %v1984 = vmul.f32 %v1960, 0.25
    %v1985 = vmul.f32 %v1961, 0.25
    %v1986 = vmul.f32 %v1962, 0.25
    %v1987 = vmul.f32 %v1963, 0.25
    %v1988 = vmul.f32 %v1964, 0.25
    %v1989 = vmul.f32 %v1965, 0.25
    %v1990 = vmul.f32 %v1966, 0.25
    %v1991 = vmul.f32 %v1967, 0.25
    %2004 = vrot.lane.b32.xlu0 %v1980, 127
    %v2005 = vpop.permute.xlu0 %2004
    %2006 = vrot.lane.b32.xlu0 %v1981, 127
    %v2007 = vpop.permute.xlu0 %2006
    %2008 = vrot.lane.b32.xlu0 %v1982, 127
    %v2009 = vpop.permute.xlu0 %2008
    %2010 = vrot.lane.b32.xlu0 %v1983, 127
    %v2011 = vpop.permute.xlu0 %2010
    %2012 = vrot.lane.b32.xlu0 %v1984, 127
    %v2013 = vpop.permute.xlu0 %2012
    %2014 = vrot.lane.b32.xlu0 %v1985, 127
    %v2015 = vpop.permute.xlu0 %2014
    %2016 = vrot.lane.b32.xlu0 %v1986, 127
    %v2017 = vpop.permute.xlu0 %2016
    %2018 = vrot.lane.b32.xlu0 %v1987, 127
    %v2019 = vpop.permute.xlu0 %2018
    %2020 = vrot.lane.b32.xlu0 %v1988, 127
    %v2021 = vpop.permute.xlu0 %2020
    %2022 = vrot.lane.b32.xlu0 %v1989, 127
    %v2023 = vpop.permute.xlu0 %2022
    %2024 = vrot.lane.b32.xlu0 %v1990, 127
    %v2025 = vpop.permute.xlu0 %2024
    %2026 = vrot.lane.b32.xlu0 %v1991, 127
    %v2027 = vpop.permute.xlu0 %2026
    %v2040 = vadd.f32 %v1968, %v2005
    %v2041 = vadd.f32 %v1969, %v2007
    %v2042 = vadd.f32 %v1970, %v2009
    %v2043 = vadd.f32 %v1971, %v2011
    %v2044 = vadd.f32 %v1972, %v2013
    %v2045 = vadd.f32 %v1973, %v2015
    %v2046 = vadd.f32 %v1974, %v2017
    %v2047 = vadd.f32 %v1975, %v2019
    %v2048 = vadd.f32 %v1976, %v2021
    %v2049 = vadd.f32 %v1977, %v2023
    %v2050 = vadd.f32 %v1978, %v2025
    %v2051 = vadd.f32 %v1979, %v2027
    %v2052 = vmul.f32 %v1956, 0.4
    %v2053 = vmul.f32 %v1957, 0.4
    %v2054 = vmul.f32 %v1958, 0.4
    %v2055 = vmul.f32 %v1959, 0.4
    %v2056 = vmul.f32 %v1960, 0.4
    %v2057 = vmul.f32 %v1961, 0.4
    %v2058 = vmul.f32 %v1962, 0.4
    %v2059 = vmul.f32 %v1963, 0.4
    %v2060 = vmul.f32 %v1964, 0.4
    %v2061 = vmul.f32 %v1965, 0.4
    %v2062 = vmul.f32 %v1966, 0.4
    %v2063 = vmul.f32 %v1967, 0.4
    %2076 = vrot.lane.b32.xlu0 %v2052, 126
    %v2077 = vpop.permute.xlu0 %2076
    %2078 = vrot.lane.b32.xlu0 %v2053, 126
    %v2079 = vpop.permute.xlu0 %2078
    %2080 = vrot.lane.b32.xlu0 %v2054, 126
    %v2081 = vpop.permute.xlu0 %2080
    %2082 = vrot.lane.b32.xlu0 %v2055, 126
    %v2083 = vpop.permute.xlu0 %2082
    %2084 = vrot.lane.b32.xlu0 %v2056, 126
    %v2085 = vpop.permute.xlu0 %2084
    %2086 = vrot.lane.b32.xlu0 %v2057, 126
    %v2087 = vpop.permute.xlu0 %2086
    %2088 = vrot.lane.b32.xlu0 %v2058, 126
    %v2089 = vpop.permute.xlu0 %2088
    %2090 = vrot.lane.b32.xlu0 %v2059, 126
    %v2091 = vpop.permute.xlu0 %2090
    %2092 = vrot.lane.b32.xlu0 %v2060, 126
    %v2093 = vpop.permute.xlu0 %2092
    %2094 = vrot.lane.b32.xlu0 %v2061, 126
    %v2095 = vpop.permute.xlu0 %2094
    %2096 = vrot.lane.b32.xlu0 %v2062, 126
    %v2097 = vpop.permute.xlu0 %2096
    %2098 = vrot.lane.b32.xlu0 %v2063, 126
    %v2099 = vpop.permute.xlu0 %2098
    %v2112 = vadd.f32 %v2040, %v2077
    %v2113 = vadd.f32 %v2041, %v2079
    %v2114 = vadd.f32 %v2042, %v2081
    %v2115 = vadd.f32 %v2043, %v2083
    %v2116 = vadd.f32 %v2044, %v2085
    %v2117 = vadd.f32 %v2045, %v2087
    %v2118 = vadd.f32 %v2046, %v2089
    %v2119 = vadd.f32 %v2047, %v2091
    %v2120 = vadd.f32 %v2048, %v2093
    %v2121 = vadd.f32 %v2049, %v2095
    %v2122 = vadd.f32 %v2050, %v2097
    %v2123 = vadd.f32 %v2051, %v2099
    %2124 = vrot.lane.b32.xlu0 %v1980, 125
    %v2125 = vpop.permute.xlu0 %2124
    %2126 = vrot.lane.b32.xlu0 %v1981, 125
    %v2127 = vpop.permute.xlu0 %2126
    %2128 = vrot.lane.b32.xlu0 %v1982, 125
    %v2129 = vpop.permute.xlu0 %2128
    %2130 = vrot.lane.b32.xlu0 %v1983, 125
    %v2131 = vpop.permute.xlu0 %2130
    %2132 = vrot.lane.b32.xlu0 %v1984, 125
    %v2133 = vpop.permute.xlu0 %2132
    %2134 = vrot.lane.b32.xlu0 %v1985, 125
    %v2135 = vpop.permute.xlu0 %2134
    %2136 = vrot.lane.b32.xlu0 %v1986, 125
    %v2137 = vpop.permute.xlu0 %2136
    %2138 = vrot.lane.b32.xlu0 %v1987, 125
    %v2139 = vpop.permute.xlu0 %2138
    %2140 = vrot.lane.b32.xlu0 %v1988, 125
    %v2141 = vpop.permute.xlu0 %2140
    %2142 = vrot.lane.b32.xlu0 %v1989, 125
    %v2143 = vpop.permute.xlu0 %2142
    %2144 = vrot.lane.b32.xlu0 %v1990, 125
    %v2145 = vpop.permute.xlu0 %2144
    %2146 = vrot.lane.b32.xlu0 %v1991, 125
    %v2147 = vpop.permute.xlu0 %2146
    %v2160 = vadd.f32 %v2112, %v2125
    %v2161 = vadd.f32 %v2113, %v2127
    %v2162 = vadd.f32 %v2114, %v2129
    %v2163 = vadd.f32 %v2115, %v2131
    %v2164 = vadd.f32 %v2116, %v2133
    %v2165 = vadd.f32 %v2117, %v2135
    %v2166 = vadd.f32 %v2118, %v2137
    %v2167 = vadd.f32 %v2119, %v2139
    %v2168 = vadd.f32 %v2120, %v2141
    %v2169 = vadd.f32 %v2121, %v2143
    %v2170 = vadd.f32 %v2122, %v2145
    %v2171 = vadd.f32 %v2123, %v2147
    %2184 = vrot.lane.b32.xlu0 %v1968, 124
    %v2185 = vpop.permute.xlu0 %2184
    %2186 = vrot.lane.b32.xlu0 %v1969, 124
    %v2187 = vpop.permute.xlu0 %2186
    %2188 = vrot.lane.b32.xlu0 %v1970, 124
    %v2189 = vpop.permute.xlu0 %2188
    %2190 = vrot.lane.b32.xlu0 %v1971, 124
    %v2191 = vpop.permute.xlu0 %2190
    %2192 = vrot.lane.b32.xlu0 %v1972, 124
    %v2193 = vpop.permute.xlu0 %2192
    %2194 = vrot.lane.b32.xlu0 %v1973, 124
    %v2195 = vpop.permute.xlu0 %2194
    %2196 = vrot.lane.b32.xlu0 %v1974, 124
    %v2197 = vpop.permute.xlu0 %2196
    %2198 = vrot.lane.b32.xlu0 %v1975, 124
    %v2199 = vpop.permute.xlu0 %2198
    %2200 = vrot.lane.b32.xlu0 %v1976, 124
    %v2201 = vpop.permute.xlu0 %2200
    %2202 = vrot.lane.b32.xlu0 %v1977, 124
    %v2203 = vpop.permute.xlu0 %2202
    %2204 = vrot.lane.b32.xlu0 %v1978, 124
    %v2205 = vpop.permute.xlu0 %2204
    %2206 = vrot.lane.b32.xlu0 %v1979, 124
    %v2207 = vpop.permute.xlu0 %2206
    %v2220 = vadd.f32 %v2160, %v2185
    %v2221 = vadd.f32 %v2161, %v2187
    %v2222 = vadd.f32 %v2162, %v2189
    %v2223 = vadd.f32 %v2163, %v2191
    %v2224 = vadd.f32 %v2164, %v2193
    %v2225 = vadd.f32 %v2165, %v2195
    %v2226 = vadd.f32 %v2166, %v2197
    %v2227 = vadd.f32 %v2167, %v2199
    %v2228 = vadd.f32 %v2168, %v2201
    %v2229 = vadd.f32 %v2169, %v2203
    %v2230 = vadd.f32 %v2170, %v2205
    %v2231 = vadd.f32 %v2171, %v2207
    %v2232 = vmul.f32 %v2220, %v86
    %v2233 = vmul.f32 %v2221, %v87
    %v2234 = vmul.f32 %v2222, %v86
    %v2235 = vmul.f32 %v2223, %v87
    %v2236 = vmul.f32 %v2224, %v86
    %v2237 = vmul.f32 %v2225, %v87
    %v2238 = vmul.f32 %v2226, %v86
    %v2239 = vmul.f32 %v2227, %v87
    %v2240 = vmul.f32 %v2228, %v86
    %v2241 = vmul.f32 %v2229, %v87
    %v2242 = vmul.f32 %v2230, %v86
    %v2243 = vmul.f32 %v2231, %v87
    %2244 = vst.msk [vmem:[#allocation2 + $0x2] sm:$0xff] %vm100, %v2232
    %2245 = vst.msk [vmem:[#allocation2 + $0xa] sm:$0xff] %vm100, %v2233
    %2246 = vst.msk [vmem:[#allocation2 + $0x1a] sm:$0xff] %vm100, %v2234
    %2247 = vst.msk [vmem:[#allocation2 + $0x22] sm:$0xff] %vm100, %v2235
    %2248 = vst.msk [vmem:[#allocation2 + $0x32] sm:$0xff] %vm100, %v2236
    %2249 = vst.msk [vmem:[#allocation2 + $0x3a] sm:$0xff] %vm100, %v2237
    %2250 = vst.msk [vmem:[#allocation2 + $0x4a] sm:$0xff] %vm100, %v2238
    %2251 = vst.msk [vmem:[#allocation2 + $0x52] sm:$0xff] %vm100, %v2239
    %2252 = vst.msk [vmem:[#allocation2 + $0x62] sm:$0xff] %vm100, %v2240
    %2253 = vst.msk [vmem:[#allocation2 + $0x6a] sm:$0xff] %vm100, %v2241
    %2254 = vst.msk [vmem:[#allocation2 + $0x7a] sm:$0xff] %vm100, %v2242
    %2255 = vst.msk [vmem:[#allocation2 + $0x82] sm:$0xff] %vm100, %v2243
    %2256 = vst.msk [vmem:[#allocation2] sm:$0x1] %vm113, %v2232
    %2257 = vst.msk [vmem:[#allocation2 + $0x18] sm:$0x1] %vm113, %v2234
    %2258 = vst.msk [vmem:[#allocation2 + $0x30] sm:$0x1] %vm113, %v2236
    %2259 = vst.msk [vmem:[#allocation2 + $0x48] sm:$0x1] %vm113, %v2238
    %2260 = vst.msk [vmem:[#allocation2 + $0x60] sm:$0x1] %vm113, %v2240
    %2261 = vst.msk [vmem:[#allocation2 + $0x78] sm:$0x1] %vm113, %v2242
    %2262 = vst.msk [vmem:[#allocation2 + $0x1] sm:$0x1] %vm113, %v2232
    %2263 = vst.msk [vmem:[#allocation2 + $0x19] sm:$0x1] %vm113, %v2234
    %2264 = vst.msk [vmem:[#allocation2 + $0x31] sm:$0x1] %vm113, %v2236
    %2265 = vst.msk [vmem:[#allocation2 + $0x49] sm:$0x1] %vm113, %v2238
    %2266 = vst.msk [vmem:[#allocation2 + $0x61] sm:$0x1] %vm113, %v2240
    %2267 = vst.msk [vmem:[#allocation2 + $0x79] sm:$0x1] %vm113, %v2242
    %2268 = vst.msk [vmem:[#allocation2 + $0xb] sm:$0x80] %vm126, %v2233
    %2269 = vst.msk [vmem:[#allocation2 + $0x23] sm:$0x80] %vm126, %v2235
    %2270 = vst.msk [vmem:[#allocation2 + $0x3b] sm:$0x80] %vm126, %v2237
    %2271 = vst.msk [vmem:[#allocation2 + $0x53] sm:$0x80] %vm126, %v2239
    %2272 = vst.msk [vmem:[#allocation2 + $0x6b] sm:$0x80] %vm126, %v2241
    %2273 = vst.msk [vmem:[#allocation2 + $0x83] sm:$0x80] %vm126, %v2243
    %2274 = vst.msk [vmem:[#allocation2 + $0xc] sm:$0x80] %vm126, %v2233
    %2275 = vst.msk [vmem:[#allocation2 + $0x24] sm:$0x80] %vm126, %v2235
    %2276 = vst.msk [vmem:[#allocation2 + $0x3c] sm:$0x80] %vm126, %v2237
    %2277 = vst.msk [vmem:[#allocation2 + $0x54] sm:$0x80] %vm126, %v2239
    %2278 = vst.msk [vmem:[#allocation2 + $0x6c] sm:$0x80] %vm126, %v2241
    %2279 = vst.msk [vmem:[#allocation2 + $0x84] sm:$0x80] %vm126, %v2243
    %v2280 = vld [vmem:[#allocation2] sm:$0xff]
    %v2281 = vld [vmem:[#allocation2 + $0x8] sm:$0xff]
    %v2282 = vld [vmem:[#allocation2 + $0x18] sm:$0xff]
    %v2283 = vld [vmem:[#allocation2 + $0x20] sm:$0xff]
    %v2284 = vld [vmem:[#allocation2 + $0x30] sm:$0xff]
    %v2285 = vld [vmem:[#allocation2 + $0x38] sm:$0xff]
    %v2286 = vld [vmem:[#allocation2 + $0x48] sm:$0xff]
    %v2287 = vld [vmem:[#allocation2 + $0x50] sm:$0xff]
    %v2288 = vld [vmem:[#allocation2 + $0x60] sm:$0xff]
    %v2289 = vld [vmem:[#allocation2 + $0x68] sm:$0xff]
    %v2290 = vld [vmem:[#allocation2 + $0x78] sm:$0xff]
    %v2291 = vld [vmem:[#allocation2 + $0x80] sm:$0xff]
    %v2292 = vmul.f32 %v2280, 0.05
    %v2293 = vmul.f32 %v2281, 0.05
    %v2294 = vmul.f32 %v2282, 0.05
    %v2295 = vmul.f32 %v2283, 0.05
    %v2296 = vmul.f32 %v2284, 0.05
    %v2297 = vmul.f32 %v2285, 0.05
    %v2298 = vmul.f32 %v2286, 0.05
    %v2299 = vmul.f32 %v2287, 0.05
    %v2300 = vmul.f32 %v2288, 0.05
    %v2301 = vmul.f32 %v2289, 0.05
    %v2302 = vmul.f32 %v2290, 0.05
    %v2303 = vmul.f32 %v2291, 0.05
    %v2304 = vld [vmem:[#allocation2 + $0x1] sm:$0xff]
    %v2305 = vld [vmem:[#allocation2 + $0x9] sm:$0xff]
    %v2306 = vld [vmem:[#allocation2 + $0x19] sm:$0xff]
    %v2307 = vld [vmem:[#allocation2 + $0x21] sm:$0xff]
    %v2308 = vld [vmem:[#allocation2 + $0x31] sm:$0xff]
    %v2309 = vld [vmem:[#allocation2 + $0x39] sm:$0xff]
    %v2310 = vld [vmem:[#allocation2 + $0x49] sm:$0xff]
    %v2311 = vld [vmem:[#allocation2 + $0x51] sm:$0xff]
    %v2312 = vld [vmem:[#allocation2 + $0x61] sm:$0xff]
    %v2313 = vld [vmem:[#allocation2 + $0x69] sm:$0xff]
    %v2314 = vld [vmem:[#allocation2 + $0x79] sm:$0xff]
    %v2315 = vld [vmem:[#allocation2 + $0x81] sm:$0xff]
    %v2316 = vmul.f32 %v2304, 0.25
    %v2317 = vmul.f32 %v2305, 0.25
    %v2318 = vmul.f32 %v2306, 0.25
    %v2319 = vmul.f32 %v2307, 0.25
    %v2320 = vmul.f32 %v2308, 0.25
    %v2321 = vmul.f32 %v2309, 0.25
    %v2322 = vmul.f32 %v2310, 0.25
    %v2323 = vmul.f32 %v2311, 0.25
    %v2324 = vmul.f32 %v2312, 0.25
    %v2325 = vmul.f32 %v2313, 0.25
    %v2326 = vmul.f32 %v2314, 0.25
    %v2327 = vmul.f32 %v2315, 0.25
    %v2328 = vadd.f32 %v2292, %v2316
    %v2329 = vadd.f32 %v2293, %v2317
    %v2330 = vadd.f32 %v2294, %v2318
    %v2331 = vadd.f32 %v2295, %v2319
    %v2332 = vadd.f32 %v2296, %v2320
    %v2333 = vadd.f32 %v2297, %v2321
    %v2334 = vadd.f32 %v2298, %v2322
    %v2335 = vadd.f32 %v2299, %v2323
    %v2336 = vadd.f32 %v2300, %v2324
    %v2337 = vadd.f32 %v2301, %v2325
    %v2338 = vadd.f32 %v2302, %v2326
    %v2339 = vadd.f32 %v2303, %v2327
    %v2340 = vld [vmem:[#allocation2 + $0x2] sm:$0xff]
    %v2341 = vld [vmem:[#allocation2 + $0xa] sm:$0xff]
    %v2342 = vld [vmem:[#allocation2 + $0x1a] sm:$0xff]
    %v2343 = vld [vmem:[#allocation2 + $0x22] sm:$0xff]
    %v2344 = vld [vmem:[#allocation2 + $0x32] sm:$0xff]
    %v2345 = vld [vmem:[#allocation2 + $0x3a] sm:$0xff]
    %v2346 = vld [vmem:[#allocation2 + $0x4a] sm:$0xff]
    %v2347 = vld [vmem:[#allocation2 + $0x52] sm:$0xff]
    %v2348 = vld [vmem:[#allocation2 + $0x62] sm:$0xff]
    %v2349 = vld [vmem:[#allocation2 + $0x6a] sm:$0xff]
    %v2350 = vld [vmem:[#allocation2 + $0x7a] sm:$0xff]
    %v2351 = vld [vmem:[#allocation2 + $0x82] sm:$0xff]
    %v2352 = vmul.f32 %v2340, 0.4
    %v2353 = vmul.f32 %v2341, 0.4
    %v2354 = vmul.f32 %v2342, 0.4
    %v2355 = vmul.f32 %v2343, 0.4
    %v2356 = vmul.f32 %v2344, 0.4
    %v2357 = vmul.f32 %v2345, 0.4
    %v2358 = vmul.f32 %v2346, 0.4
    %v2359 = vmul.f32 %v2347, 0.4
    %v2360 = vmul.f32 %v2348, 0.4
    %v2361 = vmul.f32 %v2349, 0.4
    %v2362 = vmul.f32 %v2350, 0.4
    %v2363 = vmul.f32 %v2351, 0.4
    %v2364 = vadd.f32 %v2328, %v2352
    %v2365 = vadd.f32 %v2329, %v2353
    %v2366 = vadd.f32 %v2330, %v2354
    %v2367 = vadd.f32 %v2331, %v2355
    %v2368 = vadd.f32 %v2332, %v2356
    %v2369 = vadd.f32 %v2333, %v2357
    %v2370 = vadd.f32 %v2334, %v2358
    %v2371 = vadd.f32 %v2335, %v2359
    %v2372 = vadd.f32 %v2336, %v2360
    %v2373 = vadd.f32 %v2337, %v2361
    %v2374 = vadd.f32 %v2338, %v2362
    %v2375 = vadd.f32 %v2339, %v2363
    %v2376 = vld [vmem:[#allocation2 + $0x3] sm:$0xff]
    %v2377 = vld [vmem:[#allocation2 + $0xb] sm:$0xff]
    %v2378 = vld [vmem:[#allocation2 + $0x1b] sm:$0xff]
    %v2379 = vld [vmem:[#allocation2 + $0x23] sm:$0xff]
    %v2380 = vld [vmem:[#allocation2 + $0x33] sm:$0xff]
    %v2381 = vld [vmem:[#allocation2 + $0x3b] sm:$0xff]
    %v2382 = vld [vmem:[#allocation2 + $0x4b] sm:$0xff]
    %v2383 = vld [vmem:[#allocation2 + $0x53] sm:$0xff]
    %v2384 = vld [vmem:[#allocation2 + $0x63] sm:$0xff]
    %v2385 = vld [vmem:[#allocation2 + $0x6b] sm:$0xff]
    %v2386 = vld [vmem:[#allocation2 + $0x7b] sm:$0xff]
    %v2387 = vld [vmem:[#allocation2 + $0x83] sm:$0xff]
    %v2388 = vmul.f32 %v2376, 0.25
    %v2389 = vmul.f32 %v2377, 0.25
    %v2390 = vmul.f32 %v2378, 0.25
    %v2391 = vmul.f32 %v2379, 0.25
    %v2392 = vmul.f32 %v2380, 0.25
    %v2393 = vmul.f32 %v2381, 0.25
    %v2394 = vmul.f32 %v2382, 0.25
    %v2395 = vmul.f32 %v2383, 0.25
    %v2396 = vmul.f32 %v2384, 0.25
    %v2397 = vmul.f32 %v2385, 0.25
    %v2398 = vmul.f32 %v2386, 0.25
    %v2399 = vmul.f32 %v2387, 0.25
    %v2400 = vadd.f32 %v2364, %v2388
    %v2401 = vadd.f32 %v2365, %v2389
    %v2402 = vadd.f32 %v2366, %v2390
    %v2403 = vadd.f32 %v2367, %v2391
    %v2404 = vadd.f32 %v2368, %v2392
    %v2405 = vadd.f32 %v2369, %v2393
    %v2406 = vadd.f32 %v2370, %v2394
    %v2407 = vadd.f32 %v2371, %v2395
    %v2408 = vadd.f32 %v2372, %v2396
    %v2409 = vadd.f32 %v2373, %v2397
    %v2410 = vadd.f32 %v2374, %v2398
    %v2411 = vadd.f32 %v2375, %v2399
    %v2412 = vld [vmem:[#allocation2 + $0x4] sm:$0xff]
    %v2413 = vld [vmem:[#allocation2 + $0xc] sm:$0xff]
    %v2414 = vld [vmem:[#allocation2 + $0x1c] sm:$0xff]
    %v2415 = vld [vmem:[#allocation2 + $0x24] sm:$0xff]
    %v2416 = vld [vmem:[#allocation2 + $0x34] sm:$0xff]
    %v2417 = vld [vmem:[#allocation2 + $0x3c] sm:$0xff]
    %v2418 = vld [vmem:[#allocation2 + $0x4c] sm:$0xff]
    %v2419 = vld [vmem:[#allocation2 + $0x54] sm:$0xff]
    %v2420 = vld [vmem:[#allocation2 + $0x64] sm:$0xff]
    %v2421 = vld [vmem:[#allocation2 + $0x6c] sm:$0xff]
    %v2422 = vld [vmem:[#allocation2 + $0x7c] sm:$0xff]
    %v2423 = vld [vmem:[#allocation2 + $0x84] sm:$0xff]
    %v2424 = vmul.f32 %v2412, 0.05
    %v2425 = vmul.f32 %v2413, 0.05
    %v2426 = vmul.f32 %v2414, 0.05
    %v2427 = vmul.f32 %v2415, 0.05
    %v2428 = vmul.f32 %v2416, 0.05
    %v2429 = vmul.f32 %v2417, 0.05
    %v2430 = vmul.f32 %v2418, 0.05
    %v2431 = vmul.f32 %v2419, 0.05
    %v2432 = vmul.f32 %v2420, 0.05
    %v2433 = vmul.f32 %v2421, 0.05
    %v2434 = vmul.f32 %v2422, 0.05
    %v2435 = vmul.f32 %v2423, 0.05
    %v2436 = vadd.f32 %v2400, %v2424
    %v2437 = vadd.f32 %v2401, %v2425
    %v2438 = vadd.f32 %v2402, %v2426
    %v2439 = vadd.f32 %v2403, %v2427
    %v2440 = vadd.f32 %v2404, %v2428
    %v2441 = vadd.f32 %v2405, %v2429
    %v2442 = vadd.f32 %v2406, %v2430
    %v2443 = vadd.f32 %v2407, %v2431
    %v2444 = vadd.f32 %v2408, %v2432
    %v2445 = vadd.f32 %v2409, %v2433
    %v2446 = vadd.f32 %v2410, %v2434
    %v2447 = vadd.f32 %v2411, %v2435
    %2460 = vrot.lane.b32.xlu0 %v2436, 2
    %v2461 = vpop.permute.xlu0 %2460
    %2462 = vrot.lane.b32.xlu0 %v2437, 2
    %v2463 = vpop.permute.xlu0 %2462
    %2464 = vrot.lane.b32.xlu0 %v2438, 2
    %v2465 = vpop.permute.xlu0 %2464
    %2466 = vrot.lane.b32.xlu0 %v2439, 2
    %v2467 = vpop.permute.xlu0 %2466
    %2468 = vrot.lane.b32.xlu0 %v2440, 2
    %v2469 = vpop.permute.xlu0 %2468
    %2470 = vrot.lane.b32.xlu0 %v2441, 2
    %v2471 = vpop.permute.xlu0 %2470
    %2472 = vrot.lane.b32.xlu0 %v2442, 2
    %v2473 = vpop.permute.xlu0 %2472
    %2474 = vrot.lane.b32.xlu0 %v2443, 2
    %v2475 = vpop.permute.xlu0 %2474
    %2476 = vrot.lane.b32.xlu0 %v2444, 2
    %v2477 = vpop.permute.xlu0 %2476
    %2478 = vrot.lane.b32.xlu0 %v2445, 2
    %v2479 = vpop.permute.xlu0 %2478
    %2480 = vrot.lane.b32.xlu0 %v2446, 2
    %v2481 = vpop.permute.xlu0 %2480
    %2482 = vrot.lane.b32.xlu0 %v2447, 2
    %v2483 = vpop.permute.xlu0 %2482
    %2496 = vst.msk [vmem:[#allocation3] sm:$0xff] %vm355, %v2461
    %2497 = vst.msk [vmem:[#allocation3 + $0x8] sm:$0xff] %vm355, %v2463
    %2498 = vst.msk [vmem:[#allocation3 + $0x10] sm:$0xff] %vm355, %v2465
    %2499 = vst.msk [vmem:[#allocation3 + $0x18] sm:$0xff] %vm355, %v2467
    %2500 = vst.msk [vmem:[#allocation3 + $0x20] sm:$0xff] %vm355, %v2469
    %2501 = vst.msk [vmem:[#allocation3 + $0x28] sm:$0xff] %vm355, %v2471
    %2502 = vst.msk [vmem:[#allocation3 + $0x30] sm:$0xff] %vm355, %v2473
    %2503 = vst.msk [vmem:[#allocation3 + $0x38] sm:$0xff] %vm355, %v2475
    %2504 = vst.msk [vmem:[#allocation3 + $0x40] sm:$0xff] %vm355, %v2477
    %2505 = vst.msk [vmem:[#allocation3 + $0x48] sm:$0xff] %vm355, %v2479
    %2506 = vst.msk [vmem:[#allocation3 + $0x50] sm:$0xff] %vm355, %v2481
    %2507 = vst.msk [vmem:[#allocation3 + $0x58] sm:$0xff] %vm355, %v2483
    %2508 = vst.msk [vmem:[#allocation3] sm:$0xff] %vm368, %v2436
    %2509 = vst.msk [vmem:[#allocation3 + $0x8] sm:$0xff] %vm368, %v2437
    %2510 = vst.msk [vmem:[#allocation3 + $0x10] sm:$0xff] %vm368, %v2438
    %2511 = vst.msk [vmem:[#allocation3 + $0x18] sm:$0xff] %vm368, %v2439
    %2512 = vst.msk [vmem:[#allocation3 + $0x20] sm:$0xff] %vm368, %v2440
    %2513 = vst.msk [vmem:[#allocation3 + $0x28] sm:$0xff] %vm368, %v2441
    %2514 = vst.msk [vmem:[#allocation3 + $0x30] sm:$0xff] %vm368, %v2442
    %2515 = vst.msk [vmem:[#allocation3 + $0x38] sm:$0xff] %vm368, %v2443
    %2516 = vst.msk [vmem:[#allocation3 + $0x40] sm:$0xff] %vm368, %v2444
    %2517 = vst.msk [vmem:[#allocation3 + $0x48] sm:$0xff] %vm368, %v2445
    %2518 = vst.msk [vmem:[#allocation3 + $0x50] sm:$0xff] %vm368, %v2446
    %2519 = vst.msk [vmem:[#allocation3 + $0x58] sm:$0xff] %vm368, %v2447
    %2520 = vrot.lane.b32.xlu0 %v2436, 1
    %v2521 = vpop.permute.xlu0 %2520
    %2522 = vrot.lane.b32.xlu0 %v2437, 1
    %v2523 = vpop.permute.xlu0 %2522
    %2524 = vrot.lane.b32.xlu0 %v2438, 1
    %v2525 = vpop.permute.xlu0 %2524
    %2526 = vrot.lane.b32.xlu0 %v2439, 1
    %v2527 = vpop.permute.xlu0 %2526
    %2528 = vrot.lane.b32.xlu0 %v2440, 1
    %v2529 = vpop.permute.xlu0 %2528
    %2530 = vrot.lane.b32.xlu0 %v2441, 1
    %v2531 = vpop.permute.xlu0 %2530
    %2532 = vrot.lane.b32.xlu0 %v2442, 1
    %v2533 = vpop.permute.xlu0 %2532
    %2534 = vrot.lane.b32.xlu0 %v2443, 1
    %v2535 = vpop.permute.xlu0 %2534
    %2536 = vrot.lane.b32.xlu0 %v2444, 1
    %v2537 = vpop.permute.xlu0 %2536
    %2538 = vrot.lane.b32.xlu0 %v2445, 1
    %v2539 = vpop.permute.xlu0 %2538
    %2540 = vrot.lane.b32.xlu0 %v2446, 1
    %v2541 = vpop.permute.xlu0 %2540
    %2542 = vrot.lane.b32.xlu0 %v2447, 1
    %v2543 = vpop.permute.xlu0 %2542
    %2556 = vst.msk [vmem:[#allocation3] sm:$0xff] %vm417, %v2521
    %2557 = vst.msk [vmem:[#allocation3 + $0x8] sm:$0xff] %vm417, %v2523
    %2558 = vst.msk [vmem:[#allocation3 + $0x10] sm:$0xff] %vm417, %v2525
    %2559 = vst.msk [vmem:[#allocation3 + $0x18] sm:$0xff] %vm417, %v2527
    %2560 = vst.msk [vmem:[#allocation3 + $0x20] sm:$0xff] %vm417, %v2529
    %2561 = vst.msk [vmem:[#allocation3 + $0x28] sm:$0xff] %vm417, %v2531
    %2562 = vst.msk [vmem:[#allocation3 + $0x30] sm:$0xff] %vm417, %v2533
    %2563 = vst.msk [vmem:[#allocation3 + $0x38] sm:$0xff] %vm417, %v2535
    %2564 = vst.msk [vmem:[#allocation3 + $0x40] sm:$0xff] %vm417, %v2537
    %2565 = vst.msk [vmem:[#allocation3 + $0x48] sm:$0xff] %vm417, %v2539
    %2566 = vst.msk [vmem:[#allocation3 + $0x50] sm:$0xff] %vm417, %v2541
    %2567 = vst.msk [vmem:[#allocation3 + $0x58] sm:$0xff] %vm417, %v2543
    %2568 = vrot.lane.b32.xlu0 %v2436, 3
    %v2569 = vpop.permute.xlu0 %2568
    %2570 = vrot.lane.b32.xlu0 %v2437, 3
    %v2571 = vpop.permute.xlu0 %2570
    %2572 = vrot.lane.b32.xlu0 %v2438, 3
    %v2573 = vpop.permute.xlu0 %2572
    %2574 = vrot.lane.b32.xlu0 %v2439, 3
    %v2575 = vpop.permute.xlu0 %2574
    %2576 = vrot.lane.b32.xlu0 %v2440, 3
    %v2577 = vpop.permute.xlu0 %2576
    %2578 = vrot.lane.b32.xlu0 %v2441, 3
    %v2579 = vpop.permute.xlu0 %2578
    %2580 = vrot.lane.b32.xlu0 %v2442, 3
    %v2581 = vpop.permute.xlu0 %2580
    %2582 = vrot.lane.b32.xlu0 %v2443, 3
    %v2583 = vpop.permute.xlu0 %2582
    %2584 = vrot.lane.b32.xlu0 %v2444, 3
    %v2585 = vpop.permute.xlu0 %2584
    %2586 = vrot.lane.b32.xlu0 %v2445, 3
    %v2587 = vpop.permute.xlu0 %2586
    %2588 = vrot.lane.b32.xlu0 %v2446, 3
    %v2589 = vpop.permute.xlu0 %2588
    %2590 = vrot.lane.b32.xlu0 %v2447, 3
    %v2591 = vpop.permute.xlu0 %2590
    %2604 = vst.msk [vmem:[#allocation3] sm:$0xff] %vm466, %v2569
    %2605 = vst.msk [vmem:[#allocation3 + $0x8] sm:$0xff] %vm466, %v2571
    %2606 = vst.msk [vmem:[#allocation3 + $0x10] sm:$0xff] %vm466, %v2573
    %2607 = vst.msk [vmem:[#allocation3 + $0x18] sm:$0xff] %vm466, %v2575
    %2608 = vst.msk [vmem:[#allocation3 + $0x20] sm:$0xff] %vm466, %v2577
    %2609 = vst.msk [vmem:[#allocation3 + $0x28] sm:$0xff] %vm466, %v2579
    %2610 = vst.msk [vmem:[#allocation3 + $0x30] sm:$0xff] %vm466, %v2581
    %2611 = vst.msk [vmem:[#allocation3 + $0x38] sm:$0xff] %vm466, %v2583
    %2612 = vst.msk [vmem:[#allocation3 + $0x40] sm:$0xff] %vm466, %v2585
    %2613 = vst.msk [vmem:[#allocation3 + $0x48] sm:$0xff] %vm466, %v2587
    %2614 = vst.msk [vmem:[#allocation3 + $0x50] sm:$0xff] %vm466, %v2589
    %2615 = vst.msk [vmem:[#allocation3 + $0x58] sm:$0xff] %vm466, %v2591
    %2616 = vrot.lane.b32.xlu0 %v2436, 4
    %v2617 = vpop.permute.xlu0 %2616
    %2618 = vrot.lane.b32.xlu0 %v2437, 4
    %v2619 = vpop.permute.xlu0 %2618
    %2620 = vrot.lane.b32.xlu0 %v2438, 4
    %v2621 = vpop.permute.xlu0 %2620
    %2622 = vrot.lane.b32.xlu0 %v2439, 4
    %v2623 = vpop.permute.xlu0 %2622
    %2624 = vrot.lane.b32.xlu0 %v2440, 4
    %v2625 = vpop.permute.xlu0 %2624
    %2626 = vrot.lane.b32.xlu0 %v2441, 4
    %v2627 = vpop.permute.xlu0 %2626
    %2628 = vrot.lane.b32.xlu0 %v2442, 4
    %v2629 = vpop.permute.xlu0 %2628
    %2630 = vrot.lane.b32.xlu0 %v2443, 4
    %v2631 = vpop.permute.xlu0 %2630
    %2632 = vrot.lane.b32.xlu0 %v2444, 4
    %v2633 = vpop.permute.xlu0 %2632
    %2634 = vrot.lane.b32.xlu0 %v2445, 4
    %v2635 = vpop.permute.xlu0 %2634
    %2636 = vrot.lane.b32.xlu0 %v2446, 4
    %v2637 = vpop.permute.xlu0 %2636
    %2638 = vrot.lane.b32.xlu0 %v2447, 4
    %v2639 = vpop.permute.xlu0 %2638
    %2652 = vst.msk [vmem:[#allocation3] sm:$0xff] %vm515, %v2617
    %2653 = vst.msk [vmem:[#allocation3 + $0x8] sm:$0xff] %vm515, %v2619
    %2654 = vst.msk [vmem:[#allocation3 + $0x10] sm:$0xff] %vm515, %v2621
    %2655 = vst.msk [vmem:[#allocation3 + $0x18] sm:$0xff] %vm515, %v2623
    %2656 = vst.msk [vmem:[#allocation3 + $0x20] sm:$0xff] %vm515, %v2625
    %2657 = vst.msk [vmem:[#allocation3 + $0x28] sm:$0xff] %vm515, %v2627
    %2658 = vst.msk [vmem:[#allocation3 + $0x30] sm:$0xff] %vm515, %v2629
    %2659 = vst.msk [vmem:[#allocation3 + $0x38] sm:$0xff] %vm515, %v2631
    %2660 = vst.msk [vmem:[#allocation3 + $0x40] sm:$0xff] %vm515, %v2633
    %2661 = vst.msk [vmem:[#allocation3 + $0x48] sm:$0xff] %vm515, %v2635
    %2662 = vst.msk [vmem:[#allocation3 + $0x50] sm:$0xff] %vm515, %v2637
    %2663 = vst.msk [vmem:[#allocation3 + $0x58] sm:$0xff] %vm515, %v2639
    %v2664 = vld [vmem:[#allocation3] sm:$0xff]
    %v2665 = vld [vmem:[#allocation3 + $0x8] sm:$0xff]
    %v2666 = vld [vmem:[#allocation3 + $0x10] sm:$0xff]
    %v2667 = vld [vmem:[#allocation3 + $0x18] sm:$0xff]
    %v2668 = vld [vmem:[#allocation3 + $0x20] sm:$0xff]
    %v2669 = vld [vmem:[#allocation3 + $0x28] sm:$0xff]
    %v2670 = vld [vmem:[#allocation3 + $0x30] sm:$0xff]
    %v2671 = vld [vmem:[#allocation3 + $0x38] sm:$0xff]
    %v2672 = vld [vmem:[#allocation3 + $0x40] sm:$0xff]
    %v2673 = vld [vmem:[#allocation3 + $0x48] sm:$0xff]
    %v2674 = vld [vmem:[#allocation3 + $0x50] sm:$0xff]
    %v2675 = vld [vmem:[#allocation3 + $0x58] sm:$0xff]
    %v2676 = vmul.f32 %v2664, 0.05
    %v2677 = vmul.f32 %v2665, 0.05
    %v2678 = vmul.f32 %v2666, 0.05
    %v2679 = vmul.f32 %v2667, 0.05
    %v2680 = vmul.f32 %v2668, 0.05
    %v2681 = vmul.f32 %v2669, 0.05
    %v2682 = vmul.f32 %v2670, 0.05
    %v2683 = vmul.f32 %v2671, 0.05
    %v2684 = vmul.f32 %v2672, 0.05
    %v2685 = vmul.f32 %v2673, 0.05
    %v2686 = vmul.f32 %v2674, 0.05
    %v2687 = vmul.f32 %v2675, 0.05
    %v2688 = vmul.f32 %v2664, 0.25
    %v2689 = vmul.f32 %v2665, 0.25
    %v2690 = vmul.f32 %v2666, 0.25
    %v2691 = vmul.f32 %v2667, 0.25
    %v2692 = vmul.f32 %v2668, 0.25
    %v2693 = vmul.f32 %v2669, 0.25
    %v2694 = vmul.f32 %v2670, 0.25
    %v2695 = vmul.f32 %v2671, 0.25
    %v2696 = vmul.f32 %v2672, 0.25
    %v2697 = vmul.f32 %v2673, 0.25
    %v2698 = vmul.f32 %v2674, 0.25
    %v2699 = vmul.f32 %v2675, 0.25
    %2712 = vrot.lane.b32.xlu0 %v2688, 127
    %v2713 = vpop.permute.xlu0 %2712
    %2714 = vrot.lane.b32.xlu0 %v2689, 127
    %v2715 = vpop.permute.xlu0 %2714
    %2716 = vrot.lane.b32.xlu0 %v2690, 127
    %v2717 = vpop.permute.xlu0 %2716
    %2718 = vrot.lane.b32.xlu0 %v2691, 127
    %v2719 = vpop.permute.xlu0 %2718
    %2720 = vrot.lane.b32.xlu0 %v2692, 127
    %v2721 = vpop.permute.xlu0 %2720
    %2722 = vrot.lane.b32.xlu0 %v2693, 127
    %v2723 = vpop.permute.xlu0 %2722
    %2724 = vrot.lane.b32.xlu0 %v2694, 127
    %v2725 = vpop.permute.xlu0 %2724
    %2726 = vrot.lane.b32.xlu0 %v2695, 127
    %v2727 = vpop.permute.xlu0 %2726
    %2728 = vrot.lane.b32.xlu0 %v2696, 127
    %v2729 = vpop.permute.xlu0 %2728
    %2730 = vrot.lane.b32.xlu0 %v2697, 127
    %v2731 = vpop.permute.xlu0 %2730
    %2732 = vrot.lane.b32.xlu0 %v2698, 127
    %v2733 = vpop.permute.xlu0 %2732
    %2734 = vrot.lane.b32.xlu0 %v2699, 127
    %v2735 = vpop.permute.xlu0 %2734
    %v2748 = vadd.f32 %v2676, %v2713
    %v2749 = vadd.f32 %v2677, %v2715
    %v2750 = vadd.f32 %v2678, %v2717
    %v2751 = vadd.f32 %v2679, %v2719
    %v2752 = vadd.f32 %v2680, %v2721
    %v2753 = vadd.f32 %v2681, %v2723
    %v2754 = vadd.f32 %v2682, %v2725
    %v2755 = vadd.f32 %v2683, %v2727
    %v2756 = vadd.f32 %v2684, %v2729
    %v2757 = vadd.f32 %v2685, %v2731
    %v2758 = vadd.f32 %v2686, %v2733
    %v2759 = vadd.f32 %v2687, %v2735
    %v2760 = vmul.f32 %v2664, 0.4
    %v2761 = vmul.f32 %v2665, 0.4
    %v2762 = vmul.f32 %v2666, 0.4
    %v2763 = vmul.f32 %v2667, 0.4
    %v2764 = vmul.f32 %v2668, 0.4
    %v2765 = vmul.f32 %v2669, 0.4
    %v2766 = vmul.f32 %v2670, 0.4
    %v2767 = vmul.f32 %v2671, 0.4
    %v2768 = vmul.f32 %v2672, 0.4
    %v2769 = vmul.f32 %v2673, 0.4
    %v2770 = vmul.f32 %v2674, 0.4
    %v2771 = vmul.f32 %v2675, 0.4
    %2784 = vrot.lane.b32.xlu0 %v2760, 126
    %v2785 = vpop.permute.xlu0 %2784
    %2786 = vrot.lane.b32.xlu0 %v2761, 126
    %v2787 = vpop.permute.xlu0 %2786
    %2788 = vrot.lane.b32.xlu0 %v2762, 126
    %v2789 = vpop.permute.xlu0 %2788
    %2790 = vrot.lane.b32.xlu0 %v2763, 126
    %v2791 = vpop.permute.xlu0 %2790
    %2792 = vrot.lane.b32.xlu0 %v2764, 126
    %v2793 = vpop.permute.xlu0 %2792
    %2794 = vrot.lane.b32.xlu0 %v2765, 126
    %v2795 = vpop.permute.xlu0 %2794
    %2796 = vrot.lane.b32.xlu0 %v2766, 126
    %v2797 = vpop.permute.xlu0 %2796
    %2798 = vrot.lane.b32.xlu0 %v2767, 126
    %v2799 = vpop.permute.xlu0 %2798
    %2800 = vrot.lane.b32.xlu0 %v2768, 126
    %v2801 = vpop.permute.xlu0 %2800
    %2802 = vrot.lane.b32.xlu0 %v2769, 126
    %v2803 = vpop.permute.xlu0 %2802
    %2804 = vrot.lane.b32.xlu0 %v2770, 126
    %v2805 = vpop.permute.xlu0 %2804
    %2806 = vrot.lane.b32.xlu0 %v2771, 126
    %v2807 = vpop.permute.xlu0 %2806
    %v2820 = vadd.f32 %v2748, %v2785
    %v2821 = vadd.f32 %v2749, %v2787
    %v2822 = vadd.f32 %v2750, %v2789
    %v2823 = vadd.f32 %v2751, %v2791
    %v2824 = vadd.f32 %v2752, %v2793
    %v2825 = vadd.f32 %v2753, %v2795
    %v2826 = vadd.f32 %v2754, %v2797
    %v2827 = vadd.f32 %v2755, %v2799
    %v2828 = vadd.f32 %v2756, %v2801
    %v2829 = vadd.f32 %v2757, %v2803
    %v2830 = vadd.f32 %v2758, %v2805
    %v2831 = vadd.f32 %v2759, %v2807
    %2832 = vrot.lane.b32.xlu0 %v2688, 125
    %v2833 = vpop.permute.xlu0 %2832
    %2834 = vrot.lane.b32.xlu0 %v2689, 125
    %v2835 = vpop.permute.xlu0 %2834
    %2836 = vrot.lane.b32.xlu0 %v2690, 125
    %v2837 = vpop.permute.xlu0 %2836
    %2838 = vrot.lane.b32.xlu0 %v2691, 125
    %v2839 = vpop.permute.xlu0 %2838
    %2840 = vrot.lane.b32.xlu0 %v2692, 125
    %v2841 = vpop.permute.xlu0 %2840
    %2842 = vrot.lane.b32.xlu0 %v2693, 125
    %v2843 = vpop.permute.xlu0 %2842
    %2844 = vrot.lane.b32.xlu0 %v2694, 125
    %v2845 = vpop.permute.xlu0 %2844
    %2846 = vrot.lane.b32.xlu0 %v2695, 125
    %v2847 = vpop.permute.xlu0 %2846
    %2848 = vrot.lane.b32.xlu0 %v2696, 125
    %v2849 = vpop.permute.xlu0 %2848
    %2850 = vrot.lane.b32.xlu0 %v2697, 125
    %v2851 = vpop.permute.xlu0 %2850
    %2852 = vrot.lane.b32.xlu0 %v2698, 125
    %v2853 = vpop.permute.xlu0 %2852
    %2854 = vrot.lane.b32.xlu0 %v2699, 125
    %v2855 = vpop.permute.xlu0 %2854
    %v2868 = vadd.f32 %v2820, %v2833
    %v2869 = vadd.f32 %v2821, %v2835
    %v2870 = vadd.f32 %v2822, %v2837
    %v2871 = vadd.f32 %v2823, %v2839
    %v2872 = vadd.f32 %v2824, %v2841
    %v2873 = vadd.f32 %v2825, %v2843
    %v2874 = vadd.f32 %v2826, %v2845
    %v2875 = vadd.f32 %v2827, %v2847
    %v2876 = vadd.f32 %v2828, %v2849
    %v2877 = vadd.f32 %v2829, %v2851
    %v2878 = vadd.f32 %v2830, %v2853
    %v2879 = vadd.f32 %v2831, %v2855
    %2892 = vrot.lane.b32.xlu0 %v2676, 124
    %v2893 = vpop.permute.xlu0 %2892
    %2894 = vrot.lane.b32.xlu0 %v2677, 124
    %v2895 = vpop.permute.xlu0 %2894
    %2896 = vrot.lane.b32.xlu0 %v2678, 124
    %v2897 = vpop.permute.xlu0 %2896
    %2898 = vrot.lane.b32.xlu0 %v2679, 124
    %v2899 = vpop.permute.xlu0 %2898
    %2900 = vrot.lane.b32.xlu0 %v2680, 124
    %v2901 = vpop.permute.xlu0 %2900
    %2902 = vrot.lane.b32.xlu0 %v2681, 124
    %v2903 = vpop.permute.xlu0 %2902
    %2904 = vrot.lane.b32.xlu0 %v2682, 124
    %v2905 = vpop.permute.xlu0 %2904
    %2906 = vrot.lane.b32.xlu0 %v2683, 124
    %v2907 = vpop.permute.xlu0 %2906
    %2908 = vrot.lane.b32.xlu0 %v2684, 124
    %v2909 = vpop.permute.xlu0 %2908
    %2910 = vrot.lane.b32.xlu0 %v2685, 124
    %v2911 = vpop.permute.xlu0 %2910
    %2912 = vrot.lane.b32.xlu0 %v2686, 124
    %v2913 = vpop.permute.xlu0 %2912
    %2914 = vrot.lane.b32.xlu0 %v2687, 124
    %v2915 = vpop.permute.xlu0 %2914
    %v2928 = vadd.f32 %v2868, %v2893
    %v2929 = vadd.f32 %v2869, %v2895
    %v2930 = vadd.f32 %v2870, %v2897
    %v2931 = vadd.f32 %v2871, %v2899
    %v2932 = vadd.f32 %v2872, %v2901
    %v2933 = vadd.f32 %v2873, %v2903
    %v2934 = vadd.f32 %v2874, %v2905
    %v2935 = vadd.f32 %v2875, %v2907
    %v2936 = vadd.f32 %v2876, %v2909
    %v2937 = vadd.f32 %v2877, %v2911
    %v2938 = vadd.f32 %v2878, %v2913
    %v2939 = vadd.f32 %v2879, %v2915
    %v2940 = vsub.f32 %v1524, %v2928
    %v2941 = vsub.f32 %v1525, %v2929
    %v2942 = vsub.f32 %v1526, %v2930
    %v2943 = vsub.f32 %v1527, %v2931
    %v2944 = vsub.f32 %v1528, %v2932
    %v2945 = vsub.f32 %v1529, %v2933
    %v2946 = vsub.f32 %v1530, %v2934
    %v2947 = vsub.f32 %v1531, %v2935
    %v2948 = vsub.f32 %v1532, %v2936
    %v2949 = vsub.f32 %v1533, %v2937
    %v2950 = vsub.f32 %v1534, %v2938
    %v2951 = vsub.f32 %v1535, %v2939
    %v2952 = vsub.f32 %v1512, %v2940
    %v2953 = vsub.f32 %v1513, %v2941
    %v2954 = vsub.f32 %v1514, %v2942
    %v2955 = vsub.f32 %v1515, %v2943
    %v2956 = vsub.f32 %v1516, %v2944
    %v2957 = vsub.f32 %v1517, %v2945
    %v2958 = vsub.f32 %v1518, %v2946
    %v2959 = vsub.f32 %v1519, %v2947
    %v2960 = vsub.f32 %v1520, %v2948
    %v2961 = vsub.f32 %v1521, %v2949
    %v2962 = vsub.f32 %v1522, %v2950
    %v2963 = vsub.f32 %v1523, %v2951
    %v2964 = vmul.f32 %v2952, %v2952
    %v2965 = vmul.f32 %v2953, %v2953
    %v2966 = vmul.f32 %v2954, %v2954
    %v2967 = vmul.f32 %v2955, %v2955
    %v2968 = vmul.f32 %v2956, %v2956
    %v2969 = vmul.f32 %v2957, %v2957
    %v2970 = vmul.f32 %v2958, %v2958
    %v2971 = vmul.f32 %v2959, %v2959
    %v2972 = vmul.f32 %v2960, %v2960
    %v2973 = vmul.f32 %v2961, %v2961
    %v2974 = vmul.f32 %v2962, %v2962
    %v2975 = vmul.f32 %v2963, %v2963
    %v2976 = vadd.f32 %v2964, 1e-06
    %v2977 = vadd.f32 %v2965, 1e-06
    %v2978 = vadd.f32 %v2966, 1e-06
    %v2979 = vadd.f32 %v2967, 1e-06
    %v2980 = vadd.f32 %v2968, 1e-06
    %v2981 = vadd.f32 %v2969, 1e-06
    %v2982 = vadd.f32 %v2970, 1e-06
    %v2983 = vadd.f32 %v2971, 1e-06
    %v2984 = vadd.f32 %v2972, 1e-06
    %v2985 = vadd.f32 %v2973, 1e-06
    %v2986 = vadd.f32 %v2974, 1e-06
    %v2987 = vadd.f32 %v2975, 1e-06
    %v2988 = vrsqrt.pop %v2976
    %v2989 = vmul.f32 %v2976, %v2988
    %vm2990 = vcmp.eq.f32.partialorder %v2976, inf
    %v2991 = vsel %vm2990, %v2976, %v2989
    %vm2992 = vcmp.eq.f32.partialorder %v2976, 0.0
    %v2993 = vand.u32 %v2976, 2147483648
    %v2994 = vsel %vm2992, %v2993, %v2991
    %v2995 = vrsqrt.pop %v2977
    %v2996 = vmul.f32 %v2977, %v2995
    %vm2997 = vcmp.eq.f32.partialorder %v2977, inf
    %v2998 = vsel %vm2997, %v2977, %v2996
    %vm2999 = vcmp.eq.f32.partialorder %v2977, 0.0
    %v3000 = vand.u32 %v2977, 2147483648
    %v3001 = vsel %vm2999, %v3000, %v2998
    %v3002 = vrsqrt.pop %v2978
    %v3003 = vmul.f32 %v2978, %v3002
    %vm3004 = vcmp.eq.f32.partialorder %v2978, inf
    %v3005 = vsel %vm3004, %v2978, %v3003
    %vm3006 = vcmp.eq.f32.partialorder %v2978, 0.0
    %v3007 = vand.u32 %v2978, 2147483648
    %v3008 = vsel %vm3006, %v3007, %v3005
    %v3009 = vrsqrt.pop %v2979
    %v3010 = vmul.f32 %v2979, %v3009
    %vm3011 = vcmp.eq.f32.partialorder %v2979, inf
    %v3012 = vsel %vm3011, %v2979, %v3010
    %vm3013 = vcmp.eq.f32.partialorder %v2979, 0.0
    %v3014 = vand.u32 %v2979, 2147483648
    %v3015 = vsel %vm3013, %v3014, %v3012
    %v3016 = vrsqrt.pop %v2980
    %v3017 = vmul.f32 %v2980, %v3016
    %vm3018 = vcmp.eq.f32.partialorder %v2980, inf
    %v3019 = vsel %vm3018, %v2980, %v3017
    %vm3020 = vcmp.eq.f32.partialorder %v2980, 0.0
    %v3021 = vand.u32 %v2980, 2147483648
    %v3022 = vsel %vm3020, %v3021, %v3019
    %v3023 = vrsqrt.pop %v2981
    %v3024 = vmul.f32 %v2981, %v3023
    %vm3025 = vcmp.eq.f32.partialorder %v2981, inf
    %v3026 = vsel %vm3025, %v2981, %v3024
    %vm3027 = vcmp.eq.f32.partialorder %v2981, 0.0
    %v3028 = vand.u32 %v2981, 2147483648
    %v3029 = vsel %vm3027, %v3028, %v3026
    %v3030 = vrsqrt.pop %v2982
    %v3031 = vmul.f32 %v2982, %v3030
    %vm3032 = vcmp.eq.f32.partialorder %v2982, inf
    %v3033 = vsel %vm3032, %v2982, %v3031
    %vm3034 = vcmp.eq.f32.partialorder %v2982, 0.0
    %v3035 = vand.u32 %v2982, 2147483648
    %v3036 = vsel %vm3034, %v3035, %v3033
    %v3037 = vrsqrt.pop %v2983
    %v3038 = vmul.f32 %v2983, %v3037
    %vm3039 = vcmp.eq.f32.partialorder %v2983, inf
    %v3040 = vsel %vm3039, %v2983, %v3038
    %vm3041 = vcmp.eq.f32.partialorder %v2983, 0.0
    %v3042 = vand.u32 %v2983, 2147483648
    %v3043 = vsel %vm3041, %v3042, %v3040
    %v3044 = vrsqrt.pop %v2984
    %v3045 = vmul.f32 %v2984, %v3044
    %vm3046 = vcmp.eq.f32.partialorder %v2984, inf
    %v3047 = vsel %vm3046, %v2984, %v3045
    %vm3048 = vcmp.eq.f32.partialorder %v2984, 0.0
    %v3049 = vand.u32 %v2984, 2147483648
    %v3050 = vsel %vm3048, %v3049, %v3047
    %v3051 = vrsqrt.pop %v2985
    %v3052 = vmul.f32 %v2985, %v3051
    %vm3053 = vcmp.eq.f32.partialorder %v2985, inf
    %v3054 = vsel %vm3053, %v2985, %v3052
    %vm3055 = vcmp.eq.f32.partialorder %v2985, 0.0
    %v3056 = vand.u32 %v2985, 2147483648
    %v3057 = vsel %vm3055, %v3056, %v3054
    %v3058 = vrsqrt.pop %v2986
    %v3059 = vmul.f32 %v2986, %v3058
    %vm3060 = vcmp.eq.f32.partialorder %v2986, inf
    %v3061 = vsel %vm3060, %v2986, %v3059
    %vm3062 = vcmp.eq.f32.partialorder %v2986, 0.0
    %v3063 = vand.u32 %v2986, 2147483648
    %v3064 = vsel %vm3062, %v3063, %v3061
    %v3065 = vrsqrt.pop %v2987
    %v3066 = vmul.f32 %v2987, %v3065
    %vm3067 = vcmp.eq.f32.partialorder %v2987, inf
    %v3068 = vsel %vm3067, %v2987, %v3066
    %vm3069 = vcmp.eq.f32.partialorder %v2987, 0.0
    %v3070 = vand.u32 %v2987, 2147483648
    %v3071 = vsel %vm3069, %v3070, %v3068
    %v3072 = vsel %vm100, %v2994, 0.0
    %v3073 = vsel %vm100, %v3001, 0.0
    %v3074 = vadd.f32 %v3072, %v3073
    %v3075 = vsel %vm100, %v3008, 0.0
    %v3076 = vadd.f32 %v3074, %v3075
    %v3077 = vsel %vm100, %v3015, 0.0
    %v3078 = vadd.f32 %v3076, %v3077
    %v3079 = vsel %vm100, %v3022, 0.0
    %v3080 = vadd.f32 %v3078, %v3079
    %v3081 = vsel %vm100, %v3029, 0.0
    %v3082 = vadd.f32 %v3080, %v3081
    %v3083 = vsel %vm100, %v3036, 0.0
    %v3084 = vadd.f32 %v3082, %v3083
    %v3085 = vsel %vm100, %v3043, 0.0
    %v3086 = vadd.f32 %v3084, %v3085
    %v3087 = vsel %vm100, %v3050, 0.0
    %v3088 = vadd.f32 %v3086, %v3087
    %v3089 = vsel %vm100, %v3057, 0.0
    %v3090 = vadd.f32 %v3088, %v3089
    %v3091 = vsel %vm100, %v3064, 0.0
    %v3092 = vadd.f32 %v3090, %v3091
    %v3093 = vsel %vm100, %v3071, 0.0
    %v3094 = vadd.f32 %v3092, %v3093
    %3095 = vadd.xlane.f32.xlu0 %v3094
    %v3096 = vpop.xlane.xlu0 %3095
    %v3097 = vrot.slane %v3096, 4
    %v3098 = vadd.f32 %v3096, %v3097
    %v3099 = vrot.slane %v3098, 2
    %v3100 = vadd.f32 %v3098, %v3099
    %v3101 = vrot.slane %v3100, 1
    %v3102 = vadd.f32 %v3100, %v3101
    %s3103 = vtos %v3102
    %v3104 = vstv %s3103
    %vm3105 = vcmask 0
    %3106 = vst.msk [vmem:[#allocation9] sm:$0x1] %vm3105, %v3104
    // Predicated region
    $region18: #{edge_loss.1} parent=1 // pred_check
      _
    $region19: #{edge_loss.1} parent=1 // pred_check_branch
      %3108 = sbr.rel (0) target = $region21
    $region20: #{edge_loss.1} parent=1 // pred_region
      %s3110 = ssub.s32 16, 16
      %3111 = vsyncadd [#allocation6], %s3110
      %s3113 = sshll.u32 [#allocation9], 4
      %s3114 = int_to_ptr.vmem [resolvable:$true] %s3113
      %3116 = dma.vmem_to_hbm [thread:$0]  %s3114, 16, %s2, [#allocation6]
    $region21: #{edge_loss.1} parent=1 // pred_fallthru
      _
    // Predicated region
    $region22: #{edge_loss.1} parent=1 // pred_check
      _
    $region23: #{edge_loss.1} parent=1 // pred_check_branch
      %3118 = sbr.rel (0) target = $region25
    $region24: #{edge_loss.1} parent=1 // pred_region
      %3119 = dma.done [#allocation6], 16
    $region25: #{edge_loss.1} parent=1 // pred_fallthru
      _
    %3120 = vsyncpa [#allocation5], 1
    %3121 = vsyncpa [#allocation8], 1
    %3122 = vsyncpa [#allocation6], 1

</llo_original>
